<compile_context>
chip_gen: v7x
topology: tpu7x:2x2x1
jax: 0.10.0
libtpu: 0.0.40
codegen_flags: <defaults>
</compile_context>

<pallas_src>
import jax
import jax.numpy as jnp
from jax import lax
from jax.experimental import pallas as pl
from jax.experimental.pallas import tpu as pltpu

LANES = 128
SUBLANES = 8
NUM_CORES = 2                            # row-split across TCs (v7x); harmless on 1-TC chips
TARGET_BLOCK_BYTES = 4 * 1024 * 1024     # ~4 MiB input blocks (8192 f32 rows / 16384 bf16 rows)
MIN_KERNEL_BYTES = 128 * 1024            # below this, XLA's fused reduce beats a kernel launch


def _make_sumsq_kernel(total_rows, block_rows, steps_per_core, num_blocks, ragged):
    """Kernel: per-core partial sum(x^2) over a (total_rows, 128) slab."""
    # First virtual block index that needs masking: the ragged edge block (if
    # any) and every clamped duplicate block past the end of the array.
    first_masked = (num_blocks - 1) if ragged else num_blocks
    total_steps = NUM_CORES * steps_per_core

    def kernel(x_ref, o_ref, acc_ref):
        c = pl.program_id(0)
        i = pl.program_id(1)
        v = c * steps_per_core + i           # virtual (unclamped) block index

        @pl.when(i == 0)
        def _init():
            acc_ref[...] = jnp.zeros_like(acc_ref)

        def accumulate(x):
            sq = x * x
            # Partial reduce into a single-vreg accumulator: pure VPU adds,
            # hides under the input DMA; no cross-lane work inside the kernel.
            acc_ref[...] += jnp.sum(sq.reshape(-1, SUBLANES, LANES), axis=0)

        if first_masked >= total_steps:
            # Every block of every step is fully valid: no masking anywhere.
            accumulate(x_ref[...].astype(jnp.float32))
        else:
            @pl.when(v < first_masked)
            def _bulk():                      # unmasked fast path for full blocks
                accumulate(x_ref[...].astype(jnp.float32))

            @pl.when(v >= first_masked)
            def _edge():                      # ragged edge / clamped duplicate blocks
                x = x_ref[...].astype(jnp.float32)
                row = lax.broadcasted_iota(jnp.int32, x.shape, 0) + v * block_rows
                accumulate(jnp.where(row < total_rows, x, 0.0))

        @pl.when(i == steps_per_core - 1)
        def _finalize():
            o_ref[...] = acc_ref[...]         # lane-dense (8,128) per-core partial

    return kernel


def _sumsq_pallas(main_2d):
    """sum(main_2d**2) in float32 via Pallas. main_2d has shape (rows, 128)."""
    total_rows = main_2d.shape[0]
    itemsize = jnp.dtype(main_2d.dtype).itemsize

    budget_rows = max(SUBLANES, TARGET_BLOCK_BYTES // (LANES * itemsize))
    budget_rows -= budget_rows % SUBLANES
    block_rows = min(budget_rows, (total_rows // SUBLANES) * SUBLANES)
    block_rows = max(block_rows, SUBLANES)

    num_blocks = pl.cdiv(total_rows, block_rows)
    steps_per_core = pl.cdiv(num_blocks, NUM_CORES)
    ragged = (total_rows % block_rows) != 0

    def in_index(c, i):
        # Clamp so the DMA never goes past the last (possibly partial) block;
        # clamped duplicates are fully zeroed by the in-kernel virtual-row mask.
        return (jnp.minimum(c * steps_per_core + i, num_blocks - 1), 0)

    out = pl.pallas_call(
        _make_sumsq_kernel(total_rows, block_rows, steps_per_core, num_blocks, ragged),
        out_shape=jax.ShapeDtypeStruct((NUM_CORES * SUBLANES, LANES), jnp.float32),
        grid_spec=pltpu.PrefetchScalarGridSpec(
            num_scalar_prefetch=0,
            grid=(NUM_CORES, steps_per_core),
            in_specs=[pl.BlockSpec((block_rows, LANES), in_index)],
            out_specs=pl.BlockSpec((SUBLANES, LANES), lambda c, i: (c, 0)),
            scratch_shapes=[pltpu.VMEM((SUBLANES, LANES), jnp.float32)],
        ),
        compiler_params=pltpu.CompilerParams(
            dimension_semantics=("parallel", "arbitrary"),
            vmem_limit_bytes=32 * 1024 * 1024,
        ),
    )(main_2d)
    # Tiny (16,128) cross-lane reduce: done in XLA, fuses with sqrt/stack/scale.
    return jnp.sum(out)


def _param_sumsq(param):
    """float32 sum(param**2): bulk via the Pallas kernel, small/tail in plain JAX."""
    flat = jnp.ravel(param)              # native dtype; no upcast, no padded copy
    n = flat.shape[0]
    itemsize = jnp.dtype(flat.dtype).itemsize

    if n * itemsize < MIN_KERNEL_BYTES:  # small params (biases, small convs): plain JAX
        x = flat.astype(jnp.float32)
        return jnp.sum(x * x)

    full_rows = n // LANES
    n_main = full_rows * LANES
    tail_ss = jnp.float32(0.0)
    if n_main < n:                       # sub-lane tail (< 128 elements) in plain JAX
        t = flat[n_main:].astype(jnp.float32)
        tail_ss = jnp.sum(t * t)
        flat = flat[:n_main]
    main = flat.reshape(full_rows, LANES)
    return _sumsq_pallas(main) + tail_ss


@jax.jit
def _lp_norm_p2(params, factor):
    # TODO(synk): fuse all kernel-eligible params into ONE pallas_call (pl.ANY
    # refs + scalar-prefetched schedule) to amortize launch overhead further.
    norms = [jnp.sqrt(_param_sumsq(w)) for w in params]
    return factor * jnp.sum(jnp.stack(norms))


def lp_norm(params, p=2, factor=1e-5):
    """Pallas equivalent of LpNorm.forward(net): factor * sum_i ||param_i||_p."""
    # TODO(synk): only the module's default p=2 (L2 / Frobenius) is implemented.
    assert p == 2, "only p=2 (L2 / Frobenius norm) is implemented"
    return _lp_norm_p2(list(params), jnp.float32(factor))


if __name__ == "__main__":
    key = jax.random.PRNGKey(0)
    keys = jax.random.split(key, 9)

    # Deterministic synthetic "net.parameters()" exercising every code path:
    params = [
        jax.random.normal(keys[0], (4, 4, 3, 3), jnp.float32),   # conv w  -> tiny (JAX) path
        jax.random.normal(keys[1], (4,), jnp.float32),           # conv b  -> tiny path
        jax.random.normal(keys[2], (300, 1024), jnp.bfloat16),   # fc1 w   -> kernel, native bf16, 1 block
        jax.random.normal(keys[3], (300,), jnp.float32),         # fc1 b   -> tiny path
        jax.random.normal(keys[4], (2400, 1024), jnp.float32),   # fc2 w   -> kernel, multi-block + ragged edge
        jax.random.normal(keys[5], (1030, 128), jnp.float32),    # fc3 w   -> kernel, ragged edge block
        jax.random.normal(keys[6], (700, 1200), jnp.float32),    # fc4 w   -> kernel + sub-128 JAX tail
        jax.random.normal(keys[7], (10, 300), jnp.float32),      # head w  -> tiny path
        jax.random.normal(keys[8], (10,), jnp.float32),          # head b  -> tiny path
    ]

    # Pure-JAX reference (mirrors torch.norm(item, p=2) + stack + sum + factor).
    def ref_norm(w):
        wf = w.astype(jnp.float32)
        return jnp.sqrt(jnp.sum(wf * wf))

    for w in params:
        mine = jnp.sqrt(_param_sumsq(w))
        want = ref_norm(w)
        assert jnp.allclose(mine, want, rtol=1e-4, atol=1e-6), (w.shape, float(mine), float(want))

    reg = lp_norm(params, p=2, factor=1e-5)
    reg = jax.block_until_ready(reg)

    ref = jnp.float32(1e-5) * sum(ref_norm(w) for w in params)
    assert jnp.allclose(reg, ref, rtol=1e-4, atol=1e-7), (float(reg), float(ref))

    print("KERNEL_OK")
</pallas_src>

<mosaic_0001>
module attributes {stable_mosaic.version = 11 : i64} {
  func.func @kernel(%arg0: i32, %arg1: i32, %arg2: memref<2400x128xbf16, #tpu.memory_space<vmem>>, %arg3: memref<8x128xf32, #tpu.memory_space<vmem>>, %arg4: memref<8x128xf32, #tpu.memory_space<vmem>>) attributes {dimension_semantics = [#tpu.dimension_semantics<parallel>, #tpu.dimension_semantics<arbitrary>], iteration_bounds = array<i64: 2, 1>, scalar_prefetch = 0 : i64, scratch_operands = 1 : i64, tpu.core_type = #tpu.core_type<tc>, window_params = [{transform_indices = @transform_0, window_bounds = array<i64: 2400, 128>}, {transform_indices = @transform_1, window_bounds = array<i64: 8, 128>}]} {
    %c1_i32 = arith.constant 1 : i32
    %0 = arith.muli %arg0, %c1_i32 : i32
    %1 = arith.addi %0, %arg1 : i32
    %c0_i32 = arith.constant 0 : i32
    %2 = arith.cmpi eq, %arg1, %c0_i32 : i32
    %3 = arith.extui %2 : i1 to i32
    %c0_i32_0 = arith.constant 0 : i32
    %4 = arith.cmpi ne, %3, %c0_i32_0 : i32
    scf.if %4 {
      %cst = arith.constant 0.000000e+00 : f32
      %14 = vector.broadcast %cst : f32 to vector<8x128xf32>
      %c0 = arith.constant 0 : index
      %c0_7 = arith.constant 0 : index
      %15 = vector.load %arg4[%c0, %c0_7] : memref<8x128xf32, #tpu.memory_space<vmem>>, vector<8x128xf32>
      tpu.vector_store %arg4[%c0, %c0_7], %14 {strides = array<i32>} : memref<8x128xf32, #tpu.memory_space<vmem>>, vector<8x128xf32>,
    } else {
    }
    %c1_i32_1 = arith.constant 1 : i32
    %5 = arith.cmpi slt, %1, %c1_i32_1 : i32
    %6 = arith.extui %5 : i1 to i32
    %c0_i32_2 = arith.constant 0 : i32
    %7 = arith.cmpi ne, %6, %c0_i32_2 : i32
    scf.if %7 {
      %c0 = arith.constant 0 : index
      %c0_7 = arith.constant 0 : index
      %14 = vector.load %arg2[%c0, %c0_7] : memref<2400x128xbf16, #tpu.memory_space<vmem>>, vector<2400x128xbf16>
      %15 = arith.extf %14 : vector<2400x128xbf16> to vector<2400x128xf32>
      %16 = arith.mulf %15, %15 : vector<2400x128xf32>
      %c0_8 = arith.constant 0 : index
      %c0_9 = arith.constant 0 : index
      %17 = vector.load %arg4[%c0_8, %c0_9] : memref<8x128xf32, #tpu.memory_space<vmem>>, vector<8x128xf32>
      %18 = vector.shape_cast %16 : vector<2400x128xf32> to vector<300x8x128xf32>
      %cst = arith.constant dense<0.000000e+00> : vector<8x128xf32>
      %19 = vector.multi_reduction <add>, %18, %cst [0] : vector<300x8x128xf32> to vector<8x128xf32>
      %20 = arith.addf %17, %19 : vector<8x128xf32>
      %c0_10 = arith.constant 0 : index
      %c0_11 = arith.constant 0 : index
      %21 = vector.load %arg4[%c0_10, %c0_11] : memref<8x128xf32, #tpu.memory_space<vmem>>, vector<8x128xf32>
      tpu.vector_store %arg4[%c0_10, %c0_11], %20 {strides = array<i32>} : memref<8x128xf32, #tpu.memory_space<vmem>>, vector<8x128xf32>,
    } else {
    }
    %c1_i32_3 = arith.constant 1 : i32
    %8 = arith.cmpi sge, %1, %c1_i32_3 : i32
    %9 = arith.extui %8 : i1 to i32
    %c0_i32_4 = arith.constant 0 : i32
    %10 = arith.cmpi ne, %9, %c0_i32_4 : i32
    scf.if %10 {
      %c0 = arith.constant 0 : index
      %c0_7 = arith.constant 0 : index
      %14 = vector.load %arg2[%c0, %c0_7] : memref<2400x128xbf16, #tpu.memory_space<vmem>>, vector<2400x128xbf16>
      %15 = arith.extf %14 : vector<2400x128xbf16> to vector<2400x128xf32>
      %16 = tpu.iota {dimensions = array<i32: 0>} : vector<2400x128xi32>
      %c2400_i32 = arith.constant 2400 : i32
      %17 = arith.muli %1, %c2400_i32 : i32
      %18 = vector.broadcast %17 : i32 to vector<2400x128xi32>
      %19 = arith.addi %16, %18 : vector<2400x128xi32>
      %c2400_i32_8 = arith.constant 2400 : i32
      %20 = vector.broadcast %c2400_i32_8 : i32 to vector<2400x128xi32>
      %21 = arith.cmpi slt, %19, %20 : vector<2400x128xi32>
      %cst = arith.constant 0.000000e+00 : f32
      %22 = vector.broadcast %cst : f32 to vector<2400x128xf32>
      %23 = arith.select %21, %15, %22 : vector<2400x128xi1>, vector<2400x128xf32>
      %24 = arith.mulf %23, %23 : vector<2400x128xf32>
      %c0_9 = arith.constant 0 : index
      %c0_10 = arith.constant 0 : index
      %25 = vector.load %arg4[%c0_9, %c0_10] : memref<8x128xf32, #tpu.memory_space<vmem>>, vector<8x128xf32>
      %26 = vector.shape_cast %24 : vector<2400x128xf32> to vector<300x8x128xf32>
      %cst_11 = arith.constant dense<0.000000e+00> : vector<8x128xf32>
      %27 = vector.multi_reduction <add>, %26, %cst_11 [0] : vector<300x8x128xf32> to vector<8x128xf32>
      %28 = arith.addf %25, %27 : vector<8x128xf32>
      %c0_12 = arith.constant 0 : index
      %c0_13 = arith.constant 0 : index
      %29 = vector.load %arg4[%c0_12, %c0_13] : memref<8x128xf32, #tpu.memory_space<vmem>>, vector<8x128xf32>
      tpu.vector_store %arg4[%c0_12, %c0_13], %28 {strides = array<i32>} : memref<8x128xf32, #tpu.memory_space<vmem>>, vector<8x128xf32>,
    } else {
    }
    %c0_i32_5 = arith.constant 0 : i32
    %11 = arith.cmpi eq, %arg1, %c0_i32_5 : i32
    %12 = arith.extui %11 : i1 to i32
    %c0_i32_6 = arith.constant 0 : i32
    %13 = arith.cmpi ne, %12, %c0_i32_6 : i32
    scf.if %13 {
      %c0 = arith.constant 0 : index
      %c0_7 = arith.constant 0 : index
      %14 = vector.load %arg4[%c0, %c0_7] : memref<8x128xf32, #tpu.memory_space<vmem>>, vector<8x128xf32>
      %c0_8 = arith.constant 0 : index
      %c0_9 = arith.constant 0 : index
      %15 = vector.load %arg3[%c0_8, %c0_9] : memref<8x128xf32, #tpu.memory_space<vmem>>, vector<8x128xf32>
      tpu.vector_store %arg3[%c0_8, %c0_9], %14 {strides = array<i32>} : memref<8x128xf32, #tpu.memory_space<vmem>>, vector<8x128xf32>,
    } else {
    }
    return
  }
  func.func @transform_0(%arg0: i32, %arg1: i32) -> (i32, i32) {
    %c1_i32 = arith.constant 1 : i32
    %0 = arith.muli %arg0, %c1_i32 : i32
    %1 = arith.addi %0, %arg1 : i32
    %c0_i32 = arith.constant 0 : i32
    %2 = arith.minsi %1, %c0_i32 : i32
    %c0_i32_0 = arith.constant 0 : i32
    %c0_i32_1 = arith.constant 0 : i32
    return %2, %c0_i32_0 : i32, i32
  }
  func.func @transform_1(%arg0: i32, %arg1: i32) -> (i32, i32) {
    %c0_i32 = arith.constant 0 : i32
    %c0_i32_0 = arith.constant 0 : i32
    return %arg0, %c0_i32 : i32, i32
  }
}

</mosaic_0001>

<llo_original>
// kernel: tpu_custom_call.1
$region0: #{tpu_custom_call.1}
  #allocation0 [shape = 'u32[]', space=smem, size = 0x4, offset = 0x4, fixed_abs, tag = 'smem constant byte address 0x4 - core index']
  #allocation1 [shape = 'u32[144,128]{1,0:T(1,128)}', space=vmem, size = 0x12000, scoped, tag = 'internal scratch']
  #allocation2 [shape = 'f32[8,128]{1,0:T(8,128)}', space=vmem, size = 0x1000, scoped, tag = 'scratch operand']
  %s0 = inlined_call_operand.hbm [shape: bf16[2400,128], index: 0, kind: input, shape index: {}]
  %s1 = inlined_call_operand.hbm [shape: f32[16,128], index: 1, kind: output, shape index: {}]
  %s2 = sld [smem:[#allocation0]]
  $region57: #{tpu_custom_call.1} parent=0
    _
  %s4 = ssub.s32 1, %s2
  %s5 = scalar_select 0, %s4, %s2
  $region1: #{tpu_custom_call.1} parent=0
    #allocation3 [shape = 'u8[1228800]{0}', space=vmem, size = 0x12c000, scoped, tag = 'input window, operand 0']
    #allocation4 [shape = 's32[2]{0}', space=sflag, size = 0x8, scoped, tag = 'scoped memory for tpu_custom_call.1']
    #allocation5 [shape = 's32[2]{0}', space=sflag, size = 0x8, scoped, tag = 'scoped memory for tpu_custom_call.1']
    #allocation6 [shape = 'u8[8192]{0}', space=vmem, size = 0x2000, scoped, tag = 'output window, operand 0']
    %6 = vsyncpa [#allocation4], 0
    %s7 = scalar_lea.sflag [#allocation4], 1
    %8 = vsyncpa %s7, 0
    %9 = vsyncpa [#allocation5], 0
    %s10 = scalar_lea.sflag [#allocation5], 1
    %11 = vsyncpa %s10, 0
    loop: start=0, step=1, limit=4
    $region2: #{tpu_custom_call.1} parent=1 // loop_pre_header
      _
    $region3: #{tpu_custom_call.1} parent=1 // loop_header
      %s13 = sphi 0, %s17
      %p14 = scmp.ge.s32.totalorder %s13, 4
      %s20 = sphi 0, %s32
      %s21 = sphi 0, %s28
      %s22 = sphi 0, %s20
      %s23 = sphi 0, %s21
      %s24 = sphi 0, %s22
      %s25 = sphi 0, %s23
      %s41 = sphi 0, %s43
      %s44 = sphi 0, %s41
      %s45 = sphi 0, %s44
      %s61 = sphi 0, %s45
      %s67 = sphi 0, %s69
      %s70 = sphi 0, %s67
      %s71 = sphi 0, %s70
      %s87 = sphi 0, %s71
    $region4: #{tpu_custom_call.1} parent=1 // loop_header_branch
      %16 = sbr.rel (%p14) target = $region8
    $region5: #{tpu_custom_call.1} parent=1 // loop_body
      %s18 = ssub.s32 %s13, 1
      %s19 = ssub.s32 %s13, 2
      %s26 = sadd.s32 1, %s21
      %p27 = scmp.ge.s32.totalorder %s26, 1
      %s28 = scalar_select %p27, 0, %s26
      %s29 = sadd.s32 1, %s20
      %s30 = scalar_select %p27, %s29, %s20
      %p31 = scmp.ge.s32.totalorder %s30, 2
      %s32 = scalar_select %p31, 0, %s30
      %s33 = sadd.s32 %s20, %s21
      %p34 = scmp.lt.s32.totalorder %s33, 0
      %s35 = scalar_select %p34, %s33, 0
      %s36 = sadd.s32 %s32, %s28
      %p37 = scmp.lt.s32.totalorder %s36, 0
      %s38 = scalar_select %p37, %s36, 0
      %s39 = ssub.s32 %s35, %s38
      %p40 = scmp.eq.s32.totalorder %s39, 0
      %s42 = sadd.s32 %s41, 1
      %s43 = scalar_select %p40, %s41, %s42
      %p46 = pneg %p40
      %p47 = scmp.eq.s32.totalorder %s13, 1
      %p48 = por %p46, %p47
      %p49 = scmp.ne.s32.totalorder %s41, %s44
      %p50 = scmp.eq.s32.totalorder %s13, 0
      %p51 = por %p49, %p50
      %p52 = scmp.ne.s32.totalorder %s41, %s44
      %p53 = scmp.eq.s32.totalorder %s18, 1
      %p54 = por %p52, %p53
      %p55 = scmp.ne.s32.totalorder %s44, %s45
      %p56 = scmp.eq.s32.totalorder %s18, 0
      %p57 = por %p55, %p56
      %p58 = scmp.ne.s32.totalorder %s44, %s45
      %p59 = scmp.eq.s32.totalorder %s19, 1
      %p60 = por %p58, %p59
      %p62 = scmp.ne.s32.totalorder %s45, %s61
      %p63 = scmp.eq.s32.totalorder %s19, 0
      %p64 = por %p62, %p63
      %s65 = ssub.s32 %s20, %s32
      %p66 = scmp.eq.s32.totalorder %s65, 0
      %s68 = sadd.s32 %s67, 1
      %s69 = scalar_select %p66, %s67, %s68
      %p72 = pneg %p66
      %p73 = scmp.eq.s32.totalorder %s13, 1
      %p74 = por %p72, %p73
      %p75 = scmp.ne.s32.totalorder %s67, %s70
      %p76 = scmp.eq.s32.totalorder %s13, 0
      %p77 = por %p75, %p76
      %p78 = scmp.ne.s32.totalorder %s67, %s70
      %p79 = scmp.eq.s32.totalorder %s18, 1
      %p80 = por %p78, %p79
      %p81 = scmp.ne.s32.totalorder %s70, %s71
      %p82 = scmp.eq.s32.totalorder %s18, 0
      %p83 = por %p81, %p82
      %p84 = scmp.ne.s32.totalorder %s70, %s71
      %p85 = scmp.eq.s32.totalorder %s19, 1
      %p86 = por %p84, %p85
      %p88 = scmp.ne.s32.totalorder %s71, %s87
      %p89 = scmp.eq.s32.totalorder %s19, 0
      %p90 = por %p88, %p89
      %p91 = scmp.le.s32.totalorder 1, %s13
      %p92 = scmp.lt.s32.totalorder %s13, 3
      %p93 = pnand %p91, %p92
      %p94 = pneg %p93
      // Predicated region
      $region9: #{tpu_custom_call.1} parent=5 // pred_check
        _
      $region10: #{tpu_custom_call.1} parent=5 // pred_check_branch
        %96 = sbr.rel (%p93) target = $region12
      $region11: #{tpu_custom_call.1} parent=5 // pred_region
        %s97 = ssub.s32 %s13, 1
      $region12: #{tpu_custom_call.1} parent=5 // pred_fallthru
        _
      %p98 = scmp.lt.s32.totalorder %s13, 2
      // Predicated region
      $region13: #{tpu_custom_call.1} parent=5 // pred_check
        %p99 = pneg %p98
      $region14: #{tpu_custom_call.1} parent=5 // pred_check_branch
        %101 = sbr.rel (%p99) target = $region16
      $region15: #{tpu_custom_call.1} parent=5 // pred_region
        // Predicated region
        $region17: #{tpu_custom_call.1} parent=15 // pred_check
          %p102 = pneg %p51
        $region18: #{tpu_custom_call.1} parent=15 // pred_check_branch
          %104 = sbr.rel (%p102) target = $region20
        $region19: #{tpu_custom_call.1} parent=15 // pred_region
          %s105 = sand.u32 %s41, 1
          %s106 = scalar_lea.sflag [#allocation4], %s105
          %s107 = sand.u32 %s41, 1
          %s108 = smul.addr %s107, 1200
          %s109 = scalar_lea.vmem [#allocation3], %s108
          %s110 = sadd.s32 %s20, %s21
          %p111 = scmp.lt.s32.totalorder %s110, 0
          %s112 = scalar_select %p111, %s110, 0
          %s113 = smul.u32 300, %s112
          %s115 = ssub.s32 19200, 19200
          %116 = vsyncadd %s106, %s115
          %s117 = smul.addr %s113, 64
          %s118 = scalar_lea.hbm %s0, %s117
          %s119 = sshll.u32 %s109, 4
          %s120 = int_to_ptr.vmem [resolvable:$true] %s119
          %125 = dma.hbm_to_vmem [thread:$0]  %s118, 19200, %s120, %s106, 64, 64, 4
        $region20: #{tpu_custom_call.1} parent=15 // pred_fallthru
          _
      $region16: #{tpu_custom_call.1} parent=5 // pred_fallthru
        _
      %p126 = scmp.le.s32.totalorder 1, %s13
      %p127 = scmp.lt.s32.totalorder %s13, 3
      %p128 = pnand %p126, %p127
      %p129 = pneg %p128
      // Predicated region
      $region21: #{tpu_custom_call.1} parent=5 // pred_check
        _
      $region22: #{tpu_custom_call.1} parent=5 // pred_check_branch
        %131 = sbr.rel (%p128) target = $region24
      $region23: #{tpu_custom_call.1} parent=5 // pred_region
        %s132 = ssub.s32 %s13, 1
        %s133 = sand.u32 %s44, 1
        %s134 = scalar_lea.sflag [#allocation4], %s133
        %s135 = sand.u32 %s44, 1
        %s136 = smul.addr %s135, 1200
        %s137 = scalar_lea.vmem [#allocation3], %s136
        // Predicated region
        $region25: #{tpu_custom_call.1} parent=23 // pred_check
          %p138 = pneg %p57
        $region26: #{tpu_custom_call.1} parent=23 // pred_check_branch
          %140 = sbr.rel (%p138) target = $region28
        $region27: #{tpu_custom_call.1} parent=23 // pred_region
          %141 = dma.done %s134, 19200
        $region28: #{tpu_custom_call.1} parent=23 // pred_fallthru
          _
        %s142 = sand.u32 %s44, 1
        %s143 = scalar_lea.sflag [#allocation4], %s142
        %s144 = sand.u32 %s44, 1
        %s145 = smul.addr %s144, 1200
        %s146 = scalar_lea.vmem [#allocation3], %s145
        %p147 = pneg %p57
        %p148 = pneg %p54
        %p149 = pneg %p83
        %p150 = pneg %p80
        %s151 = sand.u32 %s70, 1
        %s152 = scalar_lea.sflag [#allocation5], %s151
        %s153 = sand.u32 %s70, 1
        %s154 = smul.addr %s153, 8
        %s155 = scalar_lea.vmem [#allocation6], %s154
        %s156 = sadd.s32 %s22, %s23
        %p157 = scmp.lt.s32.totalorder %s156, 0
        %s158 = scalar_select %p157, %s156, 0
        %s159 = smul.u32 300, %s158
        %s160 = sadd.s32 %s22, %s23
        %p161 = scmp.eq.s32.totalorder %s23, 0
        // Predicated region
        $region29: #{tpu_custom_call.1} parent=23 // pred_check
          %p162 = pneg %p161
        $region30: #{tpu_custom_call.1} parent=23 // pred_check_branch
          %164 = sbr.rel (%p162) target = $region32
        $region31: #{tpu_custom_call.1} parent=23 // pred_region
          %165 = vst [vmem:[#allocation2] sm:$0xff] 0.0
        $region32: #{tpu_custom_call.1} parent=23 // pred_fallthru
          _
        %p166 = scmp.lt.s32.totalorder %s160, 1
        // Predicated region
        $region33: #{tpu_custom_call.1} parent=23 // pred_check
          %p167 = pneg %p166
        $region34: #{tpu_custom_call.1} parent=23 // pred_check_branch
          %169 = sbr.rel (%p167) target = $region36
        $region35: #{tpu_custom_call.1} parent=23 // pred_region
          %v170 = vld [vmem:[%s137] sm:$0xf]
          %v171 = vld [vmem:[%s137 + $0x4] sm:$0xf]
          %v172 = vld [vmem:[%s137 + $0x8] sm:$0xf]
          %v173 = vld [vmem:[%s137 + $0xc] sm:$0xf]
          %v174 = vld [vmem:[%s137 + $0x10] sm:$0xf]
          %v175 = vld [vmem:[%s137 + $0x14] sm:$0xf]
          %v176 = vld [vmem:[%s137 + $0x18] sm:$0xf]
          %v177 = vld [vmem:[%s137 + $0x1c] sm:$0xf]
          %v178 = vld [vmem:[%s137 + $0x20] sm:$0xf]
          %v179 = vld [vmem:[%s137 + $0x24] sm:$0xf]
          %v180 = vld [vmem:[%s137 + $0x28] sm:$0xf]
          %v181 = vld [vmem:[%s137 + $0x2c] sm:$0xf]
          %v182 = vld [vmem:[%s137 + $0x30] sm:$0xf]
          %v183 = vld [vmem:[%s137 + $0x34] sm:$0xf]
          %v184 = vld [vmem:[%s137 + $0x38] sm:$0xf]
          %v185 = vld [vmem:[%s137 + $0x3c] sm:$0xf]
          %v186 = vld [vmem:[%s137 + $0x40] sm:$0xf]
          %v187 = vld [vmem:[%s137 + $0x44] sm:$0xf]
          %v188 = vld [vmem:[%s137 + $0x48] sm:$0xf]
          %v189 = vld [vmem:[%s137 + $0x4c] sm:$0xf]
          %v190 = vld [vmem:[%s137 + $0x50] sm:$0xf]
          %v191 = vld [vmem:[%s137 + $0x54] sm:$0xf]
          %v192 = vld [vmem:[%s137 + $0x58] sm:$0xf]
          %v193 = vld [vmem:[%s137 + $0x5c] sm:$0xf]
          %v194 = vld [vmem:[%s137 + $0x60] sm:$0xf]
          %v195 = vld [vmem:[%s137 + $0x64] sm:$0xf]
          %v196 = vld [vmem:[%s137 + $0x68] sm:$0xf]
          %v197 = vld [vmem:[%s137 + $0x6c] sm:$0xf]
          %v198 = vld [vmem:[%s137 + $0x70] sm:$0xf]
          %v199 = vld [vmem:[%s137 + $0x74] sm:$0xf]
          %v200 = vld [vmem:[%s137 + $0x78] sm:$0xf]
          %v201 = vld [vmem:[%s137 + $0x7c] sm:$0xf]
          %v202 = vld [vmem:[%s137 + $0x80] sm:$0xf]
          %v203 = vld [vmem:[%s137 + $0x84] sm:$0xf]
          %v204 = vld [vmem:[%s137 + $0x88] sm:$0xf]
          %v205 = vld [vmem:[%s137 + $0x8c] sm:$0xf]
          %v206 = vld [vmem:[%s137 + $0x90] sm:$0xf]
          %v207 = vld [vmem:[%s137 + $0x94] sm:$0xf]
          %v208 = vld [vmem:[%s137 + $0x98] sm:$0xf]
          %v209 = vld [vmem:[%s137 + $0x9c] sm:$0xf]
          %v210 = vld [vmem:[%s137 + $0xa0] sm:$0xf]
          %v211 = vld [vmem:[%s137 + $0xa4] sm:$0xf]
          %v212 = vld [vmem:[%s137 + $0xa8] sm:$0xf]
          %v213 = vld [vmem:[%s137 + $0xac] sm:$0xf]
          %v214 = vld [vmem:[%s137 + $0xb0] sm:$0xf]
          %v215 = vld [vmem:[%s137 + $0xb4] sm:$0xf]
          %v216 = vld [vmem:[%s137 + $0xb8] sm:$0xf]
          %v217 = vld [vmem:[%s137 + $0xbc] sm:$0xf]
          %v218 = vld [vmem:[%s137 + $0xc0] sm:$0xf]
          %v219 = vld [vmem:[%s137 + $0xc4] sm:$0xf]
          %v220 = vld [vmem:[%s137 + $0xc8] sm:$0xf]
          %v221 = vld [vmem:[%s137 + $0xcc] sm:$0xf]
          %v222 = vld [vmem:[%s137 + $0xd0] sm:$0xf]
          %v223 = vld [vmem:[%s137 + $0xd4] sm:$0xf]
          %v224 = vld [vmem:[%s137 + $0xd8] sm:$0xf]
          %v225 = vld [vmem:[%s137 + $0xdc] sm:$0xf]
          %v226 = vld [vmem:[%s137 + $0xe0] sm:$0xf]
          %v227 = vld [vmem:[%s137 + $0xe4] sm:$0xf]
          %v228 = vld [vmem:[%s137 + $0xe8] sm:$0xf]
          %v229 = vld [vmem:[%s137 + $0xec] sm:$0xf]
          %v230 = vld [vmem:[%s137 + $0xf0] sm:$0xf]
          %v231 = vld [vmem:[%s137 + $0xf4] sm:$0xf]
          %v232 = vld [vmem:[%s137 + $0xf8] sm:$0xf]
          %v233 = vld [vmem:[%s137 + $0xfc] sm:$0xf]
          %v234 = vld [vmem:[%s137 + $0x100] sm:$0xf]
          %v235 = vld [vmem:[%s137 + $0x104] sm:$0xf]
          %v236 = vld [vmem:[%s137 + $0x108] sm:$0xf]
          %v237 = vld [vmem:[%s137 + $0x10c] sm:$0xf]
          %v238 = vld [vmem:[%s137 + $0x110] sm:$0xf]
          %v239 = vld [vmem:[%s137 + $0x114] sm:$0xf]
          %v240 = vld [vmem:[%s137 + $0x118] sm:$0xf]
          %v241 = vld [vmem:[%s137 + $0x11c] sm:$0xf]
          %v242 = vld [vmem:[%s137 + $0x120] sm:$0xf]
          %v243 = vld [vmem:[%s137 + $0x124] sm:$0xf]
          %v244 = vld [vmem:[%s137 + $0x128] sm:$0xf]
          %v245 = vld [vmem:[%s137 + $0x12c] sm:$0xf]
          %v246 = vld [vmem:[%s137 + $0x130] sm:$0xf]
          %v247 = vld [vmem:[%s137 + $0x134] sm:$0xf]
          %v248 = vld [vmem:[%s137 + $0x138] sm:$0xf]
          %v249 = vld [vmem:[%s137 + $0x13c] sm:$0xf]
          %v250 = vld [vmem:[%s137 + $0x140] sm:$0xf]
          %v251 = vld [vmem:[%s137 + $0x144] sm:$0xf]
          %v252 = vld [vmem:[%s137 + $0x148] sm:$0xf]
          %v253 = vld [vmem:[%s137 + $0x14c] sm:$0xf]
          %v254 = vld [vmem:[%s137 + $0x150] sm:$0xf]
          %v255 = vld [vmem:[%s137 + $0x154] sm:$0xf]
          %v256 = vld [vmem:[%s137 + $0x158] sm:$0xf]
          %v257 = vld [vmem:[%s137 + $0x15c] sm:$0xf]
          %v258 = vld [vmem:[%s137 + $0x160] sm:$0xf]
          %v259 = vld [vmem:[%s137 + $0x164] sm:$0xf]
          %v260 = vld [vmem:[%s137 + $0x168] sm:$0xf]
          %v261 = vld [vmem:[%s137 + $0x16c] sm:$0xf]
          %v262 = vld [vmem:[%s137 + $0x170] sm:$0xf]
          %v263 = vld [vmem:[%s137 + $0x174] sm:$0xf]
          %v264 = vld [vmem:[%s137 + $0x178] sm:$0xf]
          %v265 = vld [vmem:[%s137 + $0x17c] sm:$0xf]
          %v266 = vld [vmem:[%s137 + $0x180] sm:$0xf]
          %v267 = vld [vmem:[%s137 + $0x184] sm:$0xf]
          %v268 = vld [vmem:[%s137 + $0x188] sm:$0xf]
          %v269 = vld [vmem:[%s137 + $0x18c] sm:$0xf]
          %v270 = vld [vmem:[%s137 + $0x190] sm:$0xf]
          %v271 = vld [vmem:[%s137 + $0x194] sm:$0xf]
          %v272 = vld [vmem:[%s137 + $0x198] sm:$0xf]
          %v273 = vld [vmem:[%s137 + $0x19c] sm:$0xf]
          %v274 = vld [vmem:[%s137 + $0x1a0] sm:$0xf]
          %v275 = vld [vmem:[%s137 + $0x1a4] sm:$0xf]
          %v276 = vld [vmem:[%s137 + $0x1a8] sm:$0xf]
          %v277 = vld [vmem:[%s137 + $0x1ac] sm:$0xf]
          %v278 = vld [vmem:[%s137 + $0x1b0] sm:$0xf]
          %v279 = vld [vmem:[%s137 + $0x1b4] sm:$0xf]
          %v280 = vld [vmem:[%s137 + $0x1b8] sm:$0xf]
          %v281 = vld [vmem:[%s137 + $0x1bc] sm:$0xf]
          %v282 = vld [vmem:[%s137 + $0x1c0] sm:$0xf]
          %v283 = vld [vmem:[%s137 + $0x1c4] sm:$0xf]
          %v284 = vld [vmem:[%s137 + $0x1c8] sm:$0xf]
          %v285 = vld [vmem:[%s137 + $0x1cc] sm:$0xf]
          %v286 = vld [vmem:[%s137 + $0x1d0] sm:$0xf]
          %v287 = vld [vmem:[%s137 + $0x1d4] sm:$0xf]
          %v288 = vld [vmem:[%s137 + $0x1d8] sm:$0xf]
          %v289 = vld [vmem:[%s137 + $0x1dc] sm:$0xf]
          %v290 = vld [vmem:[%s137 + $0x1e0] sm:$0xf]
          %v291 = vld [vmem:[%s137 + $0x1e4] sm:$0xf]
          %v292 = vld [vmem:[%s137 + $0x1e8] sm:$0xf]
          %v293 = vld [vmem:[%s137 + $0x1ec] sm:$0xf]
          %v294 = vld [vmem:[%s137 + $0x1f0] sm:$0xf]
          %v295 = vld [vmem:[%s137 + $0x1f4] sm:$0xf]
          %v296 = vld [vmem:[%s137 + $0x1f8] sm:$0xf]
          %v297 = vld [vmem:[%s137 + $0x1fc] sm:$0xf]
          %v298 = vld [vmem:[%s137 + $0x200] sm:$0xf]
          %v299 = vld [vmem:[%s137 + $0x204] sm:$0xf]
          %v300 = vld [vmem:[%s137 + $0x208] sm:$0xf]
          %v301 = vld [vmem:[%s137 + $0x20c] sm:$0xf]
          %v302 = vld [vmem:[%s137 + $0x210] sm:$0xf]
          %v303 = vld [vmem:[%s137 + $0x214] sm:$0xf]
          %v304 = vld [vmem:[%s137 + $0x218] sm:$0xf]
          %v305 = vld [vmem:[%s137 + $0x21c] sm:$0xf]
          %v306 = vld [vmem:[%s137 + $0x220] sm:$0xf]
          %v307 = vld [vmem:[%s137 + $0x224] sm:$0xf]
          %v308 = vld [vmem:[%s137 + $0x228] sm:$0xf]
          %v309 = vld [vmem:[%s137 + $0x22c] sm:$0xf]
          %v310 = vld [vmem:[%s137 + $0x230] sm:$0xf]
          %v311 = vld [vmem:[%s137 + $0x234] sm:$0xf]
          %v312 = vld [vmem:[%s137 + $0x238] sm:$0xf]
          %v313 = vld [vmem:[%s137 + $0x23c] sm:$0xf]
          %v314 = vld [vmem:[%s137 + $0x240] sm:$0xf]
          %v315 = vld [vmem:[%s137 + $0x244] sm:$0xf]
          %v316 = vld [vmem:[%s137 + $0x248] sm:$0xf]
          %v317 = vld [vmem:[%s137 + $0x24c] sm:$0xf]
          %v318 = vld [vmem:[%s137 + $0x250] sm:$0xf]
          %v319 = vld [vmem:[%s137 + $0x254] sm:$0xf]
          %v320 = vld [vmem:[%s137 + $0x258] sm:$0xf]
          %v321 = vld [vmem:[%s137 + $0x25c] sm:$0xf]
          %v322 = vld [vmem:[%s137 + $0x260] sm:$0xf]
          %v323 = vld [vmem:[%s137 + $0x264] sm:$0xf]
          %v324 = vld [vmem:[%s137 + $0x268] sm:$0xf]
          %v325 = vld [vmem:[%s137 + $0x26c] sm:$0xf]
          %v326 = vld [vmem:[%s137 + $0x270] sm:$0xf]
          %v327 = vld [vmem:[%s137 + $0x274] sm:$0xf]
          %v328 = vld [vmem:[%s137 + $0x278] sm:$0xf]
          %v329 = vld [vmem:[%s137 + $0x27c] sm:$0xf]
          %v330 = vld [vmem:[%s137 + $0x280] sm:$0xf]
          %v331 = vld [vmem:[%s137 + $0x284] sm:$0xf]
          %v332 = vld [vmem:[%s137 + $0x288] sm:$0xf]
          %v333 = vld [vmem:[%s137 + $0x28c] sm:$0xf]
          %v334 = vld [vmem:[%s137 + $0x290] sm:$0xf]
          %v335 = vld [vmem:[%s137 + $0x294] sm:$0xf]
          %v336 = vld [vmem:[%s137 + $0x298] sm:$0xf]
          %v337 = vld [vmem:[%s137 + $0x29c] sm:$0xf]
          %v338 = vld [vmem:[%s137 + $0x2a0] sm:$0xf]
          %v339 = vld [vmem:[%s137 + $0x2a4] sm:$0xf]
          %v340 = vld [vmem:[%s137 + $0x2a8] sm:$0xf]
          %v341 = vld [vmem:[%s137 + $0x2ac] sm:$0xf]
          %v342 = vld [vmem:[%s137 + $0x2b0] sm:$0xf]
          %v343 = vld [vmem:[%s137 + $0x2b4] sm:$0xf]
          %v344 = vld [vmem:[%s137 + $0x2b8] sm:$0xf]
          %v345 = vld [vmem:[%s137 + $0x2bc] sm:$0xf]
          %v346 = vld [vmem:[%s137 + $0x2c0] sm:$0xf]
          %v347 = vld [vmem:[%s137 + $0x2c4] sm:$0xf]
          %v348 = vld [vmem:[%s137 + $0x2c8] sm:$0xf]
          %v349 = vld [vmem:[%s137 + $0x2cc] sm:$0xf]
          %v350 = vld [vmem:[%s137 + $0x2d0] sm:$0xf]
          %v351 = vld [vmem:[%s137 + $0x2d4] sm:$0xf]
          %v352 = vld [vmem:[%s137 + $0x2d8] sm:$0xf]
          %v353 = vld [vmem:[%s137 + $0x2dc] sm:$0xf]
          %v354 = vld [vmem:[%s137 + $0x2e0] sm:$0xf]
          %v355 = vld [vmem:[%s137 + $0x2e4] sm:$0xf]
          %v356 = vld [vmem:[%s137 + $0x2e8] sm:$0xf]
          %v357 = vld [vmem:[%s137 + $0x2ec] sm:$0xf]
          %v358 = vld [vmem:[%s137 + $0x2f0] sm:$0xf]
          %v359 = vld [vmem:[%s137 + $0x2f4] sm:$0xf]
          %v360 = vld [vmem:[%s137 + $0x2f8] sm:$0xf]
          %v361 = vld [vmem:[%s137 + $0x2fc] sm:$0xf]
          %v362 = vld [vmem:[%s137 + $0x300] sm:$0xf]
          %v363 = vld [vmem:[%s137 + $0x304] sm:$0xf]
          %v364 = vld [vmem:[%s137 + $0x308] sm:$0xf]
          %v365 = vld [vmem:[%s137 + $0x30c] sm:$0xf]
          %v366 = vld [vmem:[%s137 + $0x310] sm:$0xf]
          %v367 = vld [vmem:[%s137 + $0x314] sm:$0xf]
          %v368 = vld [vmem:[%s137 + $0x318] sm:$0xf]
          %v369 = vld [vmem:[%s137 + $0x31c] sm:$0xf]
          %v370 = vld [vmem:[%s137 + $0x320] sm:$0xf]
          %v371 = vld [vmem:[%s137 + $0x324] sm:$0xf]
          %v372 = vld [vmem:[%s137 + $0x328] sm:$0xf]
          %v373 = vld [vmem:[%s137 + $0x32c] sm:$0xf]
          %v374 = vld [vmem:[%s137 + $0x330] sm:$0xf]
          %v375 = vld [vmem:[%s137 + $0x334] sm:$0xf]
          %v376 = vld [vmem:[%s137 + $0x338] sm:$0xf]
          %v377 = vld [vmem:[%s137 + $0x33c] sm:$0xf]
          %v378 = vld [vmem:[%s137 + $0x340] sm:$0xf]
          %v379 = vld [vmem:[%s137 + $0x344] sm:$0xf]
          %v380 = vld [vmem:[%s137 + $0x348] sm:$0xf]
          %v381 = vld [vmem:[%s137 + $0x34c] sm:$0xf]
          %v382 = vld [vmem:[%s137 + $0x350] sm:$0xf]
          %v383 = vld [vmem:[%s137 + $0x354] sm:$0xf]
          %v384 = vld [vmem:[%s137 + $0x358] sm:$0xf]
          %v385 = vld [vmem:[%s137 + $0x35c] sm:$0xf]
          %v386 = vld [vmem:[%s137 + $0x360] sm:$0xf]
          %v387 = vld [vmem:[%s137 + $0x364] sm:$0xf]
          %v388 = vld [vmem:[%s137 + $0x368] sm:$0xf]
          %v389 = vld [vmem:[%s137 + $0x36c] sm:$0xf]
          %v390 = vld [vmem:[%s137 + $0x370] sm:$0xf]
          %v391 = vld [vmem:[%s137 + $0x374] sm:$0xf]
          %v392 = vld [vmem:[%s137 + $0x378] sm:$0xf]
          %v393 = vld [vmem:[%s137 + $0x37c] sm:$0xf]
          %v394 = vld [vmem:[%s137 + $0x380] sm:$0xf]
          %v395 = vld [vmem:[%s137 + $0x384] sm:$0xf]
          %v396 = vld [vmem:[%s137 + $0x388] sm:$0xf]
          %v397 = vld [vmem:[%s137 + $0x38c] sm:$0xf]
          %v398 = vld [vmem:[%s137 + $0x390] sm:$0xf]
          %v399 = vld [vmem:[%s137 + $0x394] sm:$0xf]
          %v400 = vld [vmem:[%s137 + $0x398] sm:$0xf]
          %v401 = vld [vmem:[%s137 + $0x39c] sm:$0xf]
          %v402 = vld [vmem:[%s137 + $0x3a0] sm:$0xf]
          %v403 = vld [vmem:[%s137 + $0x3a4] sm:$0xf]
          %v404 = vld [vmem:[%s137 + $0x3a8] sm:$0xf]
          %v405 = vld [vmem:[%s137 + $0x3ac] sm:$0xf]
          %v406 = vld [vmem:[%s137 + $0x3b0] sm:$0xf]
          %v407 = vld [vmem:[%s137 + $0x3b4] sm:$0xf]
          %v408 = vld [vmem:[%s137 + $0x3b8] sm:$0xf]
          %v409 = vld [vmem:[%s137 + $0x3bc] sm:$0xf]
          %v410 = vld [vmem:[%s137 + $0x3c0] sm:$0xf]
          %v411 = vld [vmem:[%s137 + $0x3c4] sm:$0xf]
          %v412 = vld [vmem:[%s137 + $0x3c8] sm:$0xf]
          %v413 = vld [vmem:[%s137 + $0x3cc] sm:$0xf]
          %v414 = vld [vmem:[%s137 + $0x3d0] sm:$0xf]
          %v415 = vld [vmem:[%s137 + $0x3d4] sm:$0xf]
          %v416 = vld [vmem:[%s137 + $0x3d8] sm:$0xf]
          %v417 = vld [vmem:[%s137 + $0x3dc] sm:$0xf]
          %v418 = vld [vmem:[%s137 + $0x3e0] sm:$0xf]
          %v419 = vld [vmem:[%s137 + $0x3e4] sm:$0xf]
          %v420 = vld [vmem:[%s137 + $0x3e8] sm:$0xf]
          %v421 = vld [vmem:[%s137 + $0x3ec] sm:$0xf]
          %v422 = vld [vmem:[%s137 + $0x3f0] sm:$0xf]
          %v423 = vld [vmem:[%s137 + $0x3f4] sm:$0xf]
          %v424 = vld [vmem:[%s137 + $0x3f8] sm:$0xf]
          %v425 = vld [vmem:[%s137 + $0x3fc] sm:$0xf]
          %v426 = vld [vmem:[%s137 + $0x400] sm:$0xf]
          %v427 = vld [vmem:[%s137 + $0x404] sm:$0xf]
          %v428 = vld [vmem:[%s137 + $0x408] sm:$0xf]
          %v429 = vld [vmem:[%s137 + $0x40c] sm:$0xf]
          %v430 = vld [vmem:[%s137 + $0x410] sm:$0xf]
          %v431 = vld [vmem:[%s137 + $0x414] sm:$0xf]
          %v432 = vld [vmem:[%s137 + $0x418] sm:$0xf]
          %v433 = vld [vmem:[%s137 + $0x41c] sm:$0xf]
          %v434 = vld [vmem:[%s137 + $0x420] sm:$0xf]
          %v435 = vld [vmem:[%s137 + $0x424] sm:$0xf]
          %v436 = vld [vmem:[%s137 + $0x428] sm:$0xf]
          %v437 = vld [vmem:[%s137 + $0x42c] sm:$0xf]
          %v438 = vld [vmem:[%s137 + $0x430] sm:$0xf]
          %v439 = vld [vmem:[%s137 + $0x434] sm:$0xf]
          %v440 = vld [vmem:[%s137 + $0x438] sm:$0xf]
          %v441 = vld [vmem:[%s137 + $0x43c] sm:$0xf]
          %v442 = vld [vmem:[%s137 + $0x440] sm:$0xf]
          %v443 = vld [vmem:[%s137 + $0x444] sm:$0xf]
          %v444 = vld [vmem:[%s137 + $0x448] sm:$0xf]
          %v445 = vld [vmem:[%s137 + $0x44c] sm:$0xf]
          %v446 = vld [vmem:[%s137 + $0x450] sm:$0xf]
          %v447 = vld [vmem:[%s137 + $0x454] sm:$0xf]
          %v448 = vld [vmem:[%s137 + $0x458] sm:$0xf]
          %v449 = vld [vmem:[%s137 + $0x45c] sm:$0xf]
          %v450 = vld [vmem:[%s137 + $0x460] sm:$0xf]
          %v451 = vld [vmem:[%s137 + $0x464] sm:$0xf]
          %v452 = vld [vmem:[%s137 + $0x468] sm:$0xf]
          %v453 = vld [vmem:[%s137 + $0x46c] sm:$0xf]
          %v454 = vld [vmem:[%s137 + $0x470] sm:$0xf]
          %v455 = vld [vmem:[%s137 + $0x474] sm:$0xf]
          %v456 = vld [vmem:[%s137 + $0x478] sm:$0xf]
          %v457 = vld [vmem:[%s137 + $0x47c] sm:$0xf]
          %v458 = vld [vmem:[%s137 + $0x480] sm:$0xf]
          %v459 = vld [vmem:[%s137 + $0x484] sm:$0xf]
          %v460 = vld [vmem:[%s137 + $0x488] sm:$0xf]
          %v461 = vld [vmem:[%s137 + $0x48c] sm:$0xf]
          %v462 = vld [vmem:[%s137 + $0x490] sm:$0xf]
          %v463 = vld [vmem:[%s137 + $0x494] sm:$0xf]
          %v464 = vld [vmem:[%s137 + $0x498] sm:$0xf]
          %v465 = vld [vmem:[%s137 + $0x49c] sm:$0xf]
          %v466 = vld [vmem:[%s137 + $0x4a0] sm:$0xf]
          %v467 = vld [vmem:[%s137 + $0x4a4] sm:$0xf]
          %v468 = vld [vmem:[%s137 + $0x4a8] sm:$0xf]
          %v469 = vld [vmem:[%s137 + $0x4ac] sm:$0xf]
          %v470 = vunpack.c.l.bf16 %v170
          %v471 = vunpack.c.l.bf16 %v171
          %v472 = vunpack.c.l.bf16 %v172
          %v473 = vunpack.c.l.bf16 %v173
          %v474 = vunpack.c.l.bf16 %v174
          %v475 = vunpack.c.l.bf16 %v175
          %v476 = vunpack.c.l.bf16 %v176
          %v477 = vunpack.c.l.bf16 %v177
          %v478 = vunpack.c.l.bf16 %v178
          %v479 = vunpack.c.l.bf16 %v179
          %v480 = vunpack.c.l.bf16 %v180
          %v481 = vunpack.c.l.bf16 %v181
          %v482 = vunpack.c.l.bf16 %v182
          %v483 = vunpack.c.l.bf16 %v183
          %v484 = vunpack.c.l.bf16 %v184
          %v485 = vunpack.c.l.bf16 %v185
          %v486 = vunpack.c.l.bf16 %v186
          %v487 = vunpack.c.l.bf16 %v187
          %v488 = vunpack.c.l.bf16 %v188
          %v489 = vunpack.c.l.bf16 %v189
          %v490 = vunpack.c.l.bf16 %v190
          %v491 = vunpack.c.l.bf16 %v191
          %v492 = vunpack.c.l.bf16 %v192
          %v493 = vunpack.c.l.bf16 %v193
          %v494 = vunpack.c.l.bf16 %v194
          %v495 = vunpack.c.l.bf16 %v195
          %v496 = vunpack.c.l.bf16 %v196
          %v497 = vunpack.c.l.bf16 %v197
          %v498 = vunpack.c.l.bf16 %v198
          %v499 = vunpack.c.l.bf16 %v199
          %v500 = vunpack.c.l.bf16 %v200
          %v501 = vunpack.c.l.bf16 %v201
          %v502 = vunpack.c.l.bf16 %v202
          %v503 = vunpack.c.l.bf16 %v203
          %v504 = vunpack.c.l.bf16 %v204
          %v505 = vunpack.c.l.bf16 %v205
          %v506 = vunpack.c.l.bf16 %v206
          %v507 = vunpack.c.l.bf16 %v207
          %v508 = vunpack.c.l.bf16 %v208
          %v509 = vunpack.c.l.bf16 %v209
          %v510 = vunpack.c.l.bf16 %v210
          %v511 = vunpack.c.l.bf16 %v211
          %v512 = vunpack.c.l.bf16 %v212
          %v513 = vunpack.c.l.bf16 %v213
          %v514 = vunpack.c.l.bf16 %v214
          %v515 = vunpack.c.l.bf16 %v215
          %v516 = vunpack.c.l.bf16 %v216
          %v517 = vunpack.c.l.bf16 %v217
          %v518 = vunpack.c.l.bf16 %v218
          %v519 = vunpack.c.l.bf16 %v219
          %v520 = vunpack.c.l.bf16 %v220
          %v521 = vunpack.c.l.bf16 %v221
          %v522 = vunpack.c.l.bf16 %v222
          %v523 = vunpack.c.l.bf16 %v223
          %v524 = vunpack.c.l.bf16 %v224
          %v525 = vunpack.c.l.bf16 %v225
          %v526 = vunpack.c.l.bf16 %v226
          %v527 = vunpack.c.l.bf16 %v227
          %v528 = vunpack.c.l.bf16 %v228
          %v529 = vunpack.c.l.bf16 %v229
          %v530 = vunpack.c.l.bf16 %v230
          %v531 = vunpack.c.l.bf16 %v231
          %v532 = vunpack.c.l.bf16 %v232
          %v533 = vunpack.c.l.bf16 %v233
          %v534 = vunpack.c.l.bf16 %v234
          %v535 = vunpack.c.l.bf16 %v235
          %v536 = vunpack.c.l.bf16 %v236
          %v537 = vunpack.c.l.bf16 %v237
          %v538 = vunpack.c.l.bf16 %v238
          %v539 = vunpack.c.l.bf16 %v239
          %v540 = vunpack.c.l.bf16 %v240
          %v541 = vunpack.c.l.bf16 %v241
          %v542 = vunpack.c.l.bf16 %v242
          %v543 = vunpack.c.l.bf16 %v243
          %v544 = vunpack.c.l.bf16 %v244
          %v545 = vunpack.c.l.bf16 %v245
          %v546 = vunpack.c.l.bf16 %v246
          %v547 = vunpack.c.l.bf16 %v247
          %v548 = vunpack.c.l.bf16 %v248
          %v549 = vunpack.c.l.bf16 %v249
          %v550 = vunpack.c.l.bf16 %v250
          %v551 = vunpack.c.l.bf16 %v251
          %v552 = vunpack.c.l.bf16 %v252
          %v553 = vunpack.c.l.bf16 %v253
          %v554 = vunpack.c.l.bf16 %v254
          %v555 = vunpack.c.l.bf16 %v255
          %v556 = vunpack.c.l.bf16 %v256
          %v557 = vunpack.c.l.bf16 %v257
          %v558 = vunpack.c.l.bf16 %v258
          %v559 = vunpack.c.l.bf16 %v259
          %v560 = vunpack.c.l.bf16 %v260
          %v561 = vunpack.c.l.bf16 %v261
          %v562 = vunpack.c.l.bf16 %v262
          %v563 = vunpack.c.l.bf16 %v263
          %v564 = vunpack.c.l.bf16 %v264
          %v565 = vunpack.c.l.bf16 %v265
          %v566 = vunpack.c.l.bf16 %v266
          %v567 = vunpack.c.l.bf16 %v267
          %v568 = vunpack.c.l.bf16 %v268
          %v569 = vunpack.c.l.bf16 %v269
          %v570 = vunpack.c.l.bf16 %v270
          %v571 = vunpack.c.l.bf16 %v271
          %v572 = vunpack.c.l.bf16 %v272
          %v573 = vunpack.c.l.bf16 %v273
          %v574 = vunpack.c.l.bf16 %v274
          %v575 = vunpack.c.l.bf16 %v275
          %v576 = vunpack.c.l.bf16 %v276
          %v577 = vunpack.c.l.bf16 %v277
          %v578 = vunpack.c.l.bf16 %v278
          %v579 = vunpack.c.l.bf16 %v279
          %v580 = vunpack.c.l.bf16 %v280
          %v581 = vunpack.c.l.bf16 %v281
          %v582 = vunpack.c.l.bf16 %v282
          %v583 = vunpack.c.l.bf16 %v283
          %v584 = vunpack.c.l.bf16 %v284
          %v585 = vunpack.c.l.bf16 %v285
          %v586 = vunpack.c.l.bf16 %v286
          %v587 = vunpack.c.l.bf16 %v287
          %v588 = vunpack.c.l.bf16 %v288
          %v589 = vunpack.c.l.bf16 %v289
          %v590 = vunpack.c.l.bf16 %v290
          %v591 = vunpack.c.l.bf16 %v291
          %v592 = vunpack.c.l.bf16 %v292
          %v593 = vunpack.c.l.bf16 %v293
          %v594 = vunpack.c.l.bf16 %v294
          %v595 = vunpack.c.l.bf16 %v295
          %v596 = vunpack.c.l.bf16 %v296
          %v597 = vunpack.c.l.bf16 %v297
          %v598 = vunpack.c.l.bf16 %v298
          %v599 = vunpack.c.l.bf16 %v299
          %v600 = vunpack.c.l.bf16 %v300
          %v601 = vunpack.c.l.bf16 %v301
          %v602 = vunpack.c.l.bf16 %v302
          %v603 = vunpack.c.l.bf16 %v303
          %v604 = vunpack.c.l.bf16 %v304
          %v605 = vunpack.c.l.bf16 %v305
          %v606 = vunpack.c.l.bf16 %v306
          %v607 = vunpack.c.l.bf16 %v307
          %v608 = vunpack.c.l.bf16 %v308
          %v609 = vunpack.c.l.bf16 %v309
          %v610 = vunpack.c.l.bf16 %v310
          %v611 = vunpack.c.l.bf16 %v311
          %v612 = vunpack.c.l.bf16 %v312
          %v613 = vunpack.c.l.bf16 %v313
          %v614 = vunpack.c.l.bf16 %v314
          %v615 = vunpack.c.l.bf16 %v315
          %v616 = vunpack.c.l.bf16 %v316
          %v617 = vunpack.c.l.bf16 %v317
          %v618 = vunpack.c.l.bf16 %v318
          %v619 = vunpack.c.l.bf16 %v319
          %v620 = vunpack.c.l.bf16 %v320
          %v621 = vunpack.c.l.bf16 %v321
          %v622 = vunpack.c.l.bf16 %v322
          %v623 = vunpack.c.l.bf16 %v323
          %v624 = vunpack.c.l.bf16 %v324
          %v625 = vunpack.c.l.bf16 %v325
          %v626 = vunpack.c.l.bf16 %v326
          %v627 = vunpack.c.l.bf16 %v327
          %v628 = vunpack.c.l.bf16 %v328
          %v629 = vunpack.c.l.bf16 %v329
          %v630 = vunpack.c.l.bf16 %v330
          %v631 = vunpack.c.l.bf16 %v331
          %v632 = vunpack.c.l.bf16 %v332
          %v633 = vunpack.c.l.bf16 %v333
          %v634 = vunpack.c.l.bf16 %v334
          %v635 = vunpack.c.l.bf16 %v335
          %v636 = vunpack.c.l.bf16 %v336
          %v637 = vunpack.c.l.bf16 %v337
          %v638 = vunpack.c.l.bf16 %v338
          %v639 = vunpack.c.l.bf16 %v339
          %v640 = vunpack.c.l.bf16 %v340
          %v641 = vunpack.c.l.bf16 %v341
          %v642 = vunpack.c.l.bf16 %v342
          %v643 = vunpack.c.l.bf16 %v343
          %v644 = vunpack.c.l.bf16 %v344
          %v645 = vunpack.c.l.bf16 %v345
          %v646 = vunpack.c.l.bf16 %v346
          %v647 = vunpack.c.l.bf16 %v347
          %v648 = vunpack.c.l.bf16 %v348
          %v649 = vunpack.c.l.bf16 %v349
          %v650 = vunpack.c.l.bf16 %v350
          %v651 = vunpack.c.l.bf16 %v351
          %v652 = vunpack.c.l.bf16 %v352
          %v653 = vunpack.c.l.bf16 %v353
          %v654 = vunpack.c.l.bf16 %v354
          %v655 = vunpack.c.l.bf16 %v355
          %v656 = vunpack.c.l.bf16 %v356
          %v657 = vunpack.c.l.bf16 %v357
          %v658 = vunpack.c.l.bf16 %v358
          %v659 = vunpack.c.l.bf16 %v359
          %v660 = vunpack.c.l.bf16 %v360
          %v661 = vunpack.c.l.bf16 %v361
          %v662 = vunpack.c.l.bf16 %v362
          %v663 = vunpack.c.l.bf16 %v363
          %v664 = vunpack.c.l.bf16 %v364
          %v665 = vunpack.c.l.bf16 %v365
          %v666 = vunpack.c.l.bf16 %v366
          %v667 = vunpack.c.l.bf16 %v367
          %v668 = vunpack.c.l.bf16 %v368
          %v669 = vunpack.c.l.bf16 %v369
          %v670 = vunpack.c.l.bf16 %v370
          %v671 = vunpack.c.l.bf16 %v371
          %v672 = vunpack.c.l.bf16 %v372
          %v673 = vunpack.c.l.bf16 %v373
          %v674 = vunpack.c.l.bf16 %v374
          %v675 = vunpack.c.l.bf16 %v375
          %v676 = vunpack.c.l.bf16 %v376
          %v677 = vunpack.c.l.bf16 %v377
          %v678 = vunpack.c.l.bf16 %v378
          %v679 = vunpack.c.l.bf16 %v379
          %v680 = vunpack.c.l.bf16 %v380
          %v681 = vunpack.c.l.bf16 %v381
          %v682 = vunpack.c.l.bf16 %v382
          %v683 = vunpack.c.l.bf16 %v383
          %v684 = vunpack.c.l.bf16 %v384
          %v685 = vunpack.c.l.bf16 %v385
          %v686 = vunpack.c.l.bf16 %v386
          %v687 = vunpack.c.l.bf16 %v387
          %v688 = vunpack.c.l.bf16 %v388
          %v689 = vunpack.c.l.bf16 %v389
          %v690 = vunpack.c.l.bf16 %v390
          %v691 = vunpack.c.l.bf16 %v391
          %v692 = vunpack.c.l.bf16 %v392
          %v693 = vunpack.c.l.bf16 %v393
          %v694 = vunpack.c.l.bf16 %v394
          %v695 = vunpack.c.l.bf16 %v395
          %v696 = vunpack.c.l.bf16 %v396
          %v697 = vunpack.c.l.bf16 %v397
          %v698 = vunpack.c.l.bf16 %v398
          %v699 = vunpack.c.l.bf16 %v399
          %v700 = vunpack.c.l.bf16 %v400
          %v701 = vunpack.c.l.bf16 %v401
          %v702 = vunpack.c.l.bf16 %v402
          %v703 = vunpack.c.l.bf16 %v403
          %v704 = vunpack.c.l.bf16 %v404
          %v705 = vunpack.c.l.bf16 %v405
          %v706 = vunpack.c.l.bf16 %v406
          %v707 = vunpack.c.l.bf16 %v407
          %v708 = vunpack.c.l.bf16 %v408
          %v709 = vunpack.c.l.bf16 %v409
          %v710 = vunpack.c.l.bf16 %v410
          %v711 = vunpack.c.l.bf16 %v411
          %v712 = vunpack.c.l.bf16 %v412
          %v713 = vunpack.c.l.bf16 %v413
          %v714 = vunpack.c.l.bf16 %v414
          %v715 = vunpack.c.l.bf16 %v415
          %v716 = vunpack.c.l.bf16 %v416
          %v717 = vunpack.c.l.bf16 %v417
          %v718 = vunpack.c.l.bf16 %v418
          %v719 = vunpack.c.l.bf16 %v419
          %v720 = vunpack.c.l.bf16 %v420
          %v721 = vunpack.c.l.bf16 %v421
          %v722 = vunpack.c.l.bf16 %v422
          %v723 = vunpack.c.l.bf16 %v423
          %v724 = vunpack.c.l.bf16 %v424
          %v725 = vunpack.c.l.bf16 %v425
          %v726 = vunpack.c.l.bf16 %v426
          %v727 = vunpack.c.l.bf16 %v427
          %v728 = vunpack.c.l.bf16 %v428
          %v729 = vunpack.c.l.bf16 %v429
          %v730 = vunpack.c.l.bf16 %v430
          %v731 = vunpack.c.l.bf16 %v431
          %v732 = vunpack.c.l.bf16 %v432
          %v733 = vunpack.c.l.bf16 %v433
          %v734 = vunpack.c.l.bf16 %v434
          %v735 = vunpack.c.l.bf16 %v435
          %v736 = vunpack.c.l.bf16 %v436
          %v737 = vunpack.c.l.bf16 %v437
          %v738 = vunpack.c.l.bf16 %v438
          %v739 = vunpack.c.l.bf16 %v439
          %v740 = vunpack.c.l.bf16 %v440
          %v741 = vunpack.c.l.bf16 %v441
          %v742 = vunpack.c.l.bf16 %v442
          %v743 = vunpack.c.l.bf16 %v443
          %v744 = vunpack.c.l.bf16 %v444
          %v745 = vunpack.c.l.bf16 %v445
          %v746 = vunpack.c.l.bf16 %v446
          %v747 = vunpack.c.l.bf16 %v447
          %v748 = vunpack.c.l.bf16 %v448
          %v749 = vunpack.c.l.bf16 %v449
          %v750 = vunpack.c.l.bf16 %v450
          %v751 = vunpack.c.l.bf16 %v451
          %v752 = vunpack.c.l.bf16 %v452
          %v753 = vunpack.c.l.bf16 %v453
          %v754 = vunpack.c.l.bf16 %v454
          %v755 = vunpack.c.l.bf16 %v455
          %v756 = vunpack.c.l.bf16 %v456
          %v757 = vunpack.c.l.bf16 %v457
          %v758 = vunpack.c.l.bf16 %v458
          %v759 = vunpack.c.l.bf16 %v459
          %v760 = vunpack.c.l.bf16 %v460
          %v761 = vunpack.c.l.bf16 %v461
          %v762 = vunpack.c.l.bf16 %v462
          %v763 = vunpack.c.l.bf16 %v463
          %v764 = vunpack.c.l.bf16 %v464
          %v765 = vunpack.c.l.bf16 %v465
          %v766 = vunpack.c.l.bf16 %v466
          %v767 = vunpack.c.l.bf16 %v467
          %v768 = vunpack.c.l.bf16 %v468
          %v769 = vunpack.c.l.bf16 %v469
          %v770 = vmul.f32 %v470, %v470
          %v771 = vmul.f32 %v471, %v471
          %v772 = vmul.f32 %v472, %v472
          %v773 = vmul.f32 %v473, %v473
          %v774 = vmul.f32 %v474, %v474
          %v775 = vmul.f32 %v475, %v475
          %v776 = vmul.f32 %v476, %v476
          %v777 = vmul.f32 %v477, %v477
          %v778 = vmul.f32 %v478, %v478
          %v779 = vmul.f32 %v479, %v479
          %v780 = vmul.f32 %v480, %v480
          %v781 = vmul.f32 %v481, %v481
          %v782 = vmul.f32 %v482, %v482
          %v783 = vmul.f32 %v483, %v483
          %v784 = vmul.f32 %v484, %v484
          %v785 = vmul.f32 %v485, %v485
          %v786 = vmul.f32 %v486, %v486
          %v787 = vmul.f32 %v487, %v487
          %v788 = vmul.f32 %v488, %v488
          %v789 = vmul.f32 %v489, %v489
          %v790 = vmul.f32 %v490, %v490
          %v791 = vmul.f32 %v491, %v491
          %v792 = vmul.f32 %v492, %v492
          %v793 = vmul.f32 %v493, %v493
          %v794 = vmul.f32 %v494, %v494
          %v795 = vmul.f32 %v495, %v495
          %v796 = vmul.f32 %v496, %v496
          %v797 = vmul.f32 %v497, %v497
          %v798 = vmul.f32 %v498, %v498
          %v799 = vmul.f32 %v499, %v499
          %v800 = vmul.f32 %v500, %v500
          %v801 = vmul.f32 %v501, %v501
          %v802 = vmul.f32 %v502, %v502
          %v803 = vmul.f32 %v503, %v503
          %v804 = vmul.f32 %v504, %v504
          %v805 = vmul.f32 %v505, %v505
          %v806 = vmul.f32 %v506, %v506
          %v807 = vmul.f32 %v507, %v507
          %v808 = vmul.f32 %v508, %v508
          %v809 = vmul.f32 %v509, %v509
          %v810 = vmul.f32 %v510, %v510
          %v811 = vmul.f32 %v511, %v511
          %v812 = vmul.f32 %v512, %v512
          %v813 = vmul.f32 %v513, %v513
          %v814 = vmul.f32 %v514, %v514
          %v815 = vmul.f32 %v515, %v515
          %v816 = vmul.f32 %v516, %v516
          %v817 = vmul.f32 %v517, %v517
          %v818 = vmul.f32 %v518, %v518
          %v819 = vmul.f32 %v519, %v519
          %v820 = vmul.f32 %v520, %v520
          %v821 = vmul.f32 %v521, %v521
          %v822 = vmul.f32 %v522, %v522
          %v823 = vmul.f32 %v523, %v523
          %v824 = vmul.f32 %v524, %v524
          %v825 = vmul.f32 %v525, %v525
          %v826 = vmul.f32 %v526, %v526
          %v827 = vmul.f32 %v527, %v527
          %v828 = vmul.f32 %v528, %v528
          %v829 = vmul.f32 %v529, %v529
          %v830 = vmul.f32 %v530, %v530
          %v831 = vmul.f32 %v531, %v531
          %v832 = vmul.f32 %v532, %v532
          %v833 = vmul.f32 %v533, %v533
          %v834 = vmul.f32 %v534, %v534
          %v835 = vmul.f32 %v535, %v535
          %v836 = vmul.f32 %v536, %v536
          %v837 = vmul.f32 %v537, %v537
          %v838 = vmul.f32 %v538, %v538
          %v839 = vmul.f32 %v539, %v539
          %v840 = vmul.f32 %v540, %v540
          %v841 = vmul.f32 %v541, %v541
          %v842 = vmul.f32 %v542, %v542
          %v843 = vmul.f32 %v543, %v543
          %v844 = vmul.f32 %v544, %v544
          %v845 = vmul.f32 %v545, %v545
          %v846 = vmul.f32 %v546, %v546
          %v847 = vmul.f32 %v547, %v547
          %v848 = vmul.f32 %v548, %v548
          %v849 = vmul.f32 %v549, %v549
          %v850 = vmul.f32 %v550, %v550
          %v851 = vmul.f32 %v551, %v551
          %v852 = vmul.f32 %v552, %v552
          %v853 = vmul.f32 %v553, %v553
          %v854 = vmul.f32 %v554, %v554
          %v855 = vmul.f32 %v555, %v555
          %v856 = vmul.f32 %v556, %v556
          %v857 = vmul.f32 %v557, %v557
          %v858 = vmul.f32 %v558, %v558
          %v859 = vmul.f32 %v559, %v559
          %v860 = vmul.f32 %v560, %v560
          %v861 = vmul.f32 %v561, %v561
          %v862 = vmul.f32 %v562, %v562
          %v863 = vmul.f32 %v563, %v563
          %v864 = vmul.f32 %v564, %v564
          %v865 = vmul.f32 %v565, %v565
          %v866 = vmul.f32 %v566, %v566
          %v867 = vmul.f32 %v567, %v567
          %v868 = vmul.f32 %v568, %v568
          %v869 = vmul.f32 %v569, %v569
          %v870 = vmul.f32 %v570, %v570
          %v871 = vmul.f32 %v571, %v571
          %v872 = vmul.f32 %v572, %v572
          %v873 = vmul.f32 %v573, %v573
          %v874 = vmul.f32 %v574, %v574
          %v875 = vmul.f32 %v575, %v575
          %v876 = vmul.f32 %v576, %v576
          %v877 = vmul.f32 %v577, %v577
          %v878 = vmul.f32 %v578, %v578
          %v879 = vmul.f32 %v579, %v579
          %v880 = vmul.f32 %v580, %v580
          %v881 = vmul.f32 %v581, %v581
          %v882 = vmul.f32 %v582, %v582
          %v883 = vmul.f32 %v583, %v583
          %v884 = vmul.f32 %v584, %v584
          %v885 = vmul.f32 %v585, %v585
          %v886 = vmul.f32 %v586, %v586
          %v887 = vmul.f32 %v587, %v587
          %v888 = vmul.f32 %v588, %v588
          %v889 = vmul.f32 %v589, %v589
          %v890 = vmul.f32 %v590, %v590
          %v891 = vmul.f32 %v591, %v591
          %v892 = vmul.f32 %v592, %v592
          %v893 = vmul.f32 %v593, %v593
          %v894 = vmul.f32 %v594, %v594
          %v895 = vmul.f32 %v595, %v595
          %v896 = vmul.f32 %v596, %v596
          %v897 = vmul.f32 %v597, %v597
          %v898 = vmul.f32 %v598, %v598
          %v899 = vmul.f32 %v599, %v599
          %v900 = vmul.f32 %v600, %v600
          %v901 = vmul.f32 %v601, %v601
          %v902 = vmul.f32 %v602, %v602
          %v903 = vmul.f32 %v603, %v603
          %v904 = vmul.f32 %v604, %v604
          %v905 = vmul.f32 %v605, %v605
          %v906 = vmul.f32 %v606, %v606
          %v907 = vmul.f32 %v607, %v607
          %v908 = vmul.f32 %v608, %v608
          %v909 = vmul.f32 %v609, %v609
          %v910 = vmul.f32 %v610, %v610
          %v911 = vmul.f32 %v611, %v611
          %v912 = vmul.f32 %v612, %v612
          %v913 = vmul.f32 %v613, %v613
          %v914 = vmul.f32 %v614, %v614
          %v915 = vmul.f32 %v615, %v615
          %v916 = vmul.f32 %v616, %v616
          %v917 = vmul.f32 %v617, %v617
          %v918 = vmul.f32 %v618, %v618
          %v919 = vmul.f32 %v619, %v619
          %v920 = vmul.f32 %v620, %v620
          %v921 = vmul.f32 %v621, %v621
          %v922 = vmul.f32 %v622, %v622
          %v923 = vmul.f32 %v623, %v623
          %v924 = vmul.f32 %v624, %v624
          %v925 = vmul.f32 %v625, %v625
          %v926 = vmul.f32 %v626, %v626
          %v927 = vmul.f32 %v627, %v627
          %v928 = vmul.f32 %v628, %v628
          %v929 = vmul.f32 %v629, %v629
          %v930 = vmul.f32 %v630, %v630
          %v931 = vmul.f32 %v631, %v631
          %v932 = vmul.f32 %v632, %v632
          %v933 = vmul.f32 %v633, %v633
          %v934 = vmul.f32 %v634, %v634
          %v935 = vmul.f32 %v635, %v635
          %v936 = vmul.f32 %v636, %v636
          %v937 = vmul.f32 %v637, %v637
          %v938 = vmul.f32 %v638, %v638
          %v939 = vmul.f32 %v639, %v639
          %v940 = vmul.f32 %v640, %v640
          %v941 = vmul.f32 %v641, %v641
          %v942 = vmul.f32 %v642, %v642
          %v943 = vmul.f32 %v643, %v643
          %v944 = vmul.f32 %v644, %v644
          %v945 = vmul.f32 %v645, %v645
          %v946 = vmul.f32 %v646, %v646
          %v947 = vmul.f32 %v647, %v647
          %v948 = vmul.f32 %v648, %v648
          %v949 = vmul.f32 %v649, %v649
          %v950 = vmul.f32 %v650, %v650
          %v951 = vmul.f32 %v651, %v651
          %v952 = vmul.f32 %v652, %v652
          %v953 = vmul.f32 %v653, %v653
          %v954 = vmul.f32 %v654, %v654
          %v955 = vmul.f32 %v655, %v655
          %v956 = vmul.f32 %v656, %v656
          %v957 = vmul.f32 %v657, %v657
          %v958 = vmul.f32 %v658, %v658
          %v959 = vmul.f32 %v659, %v659
          %v960 = vmul.f32 %v660, %v660
          %v961 = vmul.f32 %v661, %v661
          %v962 = vmul.f32 %v662, %v662
          %v963 = vmul.f32 %v663, %v663
          %v964 = vmul.f32 %v664, %v664
          %v965 = vmul.f32 %v665, %v665
          %v966 = vmul.f32 %v666, %v666
          %v967 = vmul.f32 %v667, %v667
          %v968 = vmul.f32 %v668, %v668
          %v969 = vmul.f32 %v669, %v669
          %v970 = vmul.f32 %v670, %v670
          %v971 = vmul.f32 %v671, %v671
          %v972 = vmul.f32 %v672, %v672
          %v973 = vmul.f32 %v673, %v673
          %v974 = vmul.f32 %v674, %v674
          %v975 = vmul.f32 %v675, %v675
          %v976 = vmul.f32 %v676, %v676
          %v977 = vmul.f32 %v677, %v677
          %v978 = vmul.f32 %v678, %v678
          %v979 = vmul.f32 %v679, %v679
          %v980 = vmul.f32 %v680, %v680
          %v981 = vmul.f32 %v681, %v681
          %v982 = vmul.f32 %v682, %v682
          %v983 = vmul.f32 %v683, %v683
          %v984 = vmul.f32 %v684, %v684
          %v985 = vmul.f32 %v685, %v685
          %v986 = vmul.f32 %v686, %v686
          %v987 = vmul.f32 %v687, %v687
          %v988 = vmul.f32 %v688, %v688
          %v989 = vmul.f32 %v689, %v689
          %v990 = vmul.f32 %v690, %v690
          %v991 = vmul.f32 %v691, %v691
          %v992 = vmul.f32 %v692, %v692
          %v993 = vmul.f32 %v693, %v693
          %v994 = vmul.f32 %v694, %v694
          %v995 = vmul.f32 %v695, %v695
          %v996 = vmul.f32 %v696, %v696
          %v997 = vmul.f32 %v697, %v697
          %v998 = vmul.f32 %v698, %v698
          %v999 = vmul.f32 %v699, %v699
          %v1000 = vmul.f32 %v700, %v700
          %v1001 = vmul.f32 %v701, %v701
          %v1002 = vmul.f32 %v702, %v702
          %v1003 = vmul.f32 %v703, %v703
          %v1004 = vmul.f32 %v704, %v704
          %v1005 = vmul.f32 %v705, %v705
          %v1006 = vmul.f32 %v706, %v706
          %v1007 = vmul.f32 %v707, %v707
          %v1008 = vmul.f32 %v708, %v708
          %v1009 = vmul.f32 %v709, %v709
          %v1010 = vmul.f32 %v710, %v710
          %v1011 = vmul.f32 %v711, %v711
          %v1012 = vmul.f32 %v712, %v712
          %v1013 = vmul.f32 %v713, %v713
          %v1014 = vmul.f32 %v714, %v714
          %v1015 = vmul.f32 %v715, %v715
          %v1016 = vmul.f32 %v716, %v716
          %v1017 = vmul.f32 %v717, %v717
          %v1018 = vmul.f32 %v718, %v718
          %v1019 = vmul.f32 %v719, %v719
          %v1020 = vmul.f32 %v720, %v720
          %v1021 = vmul.f32 %v721, %v721
          %v1022 = vmul.f32 %v722, %v722
          %v1023 = vmul.f32 %v723, %v723
          %v1024 = vmul.f32 %v724, %v724
          %v1025 = vmul.f32 %v725, %v725
          %v1026 = vmul.f32 %v726, %v726
          %v1027 = vmul.f32 %v727, %v727
          %v1028 = vmul.f32 %v728, %v728
          %v1029 = vmul.f32 %v729, %v729
          %v1030 = vmul.f32 %v730, %v730
          %v1031 = vmul.f32 %v731, %v731
          %v1032 = vmul.f32 %v732, %v732
          %v1033 = vmul.f32 %v733, %v733
          %v1034 = vmul.f32 %v734, %v734
          %v1035 = vmul.f32 %v735, %v735
          %v1036 = vmul.f32 %v736, %v736
          %v1037 = vmul.f32 %v737, %v737
          %v1038 = vmul.f32 %v738, %v738
          %v1039 = vmul.f32 %v739, %v739
          %v1040 = vmul.f32 %v740, %v740
          %v1041 = vmul.f32 %v741, %v741
          %v1042 = vmul.f32 %v742, %v742
          %v1043 = vmul.f32 %v743, %v743
          %v1044 = vmul.f32 %v744, %v744
          %v1045 = vmul.f32 %v745, %v745
          %v1046 = vmul.f32 %v746, %v746
          %v1047 = vmul.f32 %v747, %v747
          %v1048 = vmul.f32 %v748, %v748
          %v1049 = vmul.f32 %v749, %v749
          %v1050 = vmul.f32 %v750, %v750
          %v1051 = vmul.f32 %v751, %v751
          %v1052 = vmul.f32 %v752, %v752
          %v1053 = vmul.f32 %v753, %v753
          %v1054 = vmul.f32 %v754, %v754
          %v1055 = vmul.f32 %v755, %v755
          %v1056 = vmul.f32 %v756, %v756
          %v1057 = vmul.f32 %v757, %v757
          %v1058 = vmul.f32 %v758, %v758
          %v1059 = vmul.f32 %v759, %v759
          %v1060 = vmul.f32 %v760, %v760
          %v1061 = vmul.f32 %v761, %v761
          %v1062 = vmul.f32 %v762, %v762
          %v1063 = vmul.f32 %v763, %v763
          %v1064 = vmul.f32 %v764, %v764
          %v1065 = vmul.f32 %v765, %v765
          %v1066 = vmul.f32 %v766, %v766
          %v1067 = vmul.f32 %v767, %v767
          %v1068 = vmul.f32 %v768, %v768
          %v1069 = vmul.f32 %v769, %v769
          %v1070 = vld [vmem:[#allocation2] sm:$0xff]
          %v1071 = vadd.f32 %v770, %v771
          %v1072 = vadd.f32 %v1071, %v772
          %v1073 = vadd.f32 %v1072, %v773
          %v1074 = vadd.f32 %v1073, %v774
          %v1075 = vadd.f32 %v1074, %v775
          %v1076 = vadd.f32 %v1075, %v776
          %v1077 = vadd.f32 %v1076, %v777
          %v1078 = vadd.f32 %v1077, %v778
          %v1079 = vadd.f32 %v1078, %v779
          %v1080 = vadd.f32 %v1079, %v780
          %v1081 = vadd.f32 %v1080, %v781
          %v1082 = vadd.f32 %v1081, %v782
          %v1083 = vadd.f32 %v1082, %v783
          %v1084 = vadd.f32 %v1083, %v784
          %v1085 = vadd.f32 %v1084, %v785
          %v1086 = vadd.f32 %v1085, %v786
          %v1087 = vadd.f32 %v1086, %v787
          %v1088 = vadd.f32 %v1087, %v788
          %v1089 = vadd.f32 %v1088, %v789
          %v1090 = vadd.f32 %v1089, %v790
          %v1091 = vadd.f32 %v1090, %v791
          %v1092 = vadd.f32 %v1091, %v792
          %v1093 = vadd.f32 %v1092, %v793
          %v1094 = vadd.f32 %v1093, %v794
          %v1095 = vadd.f32 %v1094, %v795
          %v1096 = vadd.f32 %v1095, %v796
          %v1097 = vadd.f32 %v1096, %v797
          %v1098 = vadd.f32 %v1097, %v798
          %v1099 = vadd.f32 %v1098, %v799
          %v1100 = vadd.f32 %v1099, %v800
          %v1101 = vadd.f32 %v1100, %v801
          %v1102 = vadd.f32 %v1101, %v802
          %v1103 = vadd.f32 %v1102, %v803
          %v1104 = vadd.f32 %v1103, %v804
          %v1105 = vadd.f32 %v1104, %v805
          %v1106 = vadd.f32 %v1105, %v806
          %v1107 = vadd.f32 %v1106, %v807
          %v1108 = vadd.f32 %v1107, %v808
          %v1109 = vadd.f32 %v1108, %v809
          %v1110 = vadd.f32 %v1109, %v810
          %v1111 = vadd.f32 %v1110, %v811
          %v1112 = vadd.f32 %v1111, %v812
          %v1113 = vadd.f32 %v1112, %v813
          %v1114 = vadd.f32 %v1113, %v814
          %v1115 = vadd.f32 %v1114, %v815
          %v1116 = vadd.f32 %v1115, %v816
          %v1117 = vadd.f32 %v1116, %v817
          %v1118 = vadd.f32 %v1117, %v818
          %v1119 = vadd.f32 %v1118, %v819
          %v1120 = vadd.f32 %v1119, %v820
          %v1121 = vadd.f32 %v1120, %v821
          %v1122 = vadd.f32 %v1121, %v822
          %v1123 = vadd.f32 %v1122, %v823
          %v1124 = vadd.f32 %v1123, %v824
          %v1125 = vadd.f32 %v1124, %v825
          %v1126 = vadd.f32 %v1125, %v826
          %v1127 = vadd.f32 %v1126, %v827
          %v1128 = vadd.f32 %v1127, %v828
          %v1129 = vadd.f32 %v1128, %v829
          %v1130 = vadd.f32 %v1129, %v830
          %v1131 = vadd.f32 %v1130, %v831
          %v1132 = vadd.f32 %v1131, %v832
          %v1133 = vadd.f32 %v1132, %v833
          %v1134 = vadd.f32 %v1133, %v834
          %v1135 = vadd.f32 %v1134, %v835
          %v1136 = vadd.f32 %v1135, %v836
          %v1137 = vadd.f32 %v1136, %v837
          %v1138 = vadd.f32 %v1137, %v838
          %v1139 = vadd.f32 %v1138, %v839
          %v1140 = vadd.f32 %v1139, %v840
          %v1141 = vadd.f32 %v1140, %v841
          %v1142 = vadd.f32 %v1141, %v842
          %v1143 = vadd.f32 %v1142, %v843
          %v1144 = vadd.f32 %v1143, %v844
          %v1145 = vadd.f32 %v1144, %v845
          %v1146 = vadd.f32 %v1145, %v846
          %v1147 = vadd.f32 %v1146, %v847
          %v1148 = vadd.f32 %v1147, %v848
          %v1149 = vadd.f32 %v1148, %v849
          %v1150 = vadd.f32 %v1149, %v850
          %v1151 = vadd.f32 %v1150, %v851
          %v1152 = vadd.f32 %v1151, %v852
          %v1153 = vadd.f32 %v1152, %v853
          %v1154 = vadd.f32 %v1153, %v854
          %v1155 = vadd.f32 %v1154, %v855
          %v1156 = vadd.f32 %v1155, %v856
          %v1157 = vadd.f32 %v1156, %v857
          %v1158 = vadd.f32 %v1157, %v858
          %v1159 = vadd.f32 %v1158, %v859
          %v1160 = vadd.f32 %v1159, %v860
          %v1161 = vadd.f32 %v1160, %v861
          %v1162 = vadd.f32 %v1161, %v862
          %v1163 = vadd.f32 %v1162, %v863
          %v1164 = vadd.f32 %v1163, %v864
          %v1165 = vadd.f32 %v1164, %v865
          %v1166 = vadd.f32 %v1165, %v866
          %v1167 = vadd.f32 %v1166, %v867
          %v1168 = vadd.f32 %v1167, %v868
          %v1169 = vadd.f32 %v1168, %v869
          %v1170 = vadd.f32 %v1169, %v870
          %v1171 = vadd.f32 %v1170, %v871
          %v1172 = vadd.f32 %v1171, %v872
          %v1173 = vadd.f32 %v1172, %v873
          %v1174 = vadd.f32 %v1173, %v874
          %v1175 = vadd.f32 %v1174, %v875
          %v1176 = vadd.f32 %v1175, %v876
          %v1177 = vadd.f32 %v1176, %v877
          %v1178 = vadd.f32 %v1177, %v878
          %v1179 = vadd.f32 %v1178, %v879
          %v1180 = vadd.f32 %v1179, %v880
          %v1181 = vadd.f32 %v1180, %v881
          %v1182 = vadd.f32 %v1181, %v882
          %v1183 = vadd.f32 %v1182, %v883
          %v1184 = vadd.f32 %v1183, %v884
          %v1185 = vadd.f32 %v1184, %v885
          %v1186 = vadd.f32 %v1185, %v886
          %v1187 = vadd.f32 %v1186, %v887
          %v1188 = vadd.f32 %v1187, %v888
          %v1189 = vadd.f32 %v1188, %v889
          %v1190 = vadd.f32 %v1189, %v890
          %v1191 = vadd.f32 %v1190, %v891
          %v1192 = vadd.f32 %v1191, %v892
          %v1193 = vadd.f32 %v1192, %v893
          %v1194 = vadd.f32 %v1193, %v894
          %v1195 = vadd.f32 %v1194, %v895
          %v1196 = vadd.f32 %v1195, %v896
          %v1197 = vadd.f32 %v1196, %v897
          %v1198 = vadd.f32 %v1197, %v898
          %v1199 = vadd.f32 %v1198, %v899
          %v1200 = vadd.f32 %v1199, %v900
          %v1201 = vadd.f32 %v1200, %v901
          %v1202 = vadd.f32 %v1201, %v902
          %v1203 = vadd.f32 %v1202, %v903
          %v1204 = vadd.f32 %v1203, %v904
          %v1205 = vadd.f32 %v1204, %v905
          %v1206 = vadd.f32 %v1205, %v906
          %v1207 = vadd.f32 %v1206, %v907
          %v1208 = vadd.f32 %v1207, %v908
          %v1209 = vadd.f32 %v1208, %v909
          %v1210 = vadd.f32 %v1209, %v910
          %v1211 = vadd.f32 %v1210, %v911
          %v1212 = vadd.f32 %v1211, %v912
          %v1213 = vadd.f32 %v1212, %v913
          %v1214 = vadd.f32 %v1213, %v914
          %v1215 = vadd.f32 %v1214, %v915
          %v1216 = vadd.f32 %v1215, %v916
          %v1217 = vadd.f32 %v1216, %v917
          %v1218 = vadd.f32 %v1217, %v918
          %v1219 = vadd.f32 %v1218, %v919
          %v1220 = vadd.f32 %v1219, %v920
          %v1221 = vadd.f32 %v1220, %v921
          %v1222 = vadd.f32 %v1221, %v922
          %v1223 = vadd.f32 %v1222, %v923
          %v1224 = vadd.f32 %v1223, %v924
          %v1225 = vadd.f32 %v1224, %v925
          %v1226 = vadd.f32 %v1225, %v926
          %v1227 = vadd.f32 %v1226, %v927
          %v1228 = vadd.f32 %v1227, %v928
          %v1229 = vadd.f32 %v1228, %v929
          %v1230 = vadd.f32 %v1229, %v930
          %v1231 = vadd.f32 %v1230, %v931
          %v1232 = vadd.f32 %v1231, %v932
          %v1233 = vadd.f32 %v1232, %v933
          %v1234 = vadd.f32 %v1233, %v934
          %v1235 = vadd.f32 %v1234, %v935
          %v1236 = vadd.f32 %v1235, %v936
          %v1237 = vadd.f32 %v1236, %v937
          %v1238 = vadd.f32 %v1237, %v938
          %v1239 = vadd.f32 %v1238, %v939
          %v1240 = vadd.f32 %v1239, %v940
          %v1241 = vadd.f32 %v1240, %v941
          %v1242 = vadd.f32 %v1241, %v942
          %v1243 = vadd.f32 %v1242, %v943
          %v1244 = vadd.f32 %v1243, %v944
          %v1245 = vadd.f32 %v1244, %v945
          %v1246 = vadd.f32 %v1245, %v946
          %v1247 = vadd.f32 %v1246, %v947
          %v1248 = vadd.f32 %v1247, %v948
          %v1249 = vadd.f32 %v1248, %v949
          %v1250 = vadd.f32 %v1249, %v950
          %v1251 = vadd.f32 %v1250, %v951
          %v1252 = vadd.f32 %v1251, %v952
          %v1253 = vadd.f32 %v1252, %v953
          %v1254 = vadd.f32 %v1253, %v954
          %v1255 = vadd.f32 %v1254, %v955
          %v1256 = vadd.f32 %v1255, %v956
          %v1257 = vadd.f32 %v1256, %v957
          %v1258 = vadd.f32 %v1257, %v958
          %v1259 = vadd.f32 %v1258, %v959
          %v1260 = vadd.f32 %v1259, %v960
          %v1261 = vadd.f32 %v1260, %v961
          %v1262 = vadd.f32 %v1261, %v962
          %v1263 = vadd.f32 %v1262, %v963
          %v1264 = vadd.f32 %v1263, %v964
          %v1265 = vadd.f32 %v1264, %v965
          %v1266 = vadd.f32 %v1265, %v966
          %v1267 = vadd.f32 %v1266, %v967
          %v1268 = vadd.f32 %v1267, %v968
          %v1269 = vadd.f32 %v1268, %v969
          %v1270 = vadd.f32 %v1269, %v970
          %v1271 = vadd.f32 %v1270, %v971
          %v1272 = vadd.f32 %v1271, %v972
          %v1273 = vadd.f32 %v1272, %v973
          %v1274 = vadd.f32 %v1273, %v974
          %v1275 = vadd.f32 %v1274, %v975
          %v1276 = vadd.f32 %v1275, %v976
          %v1277 = vadd.f32 %v1276, %v977
          %v1278 = vadd.f32 %v1277, %v978
          %v1279 = vadd.f32 %v1278, %v979
          %v1280 = vadd.f32 %v1279, %v980
          %v1281 = vadd.f32 %v1280, %v981
          %v1282 = vadd.f32 %v1281, %v982
          %v1283 = vadd.f32 %v1282, %v983
          %v1284 = vadd.f32 %v1283, %v984
          %v1285 = vadd.f32 %v1284, %v985
          %v1286 = vadd.f32 %v1285, %v986
          %v1287 = vadd.f32 %v1286, %v987
          %v1288 = vadd.f32 %v1287, %v988
          %v1289 = vadd.f32 %v1288, %v989
          %v1290 = vadd.f32 %v1289, %v990
          %v1291 = vadd.f32 %v1290, %v991
          %v1292 = vadd.f32 %v1291, %v992
          %v1293 = vadd.f32 %v1292, %v993
          %v1294 = vadd.f32 %v1293, %v994
          %v1295 = vadd.f32 %v1294, %v995
          %v1296 = vadd.f32 %v1295, %v996
          %v1297 = vadd.f32 %v1296, %v997
          %v1298 = vadd.f32 %v1297, %v998
          %v1299 = vadd.f32 %v1298, %v999
          %v1300 = vadd.f32 %v1299, %v1000
          %v1301 = vadd.f32 %v1300, %v1001
          %v1302 = vadd.f32 %v1301, %v1002
          %v1303 = vadd.f32 %v1302, %v1003
          %v1304 = vadd.f32 %v1303, %v1004
          %v1305 = vadd.f32 %v1304, %v1005
          %v1306 = vadd.f32 %v1305, %v1006
          %v1307 = vadd.f32 %v1306, %v1007
          %v1308 = vadd.f32 %v1307, %v1008
          %v1309 = vadd.f32 %v1308, %v1009
          %v1310 = vadd.f32 %v1309, %v1010
          %v1311 = vadd.f32 %v1310, %v1011
          %v1312 = vadd.f32 %v1311, %v1012
          %v1313 = vadd.f32 %v1312, %v1013
          %v1314 = vadd.f32 %v1313, %v1014
          %v1315 = vadd.f32 %v1314, %v1015
          %v1316 = vadd.f32 %v1315, %v1016
          %v1317 = vadd.f32 %v1316, %v1017
          %v1318 = vadd.f32 %v1317, %v1018
          %v1319 = vadd.f32 %v1318, %v1019
          %v1320 = vadd.f32 %v1319, %v1020
          %v1321 = vadd.f32 %v1320, %v1021
          %v1322 = vadd.f32 %v1321, %v1022
          %v1323 = vadd.f32 %v1322, %v1023
          %v1324 = vadd.f32 %v1323, %v1024
          %v1325 = vadd.f32 %v1324, %v1025
          %v1326 = vadd.f32 %v1325, %v1026
          %v1327 = vadd.f32 %v1326, %v1027
          %v1328 = vadd.f32 %v1327, %v1028
          %v1329 = vadd.f32 %v1328, %v1029
          %v1330 = vadd.f32 %v1329, %v1030
          %v1331 = vadd.f32 %v1330, %v1031
          %v1332 = vadd.f32 %v1331, %v1032
          %v1333 = vadd.f32 %v1332, %v1033
          %v1334 = vadd.f32 %v1333, %v1034
          %v1335 = vadd.f32 %v1334, %v1035
          %v1336 = vadd.f32 %v1335, %v1036
          %v1337 = vadd.f32 %v1336, %v1037
          %v1338 = vadd.f32 %v1337, %v1038
          %v1339 = vadd.f32 %v1338, %v1039
          %v1340 = vadd.f32 %v1339, %v1040
          %v1341 = vadd.f32 %v1340, %v1041
          %v1342 = vadd.f32 %v1341, %v1042
          %v1343 = vadd.f32 %v1342, %v1043
          %v1344 = vadd.f32 %v1343, %v1044
          %v1345 = vadd.f32 %v1344, %v1045
          %v1346 = vadd.f32 %v1345, %v1046
          %v1347 = vadd.f32 %v1346, %v1047
          %v1348 = vadd.f32 %v1347, %v1048
          %v1349 = vadd.f32 %v1348, %v1049
          %v1350 = vadd.f32 %v1349, %v1050
          %v1351 = vadd.f32 %v1350, %v1051
          %v1352 = vadd.f32 %v1351, %v1052
          %v1353 = vadd.f32 %v1352, %v1053
          %v1354 = vadd.f32 %v1353, %v1054
          %v1355 = vadd.f32 %v1354, %v1055
          %v1356 = vadd.f32 %v1355, %v1056
          %v1357 = vadd.f32 %v1356, %v1057
          %v1358 = vadd.f32 %v1357, %v1058
          %v1359 = vadd.f32 %v1358, %v1059
          %v1360 = vadd.f32 %v1359, %v1060
          %v1361 = vadd.f32 %v1360, %v1061
          %v1362 = vadd.f32 %v1361, %v1062
          %v1363 = vadd.f32 %v1362, %v1063
          %v1364 = vadd.f32 %v1363, %v1064
          %v1365 = vadd.f32 %v1364, %v1065
          %v1366 = vadd.f32 %v1365, %v1066
          %v1367 = vadd.f32 %v1366, %v1067
          %v1368 = vadd.f32 %v1367, %v1068
          %v1369 = vadd.f32 %v1368, %v1069
          %v1370 = vadd.f32 %v1070, %v1369
          %1371 = vst [vmem:[#allocation2] sm:$0xff] %v1370
        $region36: #{tpu_custom_call.1} parent=23 // pred_fallthru
          _
        %p1372 = scmp.ge.s32.totalorder %s160, 1
        // Predicated region
        $region37: #{tpu_custom_call.1} parent=23 // pred_check
          %p1373 = pneg %p1372
        $region38: #{tpu_custom_call.1} parent=23 // pred_check_branch
          %1375 = sbr.rel (%p1373) target = $region40
        $region39: #{tpu_custom_call.1} parent=23 // pred_region
          %v1376 = vld [vmem:[%s137] sm:$0xf]
          %v1377 = vld [vmem:[%s137 + $0x4] sm:$0xf]
          %v1378 = vld [vmem:[%s137 + $0x8] sm:$0xf]
          %v1379 = vld [vmem:[%s137 + $0xc] sm:$0xf]
          %v1380 = vld [vmem:[%s137 + $0x10] sm:$0xf]
          %v1381 = vld [vmem:[%s137 + $0x14] sm:$0xf]
          %v1382 = vld [vmem:[%s137 + $0x18] sm:$0xf]
          %v1383 = vld [vmem:[%s137 + $0x1c] sm:$0xf]
          %v1384 = vld [vmem:[%s137 + $0x20] sm:$0xf]
          %v1385 = vld [vmem:[%s137 + $0x24] sm:$0xf]
          %v1386 = vld [vmem:[%s137 + $0x28] sm:$0xf]
          %v1387 = vld [vmem:[%s137 + $0x2c] sm:$0xf]
          %v1388 = vld [vmem:[%s137 + $0x30] sm:$0xf]
          %v1389 = vld [vmem:[%s137 + $0x34] sm:$0xf]
          %v1390 = vld [vmem:[%s137 + $0x38] sm:$0xf]
          %v1391 = vld [vmem:[%s137 + $0x3c] sm:$0xf]
          %v1392 = vld [vmem:[%s137 + $0x40] sm:$0xf]
          %v1393 = vld [vmem:[%s137 + $0x44] sm:$0xf]
          %v1394 = vld [vmem:[%s137 + $0x48] sm:$0xf]
          %v1395 = vld [vmem:[%s137 + $0x4c] sm:$0xf]
          %v1396 = vld [vmem:[%s137 + $0x50] sm:$0xf]
          %v1397 = vld [vmem:[%s137 + $0x54] sm:$0xf]
          %v1398 = vld [vmem:[%s137 + $0x58] sm:$0xf]
          %v1399 = vld [vmem:[%s137 + $0x5c] sm:$0xf]
          %v1400 = vld [vmem:[%s137 + $0x60] sm:$0xf]
          %v1401 = vld [vmem:[%s137 + $0x64] sm:$0xf]
          %v1402 = vld [vmem:[%s137 + $0x68] sm:$0xf]
          %v1403 = vld [vmem:[%s137 + $0x6c] sm:$0xf]
          %v1404 = vld [vmem:[%s137 + $0x70] sm:$0xf]
          %v1405 = vld [vmem:[%s137 + $0x74] sm:$0xf]
          %v1406 = vld [vmem:[%s137 + $0x78] sm:$0xf]
          %v1407 = vld [vmem:[%s137 + $0x7c] sm:$0xf]
          %v1408 = vld [vmem:[%s137 + $0x80] sm:$0xf]
          %v1409 = vld [vmem:[%s137 + $0x84] sm:$0xf]
          %v1410 = vld [vmem:[%s137 + $0x88] sm:$0xf]
          %v1411 = vld [vmem:[%s137 + $0x8c] sm:$0xf]
          %v1412 = vld [vmem:[%s137 + $0x90] sm:$0xf]
          %v1413 = vld [vmem:[%s137 + $0x94] sm:$0xf]
          %v1414 = vld [vmem:[%s137 + $0x98] sm:$0xf]
          %v1415 = vld [vmem:[%s137 + $0x9c] sm:$0xf]
          %v1416 = vld [vmem:[%s137 + $0xa0] sm:$0xf]
          %v1417 = vld [vmem:[%s137 + $0xa4] sm:$0xf]
          %v1418 = vld [vmem:[%s137 + $0xa8] sm:$0xf]
          %v1419 = vld [vmem:[%s137 + $0xac] sm:$0xf]
          %v1420 = vld [vmem:[%s137 + $0xb0] sm:$0xf]
          %v1421 = vld [vmem:[%s137 + $0xb4] sm:$0xf]
          %v1422 = vld [vmem:[%s137 + $0xb8] sm:$0xf]
          %v1423 = vld [vmem:[%s137 + $0xbc] sm:$0xf]
          %v1424 = vld [vmem:[%s137 + $0xc0] sm:$0xf]
          %v1425 = vld [vmem:[%s137 + $0xc4] sm:$0xf]
          %v1426 = vld [vmem:[%s137 + $0xc8] sm:$0xf]
          %v1427 = vld [vmem:[%s137 + $0xcc] sm:$0xf]
          %v1428 = vld [vmem:[%s137 + $0xd0] sm:$0xf]
          %v1429 = vld [vmem:[%s137 + $0xd4] sm:$0xf]
          %v1430 = vld [vmem:[%s137 + $0xd8] sm:$0xf]
          %v1431 = vld [vmem:[%s137 + $0xdc] sm:$0xf]
          %v1432 = vld [vmem:[%s137 + $0xe0] sm:$0xf]
          %v1433 = vld [vmem:[%s137 + $0xe4] sm:$0xf]
          %v1434 = vld [vmem:[%s137 + $0xe8] sm:$0xf]
          %v1435 = vld [vmem:[%s137 + $0xec] sm:$0xf]
          %v1436 = vld [vmem:[%s137 + $0xf0] sm:$0xf]
          %v1437 = vld [vmem:[%s137 + $0xf4] sm:$0xf]
          %v1438 = vld [vmem:[%s137 + $0xf8] sm:$0xf]
          %v1439 = vld [vmem:[%s137 + $0xfc] sm:$0xf]
          %v1440 = vld [vmem:[%s137 + $0x100] sm:$0xf]
          %v1441 = vld [vmem:[%s137 + $0x104] sm:$0xf]
          %v1442 = vld [vmem:[%s137 + $0x108] sm:$0xf]
          %v1443 = vld [vmem:[%s137 + $0x10c] sm:$0xf]
          %v1444 = vld [vmem:[%s137 + $0x110] sm:$0xf]
          %v1445 = vld [vmem:[%s137 + $0x114] sm:$0xf]
          %v1446 = vld [vmem:[%s137 + $0x118] sm:$0xf]
          %v1447 = vld [vmem:[%s137 + $0x11c] sm:$0xf]
          %v1448 = vld [vmem:[%s137 + $0x120] sm:$0xf]
          %v1449 = vld [vmem:[%s137 + $0x124] sm:$0xf]
          %v1450 = vld [vmem:[%s137 + $0x128] sm:$0xf]
          %v1451 = vld [vmem:[%s137 + $0x12c] sm:$0xf]
          %v1452 = vld [vmem:[%s137 + $0x130] sm:$0xf]
          %v1453 = vld [vmem:[%s137 + $0x134] sm:$0xf]
          %v1454 = vld [vmem:[%s137 + $0x138] sm:$0xf]
          %v1455 = vld [vmem:[%s137 + $0x13c] sm:$0xf]
          %v1456 = vld [vmem:[%s137 + $0x140] sm:$0xf]
          %v1457 = vld [vmem:[%s137 + $0x144] sm:$0xf]
          %v1458 = vld [vmem:[%s137 + $0x148] sm:$0xf]
          %v1459 = vld [vmem:[%s137 + $0x14c] sm:$0xf]
          %v1460 = vld [vmem:[%s137 + $0x150] sm:$0xf]
          %v1461 = vld [vmem:[%s137 + $0x154] sm:$0xf]
          %v1462 = vld [vmem:[%s137 + $0x158] sm:$0xf]
          %v1463 = vld [vmem:[%s137 + $0x15c] sm:$0xf]
          %v1464 = vld [vmem:[%s137 + $0x160] sm:$0xf]
          %v1465 = vld [vmem:[%s137 + $0x164] sm:$0xf]
          %v1466 = vld [vmem:[%s137 + $0x168] sm:$0xf]
          %v1467 = vld [vmem:[%s137 + $0x16c] sm:$0xf]
          %v1468 = vld [vmem:[%s137 + $0x170] sm:$0xf]
          %v1469 = vld [vmem:[%s137 + $0x174] sm:$0xf]
          %v1470 = vld [vmem:[%s137 + $0x178] sm:$0xf]
          %v1471 = vld [vmem:[%s137 + $0x17c] sm:$0xf]
          %v1472 = vld [vmem:[%s137 + $0x180] sm:$0xf]
          %v1473 = vld [vmem:[%s137 + $0x184] sm:$0xf]
          %v1474 = vld [vmem:[%s137 + $0x188] sm:$0xf]
          %v1475 = vld [vmem:[%s137 + $0x18c] sm:$0xf]
          %v1476 = vld [vmem:[%s137 + $0x190] sm:$0xf]
          %v1477 = vld [vmem:[%s137 + $0x194] sm:$0xf]
          %v1478 = vld [vmem:[%s137 + $0x198] sm:$0xf]
          %v1479 = vld [vmem:[%s137 + $0x19c] sm:$0xf]
          %v1480 = vld [vmem:[%s137 + $0x1a0] sm:$0xf]
          %v1481 = vld [vmem:[%s137 + $0x1a4] sm:$0xf]
          %v1482 = vld [vmem:[%s137 + $0x1a8] sm:$0xf]
          %v1483 = vld [vmem:[%s137 + $0x1ac] sm:$0xf]
          %v1484 = vld [vmem:[%s137 + $0x1b0] sm:$0xf]
          %v1485 = vld [vmem:[%s137 + $0x1b4] sm:$0xf]
          %v1486 = vld [vmem:[%s137 + $0x1b8] sm:$0xf]
          %v1487 = vld [vmem:[%s137 + $0x1bc] sm:$0xf]
          %v1488 = vld [vmem:[%s137 + $0x1c0] sm:$0xf]
          %v1489 = vld [vmem:[%s137 + $0x1c4] sm:$0xf]
          %v1490 = vld [vmem:[%s137 + $0x1c8] sm:$0xf]
          %v1491 = vld [vmem:[%s137 + $0x1cc] sm:$0xf]
          %v1492 = vld [vmem:[%s137 + $0x1d0] sm:$0xf]
          %v1493 = vld [vmem:[%s137 + $0x1d4] sm:$0xf]
          %v1494 = vld [vmem:[%s137 + $0x1d8] sm:$0xf]
          %v1495 = vld [vmem:[%s137 + $0x1dc] sm:$0xf]
          %v1496 = vld [vmem:[%s137 + $0x1e0] sm:$0xf]
          %v1497 = vld [vmem:[%s137 + $0x1e4] sm:$0xf]
          %v1498 = vld [vmem:[%s137 + $0x1e8] sm:$0xf]
          %v1499 = vld [vmem:[%s137 + $0x1ec] sm:$0xf]
          %v1500 = vld [vmem:[%s137 + $0x1f0] sm:$0xf]
          %v1501 = vld [vmem:[%s137 + $0x1f4] sm:$0xf]
          %v1502 = vld [vmem:[%s137 + $0x1f8] sm:$0xf]
          %v1503 = vld [vmem:[%s137 + $0x1fc] sm:$0xf]
          %v1504 = vld [vmem:[%s137 + $0x200] sm:$0xf]
          %v1505 = vld [vmem:[%s137 + $0x204] sm:$0xf]
          %v1506 = vld [vmem:[%s137 + $0x208] sm:$0xf]
          %v1507 = vld [vmem:[%s137 + $0x20c] sm:$0xf]
          %v1508 = vld [vmem:[%s137 + $0x210] sm:$0xf]
          %v1509 = vld [vmem:[%s137 + $0x214] sm:$0xf]
          %v1510 = vld [vmem:[%s137 + $0x218] sm:$0xf]
          %v1511 = vld [vmem:[%s137 + $0x21c] sm:$0xf]
          %v1512 = vld [vmem:[%s137 + $0x220] sm:$0xf]
          %v1513 = vld [vmem:[%s137 + $0x224] sm:$0xf]
          %v1514 = vld [vmem:[%s137 + $0x228] sm:$0xf]
          %v1515 = vld [vmem:[%s137 + $0x22c] sm:$0xf]
          %v1516 = vld [vmem:[%s137 + $0x230] sm:$0xf]
          %v1517 = vld [vmem:[%s137 + $0x234] sm:$0xf]
          %v1518 = vld [vmem:[%s137 + $0x238] sm:$0xf]
          %v1519 = vld [vmem:[%s137 + $0x23c] sm:$0xf]
          %v1520 = vld [vmem:[%s137 + $0x240] sm:$0xf]
          %v1521 = vld [vmem:[%s137 + $0x244] sm:$0xf]
          %v1522 = vld [vmem:[%s137 + $0x248] sm:$0xf]
          %v1523 = vld [vmem:[%s137 + $0x24c] sm:$0xf]
          %v1524 = vld [vmem:[%s137 + $0x250] sm:$0xf]
          %v1525 = vld [vmem:[%s137 + $0x254] sm:$0xf]
          %v1526 = vld [vmem:[%s137 + $0x258] sm:$0xf]
          %v1527 = vld [vmem:[%s137 + $0x25c] sm:$0xf]
          %v1528 = vld [vmem:[%s137 + $0x260] sm:$0xf]
          %v1529 = vld [vmem:[%s137 + $0x264] sm:$0xf]
          %v1530 = vld [vmem:[%s137 + $0x268] sm:$0xf]
          %v1531 = vld [vmem:[%s137 + $0x26c] sm:$0xf]
          %v1532 = vld [vmem:[%s137 + $0x270] sm:$0xf]
          %v1533 = vld [vmem:[%s137 + $0x274] sm:$0xf]
          %v1534 = vld [vmem:[%s137 + $0x278] sm:$0xf]
          %v1535 = vld [vmem:[%s137 + $0x27c] sm:$0xf]
          %v1536 = vld [vmem:[%s137 + $0x280] sm:$0xf]
          %v1537 = vld [vmem:[%s137 + $0x284] sm:$0xf]
          %v1538 = vld [vmem:[%s137 + $0x288] sm:$0xf]
          %v1539 = vld [vmem:[%s137 + $0x28c] sm:$0xf]
          %v1540 = vld [vmem:[%s137 + $0x290] sm:$0xf]
          %v1541 = vld [vmem:[%s137 + $0x294] sm:$0xf]
          %v1542 = vld [vmem:[%s137 + $0x298] sm:$0xf]
          %v1543 = vld [vmem:[%s137 + $0x29c] sm:$0xf]
          %v1544 = vld [vmem:[%s137 + $0x2a0] sm:$0xf]
          %v1545 = vld [vmem:[%s137 + $0x2a4] sm:$0xf]
          %v1546 = vld [vmem:[%s137 + $0x2a8] sm:$0xf]
          %v1547 = vld [vmem:[%s137 + $0x2ac] sm:$0xf]
          %v1548 = vld [vmem:[%s137 + $0x2b0] sm:$0xf]
          %v1549 = vld [vmem:[%s137 + $0x2b4] sm:$0xf]
          %v1550 = vld [vmem:[%s137 + $0x2b8] sm:$0xf]
          %v1551 = vld [vmem:[%s137 + $0x2bc] sm:$0xf]
          %v1552 = vld [vmem:[%s137 + $0x2c0] sm:$0xf]
          %v1553 = vld [vmem:[%s137 + $0x2c4] sm:$0xf]
          %v1554 = vld [vmem:[%s137 + $0x2c8] sm:$0xf]
          %v1555 = vld [vmem:[%s137 + $0x2cc] sm:$0xf]
          %v1556 = vld [vmem:[%s137 + $0x2d0] sm:$0xf]
          %v1557 = vld [vmem:[%s137 + $0x2d4] sm:$0xf]
          %v1558 = vld [vmem:[%s137 + $0x2d8] sm:$0xf]
          %v1559 = vld [vmem:[%s137 + $0x2dc] sm:$0xf]
          %v1560 = vld [vmem:[%s137 + $0x2e0] sm:$0xf]
          %v1561 = vld [vmem:[%s137 + $0x2e4] sm:$0xf]
          %v1562 = vld [vmem:[%s137 + $0x2e8] sm:$0xf]
          %v1563 = vld [vmem:[%s137 + $0x2ec] sm:$0xf]
          %v1564 = vld [vmem:[%s137 + $0x2f0] sm:$0xf]
          %v1565 = vld [vmem:[%s137 + $0x2f4] sm:$0xf]
          %v1566 = vld [vmem:[%s137 + $0x2f8] sm:$0xf]
          %v1567 = vld [vmem:[%s137 + $0x2fc] sm:$0xf]
          %v1568 = vld [vmem:[%s137 + $0x300] sm:$0xf]
          %v1569 = vld [vmem:[%s137 + $0x304] sm:$0xf]
          %v1570 = vld [vmem:[%s137 + $0x308] sm:$0xf]
          %v1571 = vld [vmem:[%s137 + $0x30c] sm:$0xf]
          %v1572 = vld [vmem:[%s137 + $0x310] sm:$0xf]
          %v1573 = vld [vmem:[%s137 + $0x314] sm:$0xf]
          %v1574 = vld [vmem:[%s137 + $0x318] sm:$0xf]
          %v1575 = vld [vmem:[%s137 + $0x31c] sm:$0xf]
          %v1576 = vld [vmem:[%s137 + $0x320] sm:$0xf]
          %v1577 = vld [vmem:[%s137 + $0x324] sm:$0xf]
          %v1578 = vld [vmem:[%s137 + $0x328] sm:$0xf]
          %v1579 = vld [vmem:[%s137 + $0x32c] sm:$0xf]
          %v1580 = vld [vmem:[%s137 + $0x330] sm:$0xf]
          %v1581 = vld [vmem:[%s137 + $0x334] sm:$0xf]
          %v1582 = vld [vmem:[%s137 + $0x338] sm:$0xf]
          %v1583 = vld [vmem:[%s137 + $0x33c] sm:$0xf]
          %v1584 = vld [vmem:[%s137 + $0x340] sm:$0xf]
          %v1585 = vld [vmem:[%s137 + $0x344] sm:$0xf]
          %v1586 = vld [vmem:[%s137 + $0x348] sm:$0xf]
          %v1587 = vld [vmem:[%s137 + $0x34c] sm:$0xf]
          %v1588 = vld [vmem:[%s137 + $0x350] sm:$0xf]
          %v1589 = vld [vmem:[%s137 + $0x354] sm:$0xf]
          %v1590 = vld [vmem:[%s137 + $0x358] sm:$0xf]
          %v1591 = vld [vmem:[%s137 + $0x35c] sm:$0xf]
          %v1592 = vld [vmem:[%s137 + $0x360] sm:$0xf]
          %v1593 = vld [vmem:[%s137 + $0x364] sm:$0xf]
          %v1594 = vld [vmem:[%s137 + $0x368] sm:$0xf]
          %v1595 = vld [vmem:[%s137 + $0x36c] sm:$0xf]
          %v1596 = vld [vmem:[%s137 + $0x370] sm:$0xf]
          %v1597 = vld [vmem:[%s137 + $0x374] sm:$0xf]
          %v1598 = vld [vmem:[%s137 + $0x378] sm:$0xf]
          %v1599 = vld [vmem:[%s137 + $0x37c] sm:$0xf]
          %v1600 = vld [vmem:[%s137 + $0x380] sm:$0xf]
          %v1601 = vld [vmem:[%s137 + $0x384] sm:$0xf]
          %v1602 = vld [vmem:[%s137 + $0x388] sm:$0xf]
          %v1603 = vld [vmem:[%s137 + $0x38c] sm:$0xf]
          %v1604 = vld [vmem:[%s137 + $0x390] sm:$0xf]
          %v1605 = vld [vmem:[%s137 + $0x394] sm:$0xf]
          %v1606 = vld [vmem:[%s137 + $0x398] sm:$0xf]
          %v1607 = vld [vmem:[%s137 + $0x39c] sm:$0xf]
          %v1608 = vld [vmem:[%s137 + $0x3a0] sm:$0xf]
          %v1609 = vld [vmem:[%s137 + $0x3a4] sm:$0xf]
          %v1610 = vld [vmem:[%s137 + $0x3a8] sm:$0xf]
          %v1611 = vld [vmem:[%s137 + $0x3ac] sm:$0xf]
          %v1612 = vld [vmem:[%s137 + $0x3b0] sm:$0xf]
          %v1613 = vld [vmem:[%s137 + $0x3b4] sm:$0xf]
          %v1614 = vld [vmem:[%s137 + $0x3b8] sm:$0xf]
          %v1615 = vld [vmem:[%s137 + $0x3bc] sm:$0xf]
          %v1616 = vld [vmem:[%s137 + $0x3c0] sm:$0xf]
          %v1617 = vld [vmem:[%s137 + $0x3c4] sm:$0xf]
          %v1618 = vld [vmem:[%s137 + $0x3c8] sm:$0xf]
          %v1619 = vld [vmem:[%s137 + $0x3cc] sm:$0xf]
          %v1620 = vld [vmem:[%s137 + $0x3d0] sm:$0xf]
          %v1621 = vld [vmem:[%s137 + $0x3d4] sm:$0xf]
          %v1622 = vld [vmem:[%s137 + $0x3d8] sm:$0xf]
          %v1623 = vld [vmem:[%s137 + $0x3dc] sm:$0xf]
          %v1624 = vld [vmem:[%s137 + $0x3e0] sm:$0xf]
          %v1625 = vld [vmem:[%s137 + $0x3e4] sm:$0xf]
          %v1626 = vld [vmem:[%s137 + $0x3e8] sm:$0xf]
          %v1627 = vld [vmem:[%s137 + $0x3ec] sm:$0xf]
          %v1628 = vld [vmem:[%s137 + $0x3f0] sm:$0xf]
          %v1629 = vld [vmem:[%s137 + $0x3f4] sm:$0xf]
          %v1630 = vld [vmem:[%s137 + $0x3f8] sm:$0xf]
          %v1631 = vld [vmem:[%s137 + $0x3fc] sm:$0xf]
          %v1632 = vld [vmem:[%s137 + $0x400] sm:$0xf]
          %v1633 = vld [vmem:[%s137 + $0x404] sm:$0xf]
          %v1634 = vld [vmem:[%s137 + $0x408] sm:$0xf]
          %v1635 = vld [vmem:[%s137 + $0x40c] sm:$0xf]
          %v1636 = vld [vmem:[%s137 + $0x410] sm:$0xf]
          %v1637 = vld [vmem:[%s137 + $0x414] sm:$0xf]
          %v1638 = vld [vmem:[%s137 + $0x418] sm:$0xf]
          %v1639 = vld [vmem:[%s137 + $0x41c] sm:$0xf]
          %v1640 = vld [vmem:[%s137 + $0x420] sm:$0xf]
          %v1641 = vld [vmem:[%s137 + $0x424] sm:$0xf]
          %v1642 = vld [vmem:[%s137 + $0x428] sm:$0xf]
          %v1643 = vld [vmem:[%s137 + $0x42c] sm:$0xf]
          %v1644 = vld [vmem:[%s137 + $0x430] sm:$0xf]
          %v1645 = vld [vmem:[%s137 + $0x434] sm:$0xf]
          %v1646 = vld [vmem:[%s137 + $0x438] sm:$0xf]
          %v1647 = vld [vmem:[%s137 + $0x43c] sm:$0xf]
          %v1648 = vld [vmem:[%s137 + $0x440] sm:$0xf]
          %v1649 = vld [vmem:[%s137 + $0x444] sm:$0xf]
          %v1650 = vld [vmem:[%s137 + $0x448] sm:$0xf]
          %v1651 = vld [vmem:[%s137 + $0x44c] sm:$0xf]
          %v1652 = vld [vmem:[%s137 + $0x450] sm:$0xf]
          %v1653 = vld [vmem:[%s137 + $0x454] sm:$0xf]
          %v1654 = vld [vmem:[%s137 + $0x458] sm:$0xf]
          %v1655 = vld [vmem:[%s137 + $0x45c] sm:$0xf]
          %v1656 = vld [vmem:[%s137 + $0x460] sm:$0xf]
          %v1657 = vld [vmem:[%s137 + $0x464] sm:$0xf]
          %v1658 = vld [vmem:[%s137 + $0x468] sm:$0xf]
          %v1659 = vld [vmem:[%s137 + $0x46c] sm:$0xf]
          %v1660 = vld [vmem:[%s137 + $0x470] sm:$0xf]
          %v1661 = vld [vmem:[%s137 + $0x474] sm:$0xf]
          %v1662 = vld [vmem:[%s137 + $0x478] sm:$0xf]
          %v1663 = vld [vmem:[%s137 + $0x47c] sm:$0xf]
          %v1664 = vld [vmem:[%s137 + $0x480] sm:$0xf]
          %v1665 = vld [vmem:[%s137 + $0x484] sm:$0xf]
          %v1666 = vld [vmem:[%s137 + $0x488] sm:$0xf]
          %v1667 = vld [vmem:[%s137 + $0x48c] sm:$0xf]
          %v1668 = vld [vmem:[%s137 + $0x490] sm:$0xf]
          %v1669 = vld [vmem:[%s137 + $0x494] sm:$0xf]
          %v1670 = vld [vmem:[%s137 + $0x498] sm:$0xf]
          %v1671 = vld [vmem:[%s137 + $0x49c] sm:$0xf]
          %v1672 = vld [vmem:[%s137 + $0x4a0] sm:$0xf]
          %v1673 = vld [vmem:[%s137 + $0x4a4] sm:$0xf]
          %v1674 = vld [vmem:[%s137 + $0x4a8] sm:$0xf]
          %v1675 = vld [vmem:[%s137 + $0x4ac] sm:$0xf]
          %v1676 = vunpack.c.l.bf16 %v1376
          %v1677 = vunpack.c.l.bf16 %v1377
          %v1678 = vunpack.c.l.bf16 %v1378
          %v1679 = vunpack.c.l.bf16 %v1379
          %v1680 = vunpack.c.l.bf16 %v1380
          %v1681 = vunpack.c.l.bf16 %v1381
          %v1682 = vunpack.c.l.bf16 %v1382
          %v1683 = vunpack.c.l.bf16 %v1383
          %v1684 = vunpack.c.l.bf16 %v1384
          %v1685 = vunpack.c.l.bf16 %v1385
          %v1686 = vunpack.c.l.bf16 %v1386
          %v1687 = vunpack.c.l.bf16 %v1387
          %v1688 = vunpack.c.l.bf16 %v1388
          %v1689 = vunpack.c.l.bf16 %v1389
          %v1690 = vunpack.c.l.bf16 %v1390
          %v1691 = vunpack.c.l.bf16 %v1391
          %v1692 = vunpack.c.l.bf16 %v1392
          %v1693 = vunpack.c.l.bf16 %v1393
          %v1694 = vunpack.c.l.bf16 %v1394
          %v1695 = vunpack.c.l.bf16 %v1395
          %v1696 = vunpack.c.l.bf16 %v1396
          %v1697 = vunpack.c.l.bf16 %v1397
          %v1698 = vunpack.c.l.bf16 %v1398
          %v1699 = vunpack.c.l.bf16 %v1399
          %v1700 = vunpack.c.l.bf16 %v1400
          %v1701 = vunpack.c.l.bf16 %v1401
          %v1702 = vunpack.c.l.bf16 %v1402
          %v1703 = vunpack.c.l.bf16 %v1403
          %v1704 = vunpack.c.l.bf16 %v1404
          %v1705 = vunpack.c.l.bf16 %v1405
          %v1706 = vunpack.c.l.bf16 %v1406
          %v1707 = vunpack.c.l.bf16 %v1407
          %v1708 = vunpack.c.l.bf16 %v1408
          %v1709 = vunpack.c.l.bf16 %v1409
          %v1710 = vunpack.c.l.bf16 %v1410
          %v1711 = vunpack.c.l.bf16 %v1411
          %v1712 = vunpack.c.l.bf16 %v1412
          %v1713 = vunpack.c.l.bf16 %v1413
          %v1714 = vunpack.c.l.bf16 %v1414
          %v1715 = vunpack.c.l.bf16 %v1415
          %v1716 = vunpack.c.l.bf16 %v1416
          %v1717 = vunpack.c.l.bf16 %v1417
          %v1718 = vunpack.c.l.bf16 %v1418
          %v1719 = vunpack.c.l.bf16 %v1419
          %v1720 = vunpack.c.l.bf16 %v1420
          %v1721 = vunpack.c.l.bf16 %v1421
          %v1722 = vunpack.c.l.bf16 %v1422
          %v1723 = vunpack.c.l.bf16 %v1423
          %v1724 = vunpack.c.l.bf16 %v1424
          %v1725 = vunpack.c.l.bf16 %v1425
          %v1726 = vunpack.c.l.bf16 %v1426
          %v1727 = vunpack.c.l.bf16 %v1427
          %v1728 = vunpack.c.l.bf16 %v1428
          %v1729 = vunpack.c.l.bf16 %v1429
          %v1730 = vunpack.c.l.bf16 %v1430
          %v1731 = vunpack.c.l.bf16 %v1431
          %v1732 = vunpack.c.l.bf16 %v1432
          %v1733 = vunpack.c.l.bf16 %v1433
          %v1734 = vunpack.c.l.bf16 %v1434
          %v1735 = vunpack.c.l.bf16 %v1435
          %v1736 = vunpack.c.l.bf16 %v1436
          %v1737 = vunpack.c.l.bf16 %v1437
          %v1738 = vunpack.c.l.bf16 %v1438
          %v1739 = vunpack.c.l.bf16 %v1439
          %v1740 = vunpack.c.l.bf16 %v1440
          %v1741 = vunpack.c.l.bf16 %v1441
          %v1742 = vunpack.c.l.bf16 %v1442
          %v1743 = vunpack.c.l.bf16 %v1443
          %v1744 = vunpack.c.l.bf16 %v1444
          %v1745 = vunpack.c.l.bf16 %v1445
          %v1746 = vunpack.c.l.bf16 %v1446
          %v1747 = vunpack.c.l.bf16 %v1447
          %v1748 = vunpack.c.l.bf16 %v1448
          %v1749 = vunpack.c.l.bf16 %v1449
          %v1750 = vunpack.c.l.bf16 %v1450
          %v1751 = vunpack.c.l.bf16 %v1451
          %v1752 = vunpack.c.l.bf16 %v1452
          %v1753 = vunpack.c.l.bf16 %v1453
          %v1754 = vunpack.c.l.bf16 %v1454
          %v1755 = vunpack.c.l.bf16 %v1455
          %v1756 = vunpack.c.l.bf16 %v1456
          %v1757 = vunpack.c.l.bf16 %v1457
          %v1758 = vunpack.c.l.bf16 %v1458
          %v1759 = vunpack.c.l.bf16 %v1459
          %v1760 = vunpack.c.l.bf16 %v1460
          %v1761 = vunpack.c.l.bf16 %v1461
          %v1762 = vunpack.c.l.bf16 %v1462
          %v1763 = vunpack.c.l.bf16 %v1463
          %v1764 = vunpack.c.l.bf16 %v1464
          %v1765 = vunpack.c.l.bf16 %v1465
          %v1766 = vunpack.c.l.bf16 %v1466
          %v1767 = vunpack.c.l.bf16 %v1467
          %v1768 = vunpack.c.l.bf16 %v1468
          %v1769 = vunpack.c.l.bf16 %v1469
          %v1770 = vunpack.c.l.bf16 %v1470
          %v1771 = vunpack.c.l.bf16 %v1471
          %v1772 = vunpack.c.l.bf16 %v1472
          %v1773 = vunpack.c.l.bf16 %v1473
          %v1774 = vunpack.c.l.bf16 %v1474
          %v1775 = vunpack.c.l.bf16 %v1475
          %v1776 = vunpack.c.l.bf16 %v1476
          %v1777 = vunpack.c.l.bf16 %v1477
          %v1778 = vunpack.c.l.bf16 %v1478
          %v1779 = vunpack.c.l.bf16 %v1479
          %v1780 = vunpack.c.l.bf16 %v1480
          %v1781 = vunpack.c.l.bf16 %v1481
          %v1782 = vunpack.c.l.bf16 %v1482
          %v1783 = vunpack.c.l.bf16 %v1483
          %v1784 = vunpack.c.l.bf16 %v1484
          %v1785 = vunpack.c.l.bf16 %v1485
          %v1786 = vunpack.c.l.bf16 %v1486
          %v1787 = vunpack.c.l.bf16 %v1487
          %v1788 = vunpack.c.l.bf16 %v1488
          %v1789 = vunpack.c.l.bf16 %v1489
          %v1790 = vunpack.c.l.bf16 %v1490
          %v1791 = vunpack.c.l.bf16 %v1491
          %v1792 = vunpack.c.l.bf16 %v1492
          %v1793 = vunpack.c.l.bf16 %v1493
          %v1794 = vunpack.c.l.bf16 %v1494
          %v1795 = vunpack.c.l.bf16 %v1495
          %v1796 = vunpack.c.l.bf16 %v1496
          %v1797 = vunpack.c.l.bf16 %v1497
          %v1798 = vunpack.c.l.bf16 %v1498
          %v1799 = vunpack.c.l.bf16 %v1499
          %v1800 = vunpack.c.l.bf16 %v1500
          %v1801 = vunpack.c.l.bf16 %v1501
          %v1802 = vunpack.c.l.bf16 %v1502
          %v1803 = vunpack.c.l.bf16 %v1503
          %v1804 = vunpack.c.l.bf16 %v1504
          %v1805 = vunpack.c.l.bf16 %v1505
          %v1806 = vunpack.c.l.bf16 %v1506
          %v1807 = vunpack.c.l.bf16 %v1507
          %v1808 = vunpack.c.l.bf16 %v1508
          %v1809 = vunpack.c.l.bf16 %v1509
          %v1810 = vunpack.c.l.bf16 %v1510
          %v1811 = vunpack.c.l.bf16 %v1511
          %v1812 = vunpack.c.l.bf16 %v1512
          %v1813 = vunpack.c.l.bf16 %v1513
          %v1814 = vunpack.c.l.bf16 %v1514
          %v1815 = vunpack.c.l.bf16 %v1515
          %v1816 = vunpack.c.l.bf16 %v1516
          %v1817 = vunpack.c.l.bf16 %v1517
          %v1818 = vunpack.c.l.bf16 %v1518
          %v1819 = vunpack.c.l.bf16 %v1519
          %v1820 = vunpack.c.l.bf16 %v1520
          %v1821 = vunpack.c.l.bf16 %v1521
          %v1822 = vunpack.c.l.bf16 %v1522
          %v1823 = vunpack.c.l.bf16 %v1523
          %v1824 = vunpack.c.l.bf16 %v1524
          %v1825 = vunpack.c.l.bf16 %v1525
          %v1826 = vunpack.c.l.bf16 %v1526
          %v1827 = vunpack.c.l.bf16 %v1527
          %v1828 = vunpack.c.l.bf16 %v1528
          %v1829 = vunpack.c.l.bf16 %v1529
          %v1830 = vunpack.c.l.bf16 %v1530
          %v1831 = vunpack.c.l.bf16 %v1531
          %v1832 = vunpack.c.l.bf16 %v1532
          %v1833 = vunpack.c.l.bf16 %v1533
          %v1834 = vunpack.c.l.bf16 %v1534
          %v1835 = vunpack.c.l.bf16 %v1535
          %v1836 = vunpack.c.l.bf16 %v1536
          %v1837 = vunpack.c.l.bf16 %v1537
          %v1838 = vunpack.c.l.bf16 %v1538
          %v1839 = vunpack.c.l.bf16 %v1539
          %v1840 = vunpack.c.l.bf16 %v1540
          %v1841 = vunpack.c.l.bf16 %v1541
          %v1842 = vunpack.c.l.bf16 %v1542
          %v1843 = vunpack.c.l.bf16 %v1543
          %v1844 = vunpack.c.l.bf16 %v1544
          %v1845 = vunpack.c.l.bf16 %v1545
          %v1846 = vunpack.c.l.bf16 %v1546
          %v1847 = vunpack.c.l.bf16 %v1547
          %v1848 = vunpack.c.l.bf16 %v1548
          %v1849 = vunpack.c.l.bf16 %v1549
          %v1850 = vunpack.c.l.bf16 %v1550
          %v1851 = vunpack.c.l.bf16 %v1551
          %v1852 = vunpack.c.l.bf16 %v1552
          %v1853 = vunpack.c.l.bf16 %v1553
          %v1854 = vunpack.c.l.bf16 %v1554
          %v1855 = vunpack.c.l.bf16 %v1555
          %v1856 = vunpack.c.l.bf16 %v1556
          %v1857 = vunpack.c.l.bf16 %v1557
          %v1858 = vunpack.c.l.bf16 %v1558
          %v1859 = vunpack.c.l.bf16 %v1559
          %v1860 = vunpack.c.l.bf16 %v1560
          %v1861 = vunpack.c.l.bf16 %v1561
          %v1862 = vunpack.c.l.bf16 %v1562
          %v1863 = vunpack.c.l.bf16 %v1563
          %v1864 = vunpack.c.l.bf16 %v1564
          %v1865 = vunpack.c.l.bf16 %v1565
          %v1866 = vunpack.c.l.bf16 %v1566
          %v1867 = vunpack.c.l.bf16 %v1567
          %v1868 = vunpack.c.l.bf16 %v1568
          %v1869 = vunpack.c.l.bf16 %v1569
          %v1870 = vunpack.c.l.bf16 %v1570
          %v1871 = vunpack.c.l.bf16 %v1571
          %v1872 = vunpack.c.l.bf16 %v1572
          %v1873 = vunpack.c.l.bf16 %v1573
          %v1874 = vunpack.c.l.bf16 %v1574
          %v1875 = vunpack.c.l.bf16 %v1575
          %v1876 = vunpack.c.l.bf16 %v1576
          %v1877 = vunpack.c.l.bf16 %v1577
          %v1878 = vunpack.c.l.bf16 %v1578
          %v1879 = vunpack.c.l.bf16 %v1579
          %v1880 = vunpack.c.l.bf16 %v1580
          %v1881 = vunpack.c.l.bf16 %v1581
          %v1882 = vunpack.c.l.bf16 %v1582
          %v1883 = vunpack.c.l.bf16 %v1583
          %v1884 = vunpack.c.l.bf16 %v1584
          %v1885 = vunpack.c.l.bf16 %v1585
          %v1886 = vunpack.c.l.bf16 %v1586
          %v1887 = vunpack.c.l.bf16 %v1587
          %v1888 = vunpack.c.l.bf16 %v1588
          %v1889 = vunpack.c.l.bf16 %v1589
          %v1890 = vunpack.c.l.bf16 %v1590
          %v1891 = vunpack.c.l.bf16 %v1591
          %v1892 = vunpack.c.l.bf16 %v1592
          %v1893 = vunpack.c.l.bf16 %v1593
          %v1894 = vunpack.c.l.bf16 %v1594
          %v1895 = vunpack.c.l.bf16 %v1595
          %v1896 = vunpack.c.l.bf16 %v1596
          %v1897 = vunpack.c.l.bf16 %v1597
          %v1898 = vunpack.c.l.bf16 %v1598
          %v1899 = vunpack.c.l.bf16 %v1599
          %v1900 = vunpack.c.l.bf16 %v1600
          %v1901 = vunpack.c.l.bf16 %v1601
          %v1902 = vunpack.c.l.bf16 %v1602
          %v1903 = vunpack.c.l.bf16 %v1603
          %v1904 = vunpack.c.l.bf16 %v1604
          %v1905 = vunpack.c.l.bf16 %v1605
          %v1906 = vunpack.c.l.bf16 %v1606
          %v1907 = vunpack.c.l.bf16 %v1607
          %v1908 = vunpack.c.l.bf16 %v1608
          %v1909 = vunpack.c.l.bf16 %v1609
          %v1910 = vunpack.c.l.bf16 %v1610
          %v1911 = vunpack.c.l.bf16 %v1611
          %v1912 = vunpack.c.l.bf16 %v1612
          %v1913 = vunpack.c.l.bf16 %v1613
          %v1914 = vunpack.c.l.bf16 %v1614
          %v1915 = vunpack.c.l.bf16 %v1615
          %v1916 = vunpack.c.l.bf16 %v1616
          %v1917 = vunpack.c.l.bf16 %v1617
          %v1918 = vunpack.c.l.bf16 %v1618
          %v1919 = vunpack.c.l.bf16 %v1619
          %v1920 = vunpack.c.l.bf16 %v1620
          %v1921 = vunpack.c.l.bf16 %v1621
          %v1922 = vunpack.c.l.bf16 %v1622
          %v1923 = vunpack.c.l.bf16 %v1623
          %v1924 = vunpack.c.l.bf16 %v1624
          %v1925 = vunpack.c.l.bf16 %v1625
          %v1926 = vunpack.c.l.bf16 %v1626
          %v1927 = vunpack.c.l.bf16 %v1627
          %v1928 = vunpack.c.l.bf16 %v1628
          %v1929 = vunpack.c.l.bf16 %v1629
          %v1930 = vunpack.c.l.bf16 %v1630
          %v1931 = vunpack.c.l.bf16 %v1631
          %v1932 = vunpack.c.l.bf16 %v1632
          %v1933 = vunpack.c.l.bf16 %v1633
          %v1934 = vunpack.c.l.bf16 %v1634
          %v1935 = vunpack.c.l.bf16 %v1635
          %v1936 = vunpack.c.l.bf16 %v1636
          %v1937 = vunpack.c.l.bf16 %v1637
          %v1938 = vunpack.c.l.bf16 %v1638
          %v1939 = vunpack.c.l.bf16 %v1639
          %v1940 = vunpack.c.l.bf16 %v1640
          %v1941 = vunpack.c.l.bf16 %v1641
          %v1942 = vunpack.c.l.bf16 %v1642
          %v1943 = vunpack.c.l.bf16 %v1643
          %v1944 = vunpack.c.l.bf16 %v1644
          %v1945 = vunpack.c.l.bf16 %v1645
          %v1946 = vunpack.c.l.bf16 %v1646
          %v1947 = vunpack.c.l.bf16 %v1647
          %v1948 = vunpack.c.l.bf16 %v1648
          %v1949 = vunpack.c.l.bf16 %v1649
          %v1950 = vunpack.c.l.bf16 %v1650
          %v1951 = vunpack.c.l.bf16 %v1651
          %v1952 = vunpack.c.l.bf16 %v1652
          %v1953 = vunpack.c.l.bf16 %v1653
          %v1954 = vunpack.c.l.bf16 %v1654
          %v1955 = vunpack.c.l.bf16 %v1655
          %v1956 = vunpack.c.l.bf16 %v1656
          %v1957 = vunpack.c.l.bf16 %v1657
          %v1958 = vunpack.c.l.bf16 %v1658
          %v1959 = vunpack.c.l.bf16 %v1659
          %v1960 = vunpack.c.l.bf16 %v1660
          %v1961 = vunpack.c.l.bf16 %v1661
          %v1962 = vunpack.c.l.bf16 %v1662
          %v1963 = vunpack.c.l.bf16 %v1663
          %v1964 = vunpack.c.l.bf16 %v1664
          %v1965 = vunpack.c.l.bf16 %v1665
          %v1966 = vunpack.c.l.bf16 %v1666
          %v1967 = vunpack.c.l.bf16 %v1667
          %v1968 = vunpack.c.l.bf16 %v1668
          %v1969 = vunpack.c.l.bf16 %v1669
          %v1970 = vunpack.c.l.bf16 %v1670
          %v1971 = vunpack.c.l.bf16 %v1671
          %v1972 = vunpack.c.l.bf16 %v1672
          %v1973 = vunpack.c.l.bf16 %v1673
          %v1974 = vunpack.c.l.bf16 %v1674
          %v1975 = vunpack.c.l.bf16 %v1675
          %v1976 = vlaneseq
          %v1977 = vshrl.u32 %v1976, 7
          %v1978 = vadd.s32 %v1977, 8
          %v1979 = vadd.s32 %v1977, 16
          %v1980 = vadd.s32 %v1977, 24
          %v1981 = vadd.s32 %v1977, 32
          %v1982 = vadd.s32 %v1977, 40
          %v1983 = vadd.s32 %v1977, 48
          %v1984 = vadd.s32 %v1977, 56
          %v1985 = vadd.s32 %v1977, 64
          %v1986 = vadd.s32 %v1977, 72
          %v1987 = vadd.s32 %v1977, 80
          %v1988 = vadd.s32 %v1977, 88
          %v1989 = vadd.s32 %v1977, 96
          %v1990 = vadd.s32 %v1977, 104
          %v1991 = vadd.s32 %v1977, 112
          %v1992 = vadd.s32 %v1977, 120
          %v1993 = vadd.s32 %v1977, 128
          %v1994 = vadd.s32 %v1977, 136
          %v1995 = vadd.s32 %v1977, 144
          %v1996 = vadd.s32 %v1977, 152
          %v1997 = vadd.s32 %v1977, 160
          %v1998 = vadd.s32 %v1977, 168
          %v1999 = vadd.s32 %v1977, 176
          %v2000 = vadd.s32 %v1977, 184
          %v2001 = vadd.s32 %v1977, 192
          %v2002 = vadd.s32 %v1977, 200
          %v2003 = vadd.s32 %v1977, 208
          %v2004 = vadd.s32 %v1977, 216
          %v2005 = vadd.s32 %v1977, 224
          %v2006 = vadd.s32 %v1977, 232
          %v2007 = vadd.s32 %v1977, 240
          %v2008 = vadd.s32 %v1977, 248
          %v2009 = vadd.s32 %v1977, 256
          %v2010 = vadd.s32 %v1977, 264
          %v2011 = vadd.s32 %v1977, 272
          %v2012 = vadd.s32 %v1977, 280
          %v2013 = vadd.s32 %v1977, 288
          %v2014 = vadd.s32 %v1977, 296
          %v2015 = vadd.s32 %v1977, 304
          %v2016 = vadd.s32 %v1977, 312
          %v2017 = vadd.s32 %v1977, 320
          %v2018 = vadd.s32 %v1977, 328
          %v2019 = vadd.s32 %v1977, 336
          %v2020 = vadd.s32 %v1977, 344
          %v2021 = vadd.s32 %v1977, 352
          %v2022 = vadd.s32 %v1977, 360
          %v2023 = vadd.s32 %v1977, 368
          %v2024 = vadd.s32 %v1977, 376
          %v2025 = vadd.s32 %v1977, 384
          %v2026 = vadd.s32 %v1977, 392
          %v2027 = vadd.s32 %v1977, 400
          %v2028 = vadd.s32 %v1977, 408
          %v2029 = vadd.s32 %v1977, 416
          %v2030 = vadd.s32 %v1977, 424
          %v2031 = vadd.s32 %v1977, 432
          %v2032 = vadd.s32 %v1977, 440
          %v2033 = vadd.s32 %v1977, 448
          %v2034 = vadd.s32 %v1977, 456
          %v2035 = vadd.s32 %v1977, 464
          %v2036 = vadd.s32 %v1977, 472
          %v2037 = vadd.s32 %v1977, 480
          %v2038 = vadd.s32 %v1977, 488
          %v2039 = vadd.s32 %v1977, 496
          %v2040 = vadd.s32 %v1977, 504
          %v2041 = vadd.s32 %v1977, 512
          %v2042 = vadd.s32 %v1977, 520
          %v2043 = vadd.s32 %v1977, 528
          %v2044 = vadd.s32 %v1977, 536
          %v2045 = vadd.s32 %v1977, 544
          %v2046 = vadd.s32 %v1977, 552
          %v2047 = vadd.s32 %v1977, 560
          %v2048 = vadd.s32 %v1977, 568
          %v2049 = vadd.s32 %v1977, 576
          %v2050 = vadd.s32 %v1977, 584
          %v2051 = vadd.s32 %v1977, 592
          %v2052 = vadd.s32 %v1977, 600
          %v2053 = vadd.s32 %v1977, 608
          %v2054 = vadd.s32 %v1977, 616
          %v2055 = vadd.s32 %v1977, 624
          %v2056 = vadd.s32 %v1977, 632
          %v2057 = vadd.s32 %v1977, 640
          %v2058 = vadd.s32 %v1977, 648
          %v2059 = vadd.s32 %v1977, 656
          %v2060 = vadd.s32 %v1977, 664
          %v2061 = vadd.s32 %v1977, 672
          %v2062 = vadd.s32 %v1977, 680
          %v2063 = vadd.s32 %v1977, 688
          %v2064 = vadd.s32 %v1977, 696
          %v2065 = vadd.s32 %v1977, 704
          %v2066 = vadd.s32 %v1977, 712
          %v2067 = vadd.s32 %v1977, 720
          %v2068 = vadd.s32 %v1977, 728
          %v2069 = vadd.s32 %v1977, 736
          %v2070 = vadd.s32 %v1977, 744
          %v2071 = vadd.s32 %v1977, 752
          %v2072 = vadd.s32 %v1977, 760
          %v2073 = vadd.s32 %v1977, 768
          %v2074 = vadd.s32 %v1977, 776
          %v2075 = vadd.s32 %v1977, 784
          %v2076 = vadd.s32 %v1977, 792
          %v2077 = vadd.s32 %v1977, 800
          %v2078 = vadd.s32 %v1977, 808
          %v2079 = vadd.s32 %v1977, 816
          %v2080 = vadd.s32 %v1977, 824
          %v2081 = vadd.s32 %v1977, 832
          %v2082 = vadd.s32 %v1977, 840
          %v2083 = vadd.s32 %v1977, 848
          %v2084 = vadd.s32 %v1977, 856
          %v2085 = vadd.s32 %v1977, 864
          %v2086 = vadd.s32 %v1977, 872
          %v2087 = vadd.s32 %v1977, 880
          %v2088 = vadd.s32 %v1977, 888
          %v2089 = vadd.s32 %v1977, 896
          %v2090 = vadd.s32 %v1977, 904
          %v2091 = vadd.s32 %v1977, 912
          %v2092 = vadd.s32 %v1977, 920
          %v2093 = vadd.s32 %v1977, 928
          %v2094 = vadd.s32 %v1977, 936
          %v2095 = vadd.s32 %v1977, 944
          %v2096 = vadd.s32 %v1977, 952
          %v2097 = vadd.s32 %v1977, 960
          %v2098 = vadd.s32 %v1977, 968
          %v2099 = vadd.s32 %v1977, 976
          %v2100 = vadd.s32 %v1977, 984
          %v2101 = vadd.s32 %v1977, 992
          %v2102 = vadd.s32 %v1977, 1000
          %v2103 = vadd.s32 %v1977, 1008
          %v2104 = vadd.s32 %v1977, 1016
          %v2105 = vadd.s32 %v1977, 1024
          %v2106 = vadd.s32 %v1977, 1032
          %v2107 = vadd.s32 %v1977, 1040
          %v2108 = vadd.s32 %v1977, 1048
          %v2109 = vadd.s32 %v1977, 1056
          %v2110 = vadd.s32 %v1977, 1064
          %v2111 = vadd.s32 %v1977, 1072
          %v2112 = vadd.s32 %v1977, 1080
          %v2113 = vadd.s32 %v1977, 1088
          %v2114 = vadd.s32 %v1977, 1096
          %v2115 = vadd.s32 %v1977, 1104
          %v2116 = vadd.s32 %v1977, 1112
          %v2117 = vadd.s32 %v1977, 1120
          %v2118 = vadd.s32 %v1977, 1128
          %v2119 = vadd.s32 %v1977, 1136
          %v2120 = vadd.s32 %v1977, 1144
          %v2121 = vadd.s32 %v1977, 1152
          %v2122 = vadd.s32 %v1977, 1160
          %v2123 = vadd.s32 %v1977, 1168
          %v2124 = vadd.s32 %v1977, 1176
          %v2125 = vadd.s32 %v1977, 1184
          %v2126 = vadd.s32 %v1977, 1192
          %v2127 = vadd.s32 %v1977, 1200
          %v2128 = vadd.s32 %v1977, 1208
          %v2129 = vadd.s32 %v1977, 1216
          %v2130 = vadd.s32 %v1977, 1224
          %v2131 = vadd.s32 %v1977, 1232
          %v2132 = vadd.s32 %v1977, 1240
          %v2133 = vadd.s32 %v1977, 1248
          %v2134 = vadd.s32 %v1977, 1256
          %v2135 = vadd.s32 %v1977, 1264
          %v2136 = vadd.s32 %v1977, 1272
          %v2137 = vadd.s32 %v1977, 1280
          %v2138 = vadd.s32 %v1977, 1288
          %v2139 = vadd.s32 %v1977, 1296
          %v2140 = vadd.s32 %v1977, 1304
          %v2141 = vadd.s32 %v1977, 1312
          %v2142 = vadd.s32 %v1977, 1320
          %v2143 = vadd.s32 %v1977, 1328
          %v2144 = vadd.s32 %v1977, 1336
          %v2145 = vadd.s32 %v1977, 1344
          %v2146 = vadd.s32 %v1977, 1352
          %v2147 = vadd.s32 %v1977, 1360
          %v2148 = vadd.s32 %v1977, 1368
          %v2149 = vadd.s32 %v1977, 1376
          %v2150 = vadd.s32 %v1977, 1384
          %v2151 = vadd.s32 %v1977, 1392
          %v2152 = vadd.s32 %v1977, 1400
          %v2153 = vadd.s32 %v1977, 1408
          %v2154 = vadd.s32 %v1977, 1416
          %v2155 = vadd.s32 %v1977, 1424
          %v2156 = vadd.s32 %v1977, 1432
          %v2157 = vadd.s32 %v1977, 1440
          %v2158 = vadd.s32 %v1977, 1448
          %v2159 = vadd.s32 %v1977, 1456
          %v2160 = vadd.s32 %v1977, 1464
          %v2161 = vadd.s32 %v1977, 1472
          %v2162 = vadd.s32 %v1977, 1480
          %v2163 = vadd.s32 %v1977, 1488
          %v2164 = vadd.s32 %v1977, 1496
          %v2165 = vadd.s32 %v1977, 1504
          %v2166 = vadd.s32 %v1977, 1512
          %v2167 = vadd.s32 %v1977, 1520
          %v2168 = vadd.s32 %v1977, 1528
          %v2169 = vadd.s32 %v1977, 1536
          %v2170 = vadd.s32 %v1977, 1544
          %v2171 = vadd.s32 %v1977, 1552
          %v2172 = vadd.s32 %v1977, 1560
          %v2173 = vadd.s32 %v1977, 1568
          %v2174 = vadd.s32 %v1977, 1576
          %v2175 = vadd.s32 %v1977, 1584
          %v2176 = vadd.s32 %v1977, 1592
          %v2177 = vadd.s32 %v1977, 1600
          %v2178 = vadd.s32 %v1977, 1608
          %v2179 = vadd.s32 %v1977, 1616
          %v2180 = vadd.s32 %v1977, 1624
          %v2181 = vadd.s32 %v1977, 1632
          %v2182 = vadd.s32 %v1977, 1640
          %v2183 = vadd.s32 %v1977, 1648
          %v2184 = vadd.s32 %v1977, 1656
          %v2185 = vadd.s32 %v1977, 1664
          %v2186 = vadd.s32 %v1977, 1672
          %v2187 = vadd.s32 %v1977, 1680
          %v2188 = vadd.s32 %v1977, 1688
          %v2189 = vadd.s32 %v1977, 1696
          %v2190 = vadd.s32 %v1977, 1704
          %v2191 = vadd.s32 %v1977, 1712
          %v2192 = vadd.s32 %v1977, 1720
          %v2193 = vadd.s32 %v1977, 1728
          %v2194 = vadd.s32 %v1977, 1736
          %v2195 = vadd.s32 %v1977, 1744
          %v2196 = vadd.s32 %v1977, 1752
          %v2197 = vadd.s32 %v1977, 1760
          %v2198 = vadd.s32 %v1977, 1768
          %v2199 = vadd.s32 %v1977, 1776
          %v2200 = vadd.s32 %v1977, 1784
          %v2201 = vadd.s32 %v1977, 1792
          %v2202 = vadd.s32 %v1977, 1800
          %v2203 = vadd.s32 %v1977, 1808
          %v2204 = vadd.s32 %v1977, 1816
          %v2205 = vadd.s32 %v1977, 1824
          %v2206 = vadd.s32 %v1977, 1832
          %v2207 = vadd.s32 %v1977, 1840
          %v2208 = vadd.s32 %v1977, 1848
          %v2209 = vadd.s32 %v1977, 1856
          %v2210 = vadd.s32 %v1977, 1864
          %v2211 = vadd.s32 %v1977, 1872
          %v2212 = vadd.s32 %v1977, 1880
          %v2213 = vadd.s32 %v1977, 1888
          %v2214 = vadd.s32 %v1977, 1896
          %v2215 = vadd.s32 %v1977, 1904
          %v2216 = vadd.s32 %v1977, 1912
          %v2217 = vadd.s32 %v1977, 1920
          %v2218 = vadd.s32 %v1977, 1928
          %v2219 = vadd.s32 %v1977, 1936
          %v2220 = vadd.s32 %v1977, 1944
          %v2221 = vadd.s32 %v1977, 1952
          %v2222 = vadd.s32 %v1977, 1960
          %v2223 = vadd.s32 %v1977, 1968
          %v2224 = vadd.s32 %v1977, 1976
          %v2225 = vadd.s32 %v1977, 1984
          %v2226 = vadd.s32 %v1977, 1992
          %v2227 = vadd.s32 %v1977, 2000
          %v2228 = vadd.s32 %v1977, 2008
          %v2229 = vadd.s32 %v1977, 2016
          %v2230 = vadd.s32 %v1977, 2024
          %v2231 = vadd.s32 %v1977, 2032
          %v2232 = vadd.s32 %v1977, 2040
          %v2233 = vadd.s32 %v1977, 2048
          %v2234 = vadd.s32 %v1977, 2056
          %v2235 = vadd.s32 %v1977, 2064
          %v2236 = vadd.s32 %v1977, 2072
          %v2237 = vadd.s32 %v1977, 2080
          %v2238 = vadd.s32 %v1977, 2088
          %v2239 = vadd.s32 %v1977, 2096
          %v2240 = vadd.s32 %v1977, 2104
          %v2241 = vadd.s32 %v1977, 2112
          %v2242 = vadd.s32 %v1977, 2120
          %v2243 = vadd.s32 %v1977, 2128
          %v2244 = vadd.s32 %v1977, 2136
          %v2245 = vadd.s32 %v1977, 2144
          %v2246 = vadd.s32 %v1977, 2152
          %v2247 = vadd.s32 %v1977, 2160
          %v2248 = vadd.s32 %v1977, 2168
          %v2249 = vadd.s32 %v1977, 2176
          %v2250 = vadd.s32 %v1977, 2184
          %v2251 = vadd.s32 %v1977, 2192
          %v2252 = vadd.s32 %v1977, 2200
          %v2253 = vadd.s32 %v1977, 2208
          %v2254 = vadd.s32 %v1977, 2216
          %v2255 = vadd.s32 %v1977, 2224
          %v2256 = vadd.s32 %v1977, 2232
          %v2257 = vadd.s32 %v1977, 2240
          %v2258 = vadd.s32 %v1977, 2248
          %v2259 = vadd.s32 %v1977, 2256
          %v2260 = vadd.s32 %v1977, 2264
          %v2261 = vadd.s32 %v1977, 2272
          %v2262 = vadd.s32 %v1977, 2280
          %v2263 = vadd.s32 %v1977, 2288
          %v2264 = vadd.s32 %v1977, 2296
          %v2265 = vadd.s32 %v1977, 2304
          %v2266 = vadd.s32 %v1977, 2312
          %v2267 = vadd.s32 %v1977, 2320
          %v2268 = vadd.s32 %v1977, 2328
          %v2269 = vadd.s32 %v1977, 2336
          %v2270 = vadd.s32 %v1977, 2344
          %v2271 = vadd.s32 %v1977, 2352
          %v2272 = vadd.s32 %v1977, 2360
          %v2273 = vadd.s32 %v1977, 2368
          %v2274 = vadd.s32 %v1977, 2376
          %v2275 = vadd.s32 %v1977, 2384
          %v2276 = vadd.s32 %v1977, 2392
          %s2277 = smul.u32 %s160, 2400
          %v2278 = vstv %s2277
          %v2279 = vadd.s32 %v1977, %v2278
          %v2280 = vadd.s32 %v1978, %v2278
          %v2281 = vadd.s32 %v1979, %v2278
          %v2282 = vadd.s32 %v1980, %v2278
          %v2283 = vadd.s32 %v1981, %v2278
          %v2284 = vadd.s32 %v1982, %v2278
          %v2285 = vadd.s32 %v1983, %v2278
          %v2286 = vadd.s32 %v1984, %v2278
          %v2287 = vadd.s32 %v1985, %v2278
          %v2288 = vadd.s32 %v1986, %v2278
          %v2289 = vadd.s32 %v1987, %v2278
          %v2290 = vadd.s32 %v1988, %v2278
          %v2291 = vadd.s32 %v1989, %v2278
          %v2292 = vadd.s32 %v1990, %v2278
          %v2293 = vadd.s32 %v1991, %v2278
          %v2294 = vadd.s32 %v1992, %v2278
          %v2295 = vadd.s32 %v1993, %v2278
          %v2296 = vadd.s32 %v1994, %v2278
          %v2297 = vadd.s32 %v1995, %v2278
          %v2298 = vadd.s32 %v1996, %v2278
          %v2299 = vadd.s32 %v1997, %v2278
          %v2300 = vadd.s32 %v1998, %v2278
          %v2301 = vadd.s32 %v1999, %v2278
          %v2302 = vadd.s32 %v2000, %v2278
          %v2303 = vadd.s32 %v2001, %v2278
          %v2304 = vadd.s32 %v2002, %v2278
          %v2305 = vadd.s32 %v2003, %v2278
          %v2306 = vadd.s32 %v2004, %v2278
          %v2307 = vadd.s32 %v2005, %v2278
          %v2308 = vadd.s32 %v2006, %v2278
          %v2309 = vadd.s32 %v2007, %v2278
          %v2310 = vadd.s32 %v2008, %v2278
          %v2311 = vadd.s32 %v2009, %v2278
          %v2312 = vadd.s32 %v2010, %v2278
          %v2313 = vadd.s32 %v2011, %v2278
          %v2314 = vadd.s32 %v2012, %v2278
          %v2315 = vadd.s32 %v2013, %v2278
          %v2316 = vadd.s32 %v2014, %v2278
          %v2317 = vadd.s32 %v2015, %v2278
          %v2318 = vadd.s32 %v2016, %v2278
          %v2319 = vadd.s32 %v2017, %v2278
          %v2320 = vadd.s32 %v2018, %v2278
          %v2321 = vadd.s32 %v2019, %v2278
          %v2322 = vadd.s32 %v2020, %v2278
          %v2323 = vadd.s32 %v2021, %v2278
          %v2324 = vadd.s32 %v2022, %v2278
          %v2325 = vadd.s32 %v2023, %v2278
          %v2326 = vadd.s32 %v2024, %v2278
          %v2327 = vadd.s32 %v2025, %v2278
          %v2328 = vadd.s32 %v2026, %v2278
          %v2329 = vadd.s32 %v2027, %v2278
          %v2330 = vadd.s32 %v2028, %v2278
          %v2331 = vadd.s32 %v2029, %v2278
          %v2332 = vadd.s32 %v2030, %v2278
          %v2333 = vadd.s32 %v2031, %v2278
          %v2334 = vadd.s32 %v2032, %v2278
          %v2335 = vadd.s32 %v2033, %v2278
          %v2336 = vadd.s32 %v2034, %v2278
          %v2337 = vadd.s32 %v2035, %v2278
          %v2338 = vadd.s32 %v2036, %v2278
          %v2339 = vadd.s32 %v2037, %v2278
          %v2340 = vadd.s32 %v2038, %v2278
          %v2341 = vadd.s32 %v2039, %v2278
          %v2342 = vadd.s32 %v2040, %v2278
          %v2343 = vadd.s32 %v2041, %v2278
          %v2344 = vadd.s32 %v2042, %v2278
          %v2345 = vadd.s32 %v2043, %v2278
          %v2346 = vadd.s32 %v2044, %v2278
          %v2347 = vadd.s32 %v2045, %v2278
          %v2348 = vadd.s32 %v2046, %v2278
          %v2349 = vadd.s32 %v2047, %v2278
          %v2350 = vadd.s32 %v2048, %v2278
          %v2351 = vadd.s32 %v2049, %v2278
          %v2352 = vadd.s32 %v2050, %v2278
          %v2353 = vadd.s32 %v2051, %v2278
          %v2354 = vadd.s32 %v2052, %v2278
          %v2355 = vadd.s32 %v2053, %v2278
          %v2356 = vadd.s32 %v2054, %v2278
          %v2357 = vadd.s32 %v2055, %v2278
          %v2358 = vadd.s32 %v2056, %v2278
          %v2359 = vadd.s32 %v2057, %v2278
          %v2360 = vadd.s32 %v2058, %v2278
          %v2361 = vadd.s32 %v2059, %v2278
          %v2362 = vadd.s32 %v2060, %v2278
          %v2363 = vadd.s32 %v2061, %v2278
          %v2364 = vadd.s32 %v2062, %v2278
          %v2365 = vadd.s32 %v2063, %v2278
          %v2366 = vadd.s32 %v2064, %v2278
          %v2367 = vadd.s32 %v2065, %v2278
          %v2368 = vadd.s32 %v2066, %v2278
          %v2369 = vadd.s32 %v2067, %v2278
          %v2370 = vadd.s32 %v2068, %v2278
          %v2371 = vadd.s32 %v2069, %v2278
          %v2372 = vadd.s32 %v2070, %v2278
          %v2373 = vadd.s32 %v2071, %v2278
          %v2374 = vadd.s32 %v2072, %v2278
          %v2375 = vadd.s32 %v2073, %v2278
          %v2376 = vadd.s32 %v2074, %v2278
          %v2377 = vadd.s32 %v2075, %v2278
          %v2378 = vadd.s32 %v2076, %v2278
          %v2379 = vadd.s32 %v2077, %v2278
          %v2380 = vadd.s32 %v2078, %v2278
          %v2381 = vadd.s32 %v2079, %v2278
          %v2382 = vadd.s32 %v2080, %v2278
          %v2383 = vadd.s32 %v2081, %v2278
          %v2384 = vadd.s32 %v2082, %v2278
          %v2385 = vadd.s32 %v2083, %v2278
          %v2386 = vadd.s32 %v2084, %v2278
          %v2387 = vadd.s32 %v2085, %v2278
          %v2388 = vadd.s32 %v2086, %v2278
          %v2389 = vadd.s32 %v2087, %v2278
          %v2390 = vadd.s32 %v2088, %v2278
          %v2391 = vadd.s32 %v2089, %v2278
          %v2392 = vadd.s32 %v2090, %v2278
          %v2393 = vadd.s32 %v2091, %v2278
          %v2394 = vadd.s32 %v2092, %v2278
          %v2395 = vadd.s32 %v2093, %v2278
          %v2396 = vadd.s32 %v2094, %v2278
          %v2397 = vadd.s32 %v2095, %v2278
          %v2398 = vadd.s32 %v2096, %v2278
          %v2399 = vadd.s32 %v2097, %v2278
          %v2400 = vadd.s32 %v2098, %v2278
          %v2401 = vadd.s32 %v2099, %v2278
          %v2402 = vadd.s32 %v2100, %v2278
          %v2403 = vadd.s32 %v2101, %v2278
          %v2404 = vadd.s32 %v2102, %v2278
          %v2405 = vadd.s32 %v2103, %v2278
          %v2406 = vadd.s32 %v2104, %v2278
          %v2407 = vadd.s32 %v2105, %v2278
          %v2408 = vadd.s32 %v2106, %v2278
          %v2409 = vadd.s32 %v2107, %v2278
          %v2410 = vadd.s32 %v2108, %v2278
          %v2411 = vadd.s32 %v2109, %v2278
          %v2412 = vadd.s32 %v2110, %v2278
          %v2413 = vadd.s32 %v2111, %v2278
          %v2414 = vadd.s32 %v2112, %v2278
          %v2415 = vadd.s32 %v2113, %v2278
          %v2416 = vadd.s32 %v2114, %v2278
          %v2417 = vadd.s32 %v2115, %v2278
          %v2418 = vadd.s32 %v2116, %v2278
          %v2419 = vadd.s32 %v2117, %v2278
          %v2420 = vadd.s32 %v2118, %v2278
          %v2421 = vadd.s32 %v2119, %v2278
          %v2422 = vadd.s32 %v2120, %v2278
          %v2423 = vadd.s32 %v2121, %v2278
          %v2424 = vadd.s32 %v2122, %v2278
          %v2425 = vadd.s32 %v2123, %v2278
          %v2426 = vadd.s32 %v2124, %v2278
          %v2427 = vadd.s32 %v2125, %v2278
          %v2428 = vadd.s32 %v2126, %v2278
          %v2429 = vadd.s32 %v2127, %v2278
          %v2430 = vadd.s32 %v2128, %v2278
          %v2431 = vadd.s32 %v2129, %v2278
          %v2432 = vadd.s32 %v2130, %v2278
          %v2433 = vadd.s32 %v2131, %v2278
          %v2434 = vadd.s32 %v2132, %v2278
          %v2435 = vadd.s32 %v2133, %v2278
          %v2436 = vadd.s32 %v2134, %v2278
          %v2437 = vadd.s32 %v2135, %v2278
          %v2438 = vadd.s32 %v2136, %v2278
          %v2439 = vadd.s32 %v2137, %v2278
          %v2440 = vadd.s32 %v2138, %v2278
          %v2441 = vadd.s32 %v2139, %v2278
          %v2442 = vadd.s32 %v2140, %v2278
          %v2443 = vadd.s32 %v2141, %v2278
          %v2444 = vadd.s32 %v2142, %v2278
          %v2445 = vadd.s32 %v2143, %v2278
          %v2446 = vadd.s32 %v2144, %v2278
          %v2447 = vadd.s32 %v2145, %v2278
          %v2448 = vadd.s32 %v2146, %v2278
          %v2449 = vadd.s32 %v2147, %v2278
          %v2450 = vadd.s32 %v2148, %v2278
          %v2451 = vadd.s32 %v2149, %v2278
          %v2452 = vadd.s32 %v2150, %v2278
          %v2453 = vadd.s32 %v2151, %v2278
          %v2454 = vadd.s32 %v2152, %v2278
          %v2455 = vadd.s32 %v2153, %v2278
          %v2456 = vadd.s32 %v2154, %v2278
          %v2457 = vadd.s32 %v2155, %v2278
          %v2458 = vadd.s32 %v2156, %v2278
          %v2459 = vadd.s32 %v2157, %v2278
          %v2460 = vadd.s32 %v2158, %v2278
          %v2461 = vadd.s32 %v2159, %v2278
          %v2462 = vadd.s32 %v2160, %v2278
          %v2463 = vadd.s32 %v2161, %v2278
          %v2464 = vadd.s32 %v2162, %v2278
          %v2465 = vadd.s32 %v2163, %v2278
          %v2466 = vadd.s32 %v2164, %v2278
          %v2467 = vadd.s32 %v2165, %v2278
          %v2468 = vadd.s32 %v2166, %v2278
          %v2469 = vadd.s32 %v2167, %v2278
          %v2470 = vadd.s32 %v2168, %v2278
          %v2471 = vadd.s32 %v2169, %v2278
          %v2472 = vadd.s32 %v2170, %v2278
          %v2473 = vadd.s32 %v2171, %v2278
          %v2474 = vadd.s32 %v2172, %v2278
          %v2475 = vadd.s32 %v2173, %v2278
          %v2476 = vadd.s32 %v2174, %v2278
          %v2477 = vadd.s32 %v2175, %v2278
          %v2478 = vadd.s32 %v2176, %v2278
          %v2479 = vadd.s32 %v2177, %v2278
          %v2480 = vadd.s32 %v2178, %v2278
          %v2481 = vadd.s32 %v2179, %v2278
          %v2482 = vadd.s32 %v2180, %v2278
          %v2483 = vadd.s32 %v2181, %v2278
          %v2484 = vadd.s32 %v2182, %v2278
          %v2485 = vadd.s32 %v2183, %v2278
          %v2486 = vadd.s32 %v2184, %v2278
          %v2487 = vadd.s32 %v2185, %v2278
          %v2488 = vadd.s32 %v2186, %v2278
          %v2489 = vadd.s32 %v2187, %v2278
          %v2490 = vadd.s32 %v2188, %v2278
          %v2491 = vadd.s32 %v2189, %v2278
          %v2492 = vadd.s32 %v2190, %v2278
          %v2493 = vadd.s32 %v2191, %v2278
          %v2494 = vadd.s32 %v2192, %v2278
          %v2495 = vadd.s32 %v2193, %v2278
          %v2496 = vadd.s32 %v2194, %v2278
          %v2497 = vadd.s32 %v2195, %v2278
          %v2498 = vadd.s32 %v2196, %v2278
          %v2499 = vadd.s32 %v2197, %v2278
          %v2500 = vadd.s32 %v2198, %v2278
          %v2501 = vadd.s32 %v2199, %v2278
          %v2502 = vadd.s32 %v2200, %v2278
          %v2503 = vadd.s32 %v2201, %v2278
          %v2504 = vadd.s32 %v2202, %v2278
          %v2505 = vadd.s32 %v2203, %v2278
          %v2506 = vadd.s32 %v2204, %v2278
          %v2507 = vadd.s32 %v2205, %v2278
          %v2508 = vadd.s32 %v2206, %v2278
          %v2509 = vadd.s32 %v2207, %v2278
          %v2510 = vadd.s32 %v2208, %v2278
          %v2511 = vadd.s32 %v2209, %v2278
          %v2512 = vadd.s32 %v2210, %v2278
          %v2513 = vadd.s32 %v2211, %v2278
          %v2514 = vadd.s32 %v2212, %v2278
          %v2515 = vadd.s32 %v2213, %v2278
          %v2516 = vadd.s32 %v2214, %v2278
          %v2517 = vadd.s32 %v2215, %v2278
          %v2518 = vadd.s32 %v2216, %v2278
          %v2519 = vadd.s32 %v2217, %v2278
          %v2520 = vadd.s32 %v2218, %v2278
          %v2521 = vadd.s32 %v2219, %v2278
          %v2522 = vadd.s32 %v2220, %v2278
          %v2523 = vadd.s32 %v2221, %v2278
          %v2524 = vadd.s32 %v2222, %v2278
          %v2525 = vadd.s32 %v2223, %v2278
          %v2526 = vadd.s32 %v2224, %v2278
          %v2527 = vadd.s32 %v2225, %v2278
          %v2528 = vadd.s32 %v2226, %v2278
          %v2529 = vadd.s32 %v2227, %v2278
          %v2530 = vadd.s32 %v2228, %v2278
          %v2531 = vadd.s32 %v2229, %v2278
          %v2532 = vadd.s32 %v2230, %v2278
          %v2533 = vadd.s32 %v2231, %v2278
          %v2534 = vadd.s32 %v2232, %v2278
          %v2535 = vadd.s32 %v2233, %v2278
          %v2536 = vadd.s32 %v2234, %v2278
          %v2537 = vadd.s32 %v2235, %v2278
          %v2538 = vadd.s32 %v2236, %v2278
          %v2539 = vadd.s32 %v2237, %v2278
          %v2540 = vadd.s32 %v2238, %v2278
          %v2541 = vadd.s32 %v2239, %v2278
          %v2542 = vadd.s32 %v2240, %v2278
          %v2543 = vadd.s32 %v2241, %v2278
          %v2544 = vadd.s32 %v2242, %v2278
          %v2545 = vadd.s32 %v2243, %v2278
          %v2546 = vadd.s32 %v2244, %v2278
          %v2547 = vadd.s32 %v2245, %v2278
          %v2548 = vadd.s32 %v2246, %v2278
          %v2549 = vadd.s32 %v2247, %v2278
          %v2550 = vadd.s32 %v2248, %v2278
          %v2551 = vadd.s32 %v2249, %v2278
          %v2552 = vadd.s32 %v2250, %v2278
          %v2553 = vadd.s32 %v2251, %v2278
          %v2554 = vadd.s32 %v2252, %v2278
          %v2555 = vadd.s32 %v2253, %v2278
          %v2556 = vadd.s32 %v2254, %v2278
          %v2557 = vadd.s32 %v2255, %v2278
          %v2558 = vadd.s32 %v2256, %v2278
          %v2559 = vadd.s32 %v2257, %v2278
          %v2560 = vadd.s32 %v2258, %v2278
          %v2561 = vadd.s32 %v2259, %v2278
          %v2562 = vadd.s32 %v2260, %v2278
          %v2563 = vadd.s32 %v2261, %v2278
          %v2564 = vadd.s32 %v2262, %v2278
          %v2565 = vadd.s32 %v2263, %v2278
          %v2566 = vadd.s32 %v2264, %v2278
          %v2567 = vadd.s32 %v2265, %v2278
          %v2568 = vadd.s32 %v2266, %v2278
          %v2569 = vadd.s32 %v2267, %v2278
          %v2570 = vadd.s32 %v2268, %v2278
          %v2571 = vadd.s32 %v2269, %v2278
          %v2572 = vadd.s32 %v2270, %v2278
          %v2573 = vadd.s32 %v2271, %v2278
          %v2574 = vadd.s32 %v2272, %v2278
          %v2575 = vadd.s32 %v2273, %v2278
          %v2576 = vadd.s32 %v2274, %v2278
          %v2577 = vadd.s32 %v2275, %v2278
          %v2578 = vadd.s32 %v2276, %v2278
          %vm2579 = vcmp.lt.s32.totalorder %v2279, 2400
          %vm2580 = vcmp.lt.s32.totalorder %v2280, 2400
          %vm2581 = vcmp.lt.s32.totalorder %v2281, 2400
          %vm2582 = vcmp.lt.s32.totalorder %v2282, 2400
          %vm2583 = vcmp.lt.s32.totalorder %v2283, 2400
          %vm2584 = vcmp.lt.s32.totalorder %v2284, 2400
          %vm2585 = vcmp.lt.s32.totalorder %v2285, 2400
          %vm2586 = vcmp.lt.s32.totalorder %v2286, 2400
          %vm2587 = vcmp.lt.s32.totalorder %v2287, 2400
          %vm2588 = vcmp.lt.s32.totalorder %v2288, 2400
          %vm2589 = vcmp.lt.s32.totalorder %v2289, 2400
          %vm2590 = vcmp.lt.s32.totalorder %v2290, 2400
          %vm2591 = vcmp.lt.s32.totalorder %v2291, 2400
          %vm2592 = vcmp.lt.s32.totalorder %v2292, 2400
          %vm2593 = vcmp.lt.s32.totalorder %v2293, 2400
          %vm2594 = vcmp.lt.s32.totalorder %v2294, 2400
          %vm2595 = vcmp.lt.s32.totalorder %v2295, 2400
          %vm2596 = vcmp.lt.s32.totalorder %v2296, 2400
          %vm2597 = vcmp.lt.s32.totalorder %v2297, 2400
          %vm2598 = vcmp.lt.s32.totalorder %v2298, 2400
          %vm2599 = vcmp.lt.s32.totalorder %v2299, 2400
          %vm2600 = vcmp.lt.s32.totalorder %v2300, 2400
          %vm2601 = vcmp.lt.s32.totalorder %v2301, 2400
          %vm2602 = vcmp.lt.s32.totalorder %v2302, 2400
          %vm2603 = vcmp.lt.s32.totalorder %v2303, 2400
          %vm2604 = vcmp.lt.s32.totalorder %v2304, 2400
          %vm2605 = vcmp.lt.s32.totalorder %v2305, 2400
          %vm2606 = vcmp.lt.s32.totalorder %v2306, 2400
          %vm2607 = vcmp.lt.s32.totalorder %v2307, 2400
          %vm2608 = vcmp.lt.s32.totalorder %v2308, 2400
          %vm2609 = vcmp.lt.s32.totalorder %v2309, 2400
          %vm2610 = vcmp.lt.s32.totalorder %v2310, 2400
          %vm2611 = vcmp.lt.s32.totalorder %v2311, 2400
          %vm2612 = vcmp.lt.s32.totalorder %v2312, 2400
          %vm2613 = vcmp.lt.s32.totalorder %v2313, 2400
          %vm2614 = vcmp.lt.s32.totalorder %v2314, 2400
          %vm2615 = vcmp.lt.s32.totalorder %v2315, 2400
          %vm2616 = vcmp.lt.s32.totalorder %v2316, 2400
          %vm2617 = vcmp.lt.s32.totalorder %v2317, 2400
          %vm2618 = vcmp.lt.s32.totalorder %v2318, 2400
          %vm2619 = vcmp.lt.s32.totalorder %v2319, 2400
          %vm2620 = vcmp.lt.s32.totalorder %v2320, 2400
          %vm2621 = vcmp.lt.s32.totalorder %v2321, 2400
          %vm2622 = vcmp.lt.s32.totalorder %v2322, 2400
          %vm2623 = vcmp.lt.s32.totalorder %v2323, 2400
          %vm2624 = vcmp.lt.s32.totalorder %v2324, 2400
          %vm2625 = vcmp.lt.s32.totalorder %v2325, 2400
          %vm2626 = vcmp.lt.s32.totalorder %v2326, 2400
          %vm2627 = vcmp.lt.s32.totalorder %v2327, 2400
          %vm2628 = vcmp.lt.s32.totalorder %v2328, 2400
          %vm2629 = vcmp.lt.s32.totalorder %v2329, 2400
          %vm2630 = vcmp.lt.s32.totalorder %v2330, 2400
          %vm2631 = vcmp.lt.s32.totalorder %v2331, 2400
          %vm2632 = vcmp.lt.s32.totalorder %v2332, 2400
          %vm2633 = vcmp.lt.s32.totalorder %v2333, 2400
          %vm2634 = vcmp.lt.s32.totalorder %v2334, 2400
          %vm2635 = vcmp.lt.s32.totalorder %v2335, 2400
          %vm2636 = vcmp.lt.s32.totalorder %v2336, 2400
          %vm2637 = vcmp.lt.s32.totalorder %v2337, 2400
          %vm2638 = vcmp.lt.s32.totalorder %v2338, 2400
          %vm2639 = vcmp.lt.s32.totalorder %v2339, 2400
          %vm2640 = vcmp.lt.s32.totalorder %v2340, 2400
          %vm2641 = vcmp.lt.s32.totalorder %v2341, 2400
          %vm2642 = vcmp.lt.s32.totalorder %v2342, 2400
          %vm2643 = vcmp.lt.s32.totalorder %v2343, 2400
          %vm2644 = vcmp.lt.s32.totalorder %v2344, 2400
          %vm2645 = vcmp.lt.s32.totalorder %v2345, 2400
          %vm2646 = vcmp.lt.s32.totalorder %v2346, 2400
          %vm2647 = vcmp.lt.s32.totalorder %v2347, 2400
          %vm2648 = vcmp.lt.s32.totalorder %v2348, 2400
          %vm2649 = vcmp.lt.s32.totalorder %v2349, 2400
          %vm2650 = vcmp.lt.s32.totalorder %v2350, 2400
          %vm2651 = vcmp.lt.s32.totalorder %v2351, 2400
          %vm2652 = vcmp.lt.s32.totalorder %v2352, 2400
          %vm2653 = vcmp.lt.s32.totalorder %v2353, 2400
          %vm2654 = vcmp.lt.s32.totalorder %v2354, 2400
          %vm2655 = vcmp.lt.s32.totalorder %v2355, 2400
          %vm2656 = vcmp.lt.s32.totalorder %v2356, 2400
          %vm2657 = vcmp.lt.s32.totalorder %v2357, 2400
          %vm2658 = vcmp.lt.s32.totalorder %v2358, 2400
          %vm2659 = vcmp.lt.s32.totalorder %v2359, 2400
          %vm2660 = vcmp.lt.s32.totalorder %v2360, 2400
          %vm2661 = vcmp.lt.s32.totalorder %v2361, 2400
          %vm2662 = vcmp.lt.s32.totalorder %v2362, 2400
          %vm2663 = vcmp.lt.s32.totalorder %v2363, 2400
          %vm2664 = vcmp.lt.s32.totalorder %v2364, 2400
          %vm2665 = vcmp.lt.s32.totalorder %v2365, 2400
          %vm2666 = vcmp.lt.s32.totalorder %v2366, 2400
          %vm2667 = vcmp.lt.s32.totalorder %v2367, 2400
          %vm2668 = vcmp.lt.s32.totalorder %v2368, 2400
          %vm2669 = vcmp.lt.s32.totalorder %v2369, 2400
          %vm2670 = vcmp.lt.s32.totalorder %v2370, 2400
          %vm2671 = vcmp.lt.s32.totalorder %v2371, 2400
          %vm2672 = vcmp.lt.s32.totalorder %v2372, 2400
          %vm2673 = vcmp.lt.s32.totalorder %v2373, 2400
          %vm2674 = vcmp.lt.s32.totalorder %v2374, 2400
          %vm2675 = vcmp.lt.s32.totalorder %v2375, 2400
          %vm2676 = vcmp.lt.s32.totalorder %v2376, 2400
          %vm2677 = vcmp.lt.s32.totalorder %v2377, 2400
          %vm2678 = vcmp.lt.s32.totalorder %v2378, 2400
          %vm2679 = vcmp.lt.s32.totalorder %v2379, 2400
          %vm2680 = vcmp.lt.s32.totalorder %v2380, 2400
          %vm2681 = vcmp.lt.s32.totalorder %v2381, 2400
          %vm2682 = vcmp.lt.s32.totalorder %v2382, 2400
          %vm2683 = vcmp.lt.s32.totalorder %v2383, 2400
          %vm2684 = vcmp.lt.s32.totalorder %v2384, 2400
          %vm2685 = vcmp.lt.s32.totalorder %v2385, 2400
          %vm2686 = vcmp.lt.s32.totalorder %v2386, 2400
          %vm2687 = vcmp.lt.s32.totalorder %v2387, 2400
          %vm2688 = vcmp.lt.s32.totalorder %v2388, 2400
          %vm2689 = vcmp.lt.s32.totalorder %v2389, 2400
          %vm2690 = vcmp.lt.s32.totalorder %v2390, 2400
          %vm2691 = vcmp.lt.s32.totalorder %v2391, 2400
          %vm2692 = vcmp.lt.s32.totalorder %v2392, 2400
          %vm2693 = vcmp.lt.s32.totalorder %v2393, 2400
          %vm2694 = vcmp.lt.s32.totalorder %v2394, 2400
          %vm2695 = vcmp.lt.s32.totalorder %v2395, 2400
          %vm2696 = vcmp.lt.s32.totalorder %v2396, 2400
          %vm2697 = vcmp.lt.s32.totalorder %v2397, 2400
          %vm2698 = vcmp.lt.s32.totalorder %v2398, 2400
          %vm2699 = vcmp.lt.s32.totalorder %v2399, 2400
          %vm2700 = vcmp.lt.s32.totalorder %v2400, 2400
          %vm2701 = vcmp.lt.s32.totalorder %v2401, 2400
          %vm2702 = vcmp.lt.s32.totalorder %v2402, 2400
          %vm2703 = vcmp.lt.s32.totalorder %v2403, 2400
          %vm2704 = vcmp.lt.s32.totalorder %v2404, 2400
          %vm2705 = vcmp.lt.s32.totalorder %v2405, 2400
          %vm2706 = vcmp.lt.s32.totalorder %v2406, 2400
          %vm2707 = vcmp.lt.s32.totalorder %v2407, 2400
          %vm2708 = vcmp.lt.s32.totalorder %v2408, 2400
          %vm2709 = vcmp.lt.s32.totalorder %v2409, 2400
          %vm2710 = vcmp.lt.s32.totalorder %v2410, 2400
          %vm2711 = vcmp.lt.s32.totalorder %v2411, 2400
          %vm2712 = vcmp.lt.s32.totalorder %v2412, 2400
          %vm2713 = vcmp.lt.s32.totalorder %v2413, 2400
          %vm2714 = vcmp.lt.s32.totalorder %v2414, 2400
          %vm2715 = vcmp.lt.s32.totalorder %v2415, 2400
          %vm2716 = vcmp.lt.s32.totalorder %v2416, 2400
          %vm2717 = vcmp.lt.s32.totalorder %v2417, 2400
          %vm2718 = vcmp.lt.s32.totalorder %v2418, 2400
          %vm2719 = vcmp.lt.s32.totalorder %v2419, 2400
          %vm2720 = vcmp.lt.s32.totalorder %v2420, 2400
          %vm2721 = vcmp.lt.s32.totalorder %v2421, 2400
          %vm2722 = vcmp.lt.s32.totalorder %v2422, 2400
          %vm2723 = vcmp.lt.s32.totalorder %v2423, 2400
          %vm2724 = vcmp.lt.s32.totalorder %v2424, 2400
          %vm2725 = vcmp.lt.s32.totalorder %v2425, 2400
          %vm2726 = vcmp.lt.s32.totalorder %v2426, 2400
          %vm2727 = vcmp.lt.s32.totalorder %v2427, 2400
          %vm2728 = vcmp.lt.s32.totalorder %v2428, 2400
          %vm2729 = vcmp.lt.s32.totalorder %v2429, 2400
          %vm2730 = vcmp.lt.s32.totalorder %v2430, 2400
          %vm2731 = vcmp.lt.s32.totalorder %v2431, 2400
          %vm2732 = vcmp.lt.s32.totalorder %v2432, 2400
          %vm2733 = vcmp.lt.s32.totalorder %v2433, 2400
          %vm2734 = vcmp.lt.s32.totalorder %v2434, 2400
          %vm2735 = vcmp.lt.s32.totalorder %v2435, 2400
          %vm2736 = vcmp.lt.s32.totalorder %v2436, 2400
          %vm2737 = vcmp.lt.s32.totalorder %v2437, 2400
          %vm2738 = vcmp.lt.s32.totalorder %v2438, 2400
          %vm2739 = vcmp.lt.s32.totalorder %v2439, 2400
          %vm2740 = vcmp.lt.s32.totalorder %v2440, 2400
          %vm2741 = vcmp.lt.s32.totalorder %v2441, 2400
          %vm2742 = vcmp.lt.s32.totalorder %v2442, 2400
          %vm2743 = vcmp.lt.s32.totalorder %v2443, 2400
          %vm2744 = vcmp.lt.s32.totalorder %v2444, 2400
          %vm2745 = vcmp.lt.s32.totalorder %v2445, 2400
          %vm2746 = vcmp.lt.s32.totalorder %v2446, 2400
          %vm2747 = vcmp.lt.s32.totalorder %v2447, 2400
          %vm2748 = vcmp.lt.s32.totalorder %v2448, 2400
          %vm2749 = vcmp.lt.s32.totalorder %v2449, 2400
          %vm2750 = vcmp.lt.s32.totalorder %v2450, 2400
          %vm2751 = vcmp.lt.s32.totalorder %v2451, 2400
          %vm2752 = vcmp.lt.s32.totalorder %v2452, 2400
          %vm2753 = vcmp.lt.s32.totalorder %v2453, 2400
          %vm2754 = vcmp.lt.s32.totalorder %v2454, 2400
          %vm2755 = vcmp.lt.s32.totalorder %v2455, 2400
          %vm2756 = vcmp.lt.s32.totalorder %v2456, 2400
          %vm2757 = vcmp.lt.s32.totalorder %v2457, 2400
          %vm2758 = vcmp.lt.s32.totalorder %v2458, 2400
          %vm2759 = vcmp.lt.s32.totalorder %v2459, 2400
          %vm2760 = vcmp.lt.s32.totalorder %v2460, 2400
          %vm2761 = vcmp.lt.s32.totalorder %v2461, 2400
          %vm2762 = vcmp.lt.s32.totalorder %v2462, 2400
          %vm2763 = vcmp.lt.s32.totalorder %v2463, 2400
          %vm2764 = vcmp.lt.s32.totalorder %v2464, 2400
          %vm2765 = vcmp.lt.s32.totalorder %v2465, 2400
          %vm2766 = vcmp.lt.s32.totalorder %v2466, 2400
          %vm2767 = vcmp.lt.s32.totalorder %v2467, 2400
          %vm2768 = vcmp.lt.s32.totalorder %v2468, 2400
          %vm2769 = vcmp.lt.s32.totalorder %v2469, 2400
          %vm2770 = vcmp.lt.s32.totalorder %v2470, 2400
          %vm2771 = vcmp.lt.s32.totalorder %v2471, 2400
          %vm2772 = vcmp.lt.s32.totalorder %v2472, 2400
          %vm2773 = vcmp.lt.s32.totalorder %v2473, 2400
          %vm2774 = vcmp.lt.s32.totalorder %v2474, 2400
          %vm2775 = vcmp.lt.s32.totalorder %v2475, 2400
          %vm2776 = vcmp.lt.s32.totalorder %v2476, 2400
          %vm2777 = vcmp.lt.s32.totalorder %v2477, 2400
          %vm2778 = vcmp.lt.s32.totalorder %v2478, 2400
          %vm2779 = vcmp.lt.s32.totalorder %v2479, 2400
          %vm2780 = vcmp.lt.s32.totalorder %v2480, 2400
          %vm2781 = vcmp.lt.s32.totalorder %v2481, 2400
          %vm2782 = vcmp.lt.s32.totalorder %v2482, 2400
          %vm2783 = vcmp.lt.s32.totalorder %v2483, 2400
          %vm2784 = vcmp.lt.s32.totalorder %v2484, 2400
          %vm2785 = vcmp.lt.s32.totalorder %v2485, 2400
          %vm2786 = vcmp.lt.s32.totalorder %v2486, 2400
          %vm2787 = vcmp.lt.s32.totalorder %v2487, 2400
          %vm2788 = vcmp.lt.s32.totalorder %v2488, 2400
          %vm2789 = vcmp.lt.s32.totalorder %v2489, 2400
          %vm2790 = vcmp.lt.s32.totalorder %v2490, 2400
          %vm2791 = vcmp.lt.s32.totalorder %v2491, 2400
          %vm2792 = vcmp.lt.s32.totalorder %v2492, 2400
          %vm2793 = vcmp.lt.s32.totalorder %v2493, 2400
          %vm2794 = vcmp.lt.s32.totalorder %v2494, 2400
          %vm2795 = vcmp.lt.s32.totalorder %v2495, 2400
          %vm2796 = vcmp.lt.s32.totalorder %v2496, 2400
          %vm2797 = vcmp.lt.s32.totalorder %v2497, 2400
          %vm2798 = vcmp.lt.s32.totalorder %v2498, 2400
          %vm2799 = vcmp.lt.s32.totalorder %v2499, 2400
          %vm2800 = vcmp.lt.s32.totalorder %v2500, 2400
          %vm2801 = vcmp.lt.s32.totalorder %v2501, 2400
          %vm2802 = vcmp.lt.s32.totalorder %v2502, 2400
          %vm2803 = vcmp.lt.s32.totalorder %v2503, 2400
          %vm2804 = vcmp.lt.s32.totalorder %v2504, 2400
          %vm2805 = vcmp.lt.s32.totalorder %v2505, 2400
          %vm2806 = vcmp.lt.s32.totalorder %v2506, 2400
          %vm2807 = vcmp.lt.s32.totalorder %v2507, 2400
          %vm2808 = vcmp.lt.s32.totalorder %v2508, 2400
          %vm2809 = vcmp.lt.s32.totalorder %v2509, 2400
          %vm2810 = vcmp.lt.s32.totalorder %v2510, 2400
          %vm2811 = vcmp.lt.s32.totalorder %v2511, 2400
          %vm2812 = vcmp.lt.s32.totalorder %v2512, 2400
          %vm2813 = vcmp.lt.s32.totalorder %v2513, 2400
          %vm2814 = vcmp.lt.s32.totalorder %v2514, 2400
          %vm2815 = vcmp.lt.s32.totalorder %v2515, 2400
          %vm2816 = vcmp.lt.s32.totalorder %v2516, 2400
          %vm2817 = vcmp.lt.s32.totalorder %v2517, 2400
          %vm2818 = vcmp.lt.s32.totalorder %v2518, 2400
          %vm2819 = vcmp.lt.s32.totalorder %v2519, 2400
          %vm2820 = vcmp.lt.s32.totalorder %v2520, 2400
          %vm2821 = vcmp.lt.s32.totalorder %v2521, 2400
          %vm2822 = vcmp.lt.s32.totalorder %v2522, 2400
          %vm2823 = vcmp.lt.s32.totalorder %v2523, 2400
          %vm2824 = vcmp.lt.s32.totalorder %v2524, 2400
          %vm2825 = vcmp.lt.s32.totalorder %v2525, 2400
          %vm2826 = vcmp.lt.s32.totalorder %v2526, 2400
          %vm2827 = vcmp.lt.s32.totalorder %v2527, 2400
          %vm2828 = vcmp.lt.s32.totalorder %v2528, 2400
          %vm2829 = vcmp.lt.s32.totalorder %v2529, 2400
          %vm2830 = vcmp.lt.s32.totalorder %v2530, 2400
          %vm2831 = vcmp.lt.s32.totalorder %v2531, 2400
          %vm2832 = vcmp.lt.s32.totalorder %v2532, 2400
          %vm2833 = vcmp.lt.s32.totalorder %v2533, 2400
          %vm2834 = vcmp.lt.s32.totalorder %v2534, 2400
          %vm2835 = vcmp.lt.s32.totalorder %v2535, 2400
          %vm2836 = vcmp.lt.s32.totalorder %v2536, 2400
          %vm2837 = vcmp.lt.s32.totalorder %v2537, 2400
          %vm2838 = vcmp.lt.s32.totalorder %v2538, 2400
          %vm2839 = vcmp.lt.s32.totalorder %v2539, 2400
          %vm2840 = vcmp.lt.s32.totalorder %v2540, 2400
          %vm2841 = vcmp.lt.s32.totalorder %v2541, 2400
          %vm2842 = vcmp.lt.s32.totalorder %v2542, 2400
          %vm2843 = vcmp.lt.s32.totalorder %v2543, 2400
          %vm2844 = vcmp.lt.s32.totalorder %v2544, 2400
          %vm2845 = vcmp.lt.s32.totalorder %v2545, 2400
          %vm2846 = vcmp.lt.s32.totalorder %v2546, 2400
          %vm2847 = vcmp.lt.s32.totalorder %v2547, 2400
          %vm2848 = vcmp.lt.s32.totalorder %v2548, 2400
          %vm2849 = vcmp.lt.s32.totalorder %v2549, 2400
          %vm2850 = vcmp.lt.s32.totalorder %v2550, 2400
          %vm2851 = vcmp.lt.s32.totalorder %v2551, 2400
          %vm2852 = vcmp.lt.s32.totalorder %v2552, 2400
          %vm2853 = vcmp.lt.s32.totalorder %v2553, 2400
          %vm2854 = vcmp.lt.s32.totalorder %v2554, 2400
          %vm2855 = vcmp.lt.s32.totalorder %v2555, 2400
          %vm2856 = vcmp.lt.s32.totalorder %v2556, 2400
          %vm2857 = vcmp.lt.s32.totalorder %v2557, 2400
          %vm2858 = vcmp.lt.s32.totalorder %v2558, 2400
          %vm2859 = vcmp.lt.s32.totalorder %v2559, 2400
          %vm2860 = vcmp.lt.s32.totalorder %v2560, 2400
          %vm2861 = vcmp.lt.s32.totalorder %v2561, 2400
          %vm2862 = vcmp.lt.s32.totalorder %v2562, 2400
          %vm2863 = vcmp.lt.s32.totalorder %v2563, 2400
          %vm2864 = vcmp.lt.s32.totalorder %v2564, 2400
          %vm2865 = vcmp.lt.s32.totalorder %v2565, 2400
          %vm2866 = vcmp.lt.s32.totalorder %v2566, 2400
          %vm2867 = vcmp.lt.s32.totalorder %v2567, 2400
          %vm2868 = vcmp.lt.s32.totalorder %v2568, 2400
          %vm2869 = vcmp.lt.s32.totalorder %v2569, 2400
          %vm2870 = vcmp.lt.s32.totalorder %v2570, 2400
          %vm2871 = vcmp.lt.s32.totalorder %v2571, 2400
          %vm2872 = vcmp.lt.s32.totalorder %v2572, 2400
          %vm2873 = vcmp.lt.s32.totalorder %v2573, 2400
          %vm2874 = vcmp.lt.s32.totalorder %v2574, 2400
          %vm2875 = vcmp.lt.s32.totalorder %v2575, 2400
          %vm2876 = vcmp.lt.s32.totalorder %v2576, 2400
          %vm2877 = vcmp.lt.s32.totalorder %v2577, 2400
          %vm2878 = vcmp.lt.s32.totalorder %v2578, 2400
          %v2879 = vsel %vm2579, %v1676, 0.0
          %v2880 = vsel %vm2580, %v1677, 0.0
          %v2881 = vsel %vm2581, %v1678, 0.0
          %v2882 = vsel %vm2582, %v1679, 0.0
          %v2883 = vsel %vm2583, %v1680, 0.0
          %v2884 = vsel %vm2584, %v1681, 0.0
          %v2885 = vsel %vm2585, %v1682, 0.0
          %v2886 = vsel %vm2586, %v1683, 0.0
          %v2887 = vsel %vm2587, %v1684, 0.0
          %v2888 = vsel %vm2588, %v1685, 0.0
          %v2889 = vsel %vm2589, %v1686, 0.0
          %v2890 = vsel %vm2590, %v1687, 0.0
          %v2891 = vsel %vm2591, %v1688, 0.0
          %v2892 = vsel %vm2592, %v1689, 0.0
          %v2893 = vsel %vm2593, %v1690, 0.0
          %v2894 = vsel %vm2594, %v1691, 0.0
          %v2895 = vsel %vm2595, %v1692, 0.0
          %v2896 = vsel %vm2596, %v1693, 0.0
          %v2897 = vsel %vm2597, %v1694, 0.0
          %v2898 = vsel %vm2598, %v1695, 0.0
          %v2899 = vsel %vm2599, %v1696, 0.0
          %v2900 = vsel %vm2600, %v1697, 0.0
          %v2901 = vsel %vm2601, %v1698, 0.0
          %v2902 = vsel %vm2602, %v1699, 0.0
          %v2903 = vsel %vm2603, %v1700, 0.0
          %v2904 = vsel %vm2604, %v1701, 0.0
          %v2905 = vsel %vm2605, %v1702, 0.0
          %v2906 = vsel %vm2606, %v1703, 0.0
          %v2907 = vsel %vm2607, %v1704, 0.0
          %v2908 = vsel %vm2608, %v1705, 0.0
          %v2909 = vsel %vm2609, %v1706, 0.0
          %v2910 = vsel %vm2610, %v1707, 0.0
          %v2911 = vsel %vm2611, %v1708, 0.0
          %v2912 = vsel %vm2612, %v1709, 0.0
          %v2913 = vsel %vm2613, %v1710, 0.0
          %v2914 = vsel %vm2614, %v1711, 0.0
          %v2915 = vsel %vm2615, %v1712, 0.0
          %v2916 = vsel %vm2616, %v1713, 0.0
          %v2917 = vsel %vm2617, %v1714, 0.0
          %v2918 = vsel %vm2618, %v1715, 0.0
          %v2919 = vsel %vm2619, %v1716, 0.0
          %v2920 = vsel %vm2620, %v1717, 0.0
          %v2921 = vsel %vm2621, %v1718, 0.0
          %v2922 = vsel %vm2622, %v1719, 0.0
          %v2923 = vsel %vm2623, %v1720, 0.0
          %v2924 = vsel %vm2624, %v1721, 0.0
          %v2925 = vsel %vm2625, %v1722, 0.0
          %v2926 = vsel %vm2626, %v1723, 0.0
          %v2927 = vsel %vm2627, %v1724, 0.0
          %v2928 = vsel %vm2628, %v1725, 0.0
          %v2929 = vsel %vm2629, %v1726, 0.0
          %v2930 = vsel %vm2630, %v1727, 0.0
          %v2931 = vsel %vm2631, %v1728, 0.0
          %v2932 = vsel %vm2632, %v1729, 0.0
          %v2933 = vsel %vm2633, %v1730, 0.0
          %v2934 = vsel %vm2634, %v1731, 0.0
          %v2935 = vsel %vm2635, %v1732, 0.0
          %v2936 = vsel %vm2636, %v1733, 0.0
          %v2937 = vsel %vm2637, %v1734, 0.0
          %v2938 = vsel %vm2638, %v1735, 0.0
          %v2939 = vsel %vm2639, %v1736, 0.0
          %v2940 = vsel %vm2640, %v1737, 0.0
          %v2941 = vsel %vm2641, %v1738, 0.0
          %v2942 = vsel %vm2642, %v1739, 0.0
          %v2943 = vsel %vm2643, %v1740, 0.0
          %v2944 = vsel %vm2644, %v1741, 0.0
          %v2945 = vsel %vm2645, %v1742, 0.0
          %v2946 = vsel %vm2646, %v1743, 0.0
          %v2947 = vsel %vm2647, %v1744, 0.0
          %v2948 = vsel %vm2648, %v1745, 0.0
          %v2949 = vsel %vm2649, %v1746, 0.0
          %v2950 = vsel %vm2650, %v1747, 0.0
          %v2951 = vsel %vm2651, %v1748, 0.0
          %v2952 = vsel %vm2652, %v1749, 0.0
          %v2953 = vsel %vm2653, %v1750, 0.0
          %v2954 = vsel %vm2654, %v1751, 0.0
          %v2955 = vsel %vm2655, %v1752, 0.0
          %v2956 = vsel %vm2656, %v1753, 0.0
          %v2957 = vsel %vm2657, %v1754, 0.0
          %v2958 = vsel %vm2658, %v1755, 0.0
          %v2959 = vsel %vm2659, %v1756, 0.0
          %v2960 = vsel %vm2660, %v1757, 0.0
          %v2961 = vsel %vm2661, %v1758, 0.0
          %v2962 = vsel %vm2662, %v1759, 0.0
          %v2963 = vsel %vm2663, %v1760, 0.0
          %v2964 = vsel %vm2664, %v1761, 0.0
          %v2965 = vsel %vm2665, %v1762, 0.0
          %v2966 = vsel %vm2666, %v1763, 0.0
          %v2967 = vsel %vm2667, %v1764, 0.0
          %v2968 = vsel %vm2668, %v1765, 0.0
          %v2969 = vsel %vm2669, %v1766, 0.0
          %v2970 = vsel %vm2670, %v1767, 0.0
          %v2971 = vsel %vm2671, %v1768, 0.0
          %v2972 = vsel %vm2672, %v1769, 0.0
          %v2973 = vsel %vm2673, %v1770, 0.0
          %v2974 = vsel %vm2674, %v1771, 0.0
          %v2975 = vsel %vm2675, %v1772, 0.0
          %v2976 = vsel %vm2676, %v1773, 0.0
          %v2977 = vsel %vm2677, %v1774, 0.0
          %v2978 = vsel %vm2678, %v1775, 0.0
          %v2979 = vsel %vm2679, %v1776, 0.0
          %v2980 = vsel %vm2680, %v1777, 0.0
          %v2981 = vsel %vm2681, %v1778, 0.0
          %v2982 = vsel %vm2682, %v1779, 0.0
          %v2983 = vsel %vm2683, %v1780, 0.0
          %v2984 = vsel %vm2684, %v1781, 0.0
          %v2985 = vsel %vm2685, %v1782, 0.0
          %v2986 = vsel %vm2686, %v1783, 0.0
          %v2987 = vsel %vm2687, %v1784, 0.0
          %v2988 = vsel %vm2688, %v1785, 0.0
          %v2989 = vsel %vm2689, %v1786, 0.0
          %v2990 = vsel %vm2690, %v1787, 0.0
          %v2991 = vsel %vm2691, %v1788, 0.0
          %v2992 = vsel %vm2692, %v1789, 0.0
          %v2993 = vsel %vm2693, %v1790, 0.0
          %v2994 = vsel %vm2694, %v1791, 0.0
          %v2995 = vsel %vm2695, %v1792, 0.0
          %v2996 = vsel %vm2696, %v1793, 0.0
          %v2997 = vsel %vm2697, %v1794, 0.0
          %v2998 = vsel %vm2698, %v1795, 0.0
          %v2999 = vsel %vm2699, %v1796, 0.0
          %v3000 = vsel %vm2700, %v1797, 0.0
          %v3001 = vsel %vm2701, %v1798, 0.0
          %v3002 = vsel %vm2702, %v1799, 0.0
          %v3003 = vsel %vm2703, %v1800, 0.0
          %v3004 = vsel %vm2704, %v1801, 0.0
          %v3005 = vsel %vm2705, %v1802, 0.0
          %v3006 = vsel %vm2706, %v1803, 0.0
          %v3007 = vsel %vm2707, %v1804, 0.0
          %v3008 = vsel %vm2708, %v1805, 0.0
          %v3009 = vsel %vm2709, %v1806, 0.0
          %v3010 = vsel %vm2710, %v1807, 0.0
          %v3011 = vsel %vm2711, %v1808, 0.0
          %v3012 = vsel %vm2712, %v1809, 0.0
          %v3013 = vsel %vm2713, %v1810, 0.0
          %v3014 = vsel %vm2714, %v1811, 0.0
          %v3015 = vsel %vm2715, %v1812, 0.0
          %v3016 = vsel %vm2716, %v1813, 0.0
          %v3017 = vsel %vm2717, %v1814, 0.0
          %v3018 = vsel %vm2718, %v1815, 0.0
          %v3019 = vsel %vm2719, %v1816, 0.0
          %v3020 = vsel %vm2720, %v1817, 0.0
          %v3021 = vsel %vm2721, %v1818, 0.0
          %v3022 = vsel %vm2722, %v1819, 0.0
          %v3023 = vsel %vm2723, %v1820, 0.0
          %v3024 = vsel %vm2724, %v1821, 0.0
          %v3025 = vsel %vm2725, %v1822, 0.0
          %v3026 = vsel %vm2726, %v1823, 0.0
          %v3027 = vsel %vm2727, %v1824, 0.0
          %v3028 = vsel %vm2728, %v1825, 0.0
          %v3029 = vsel %vm2729, %v1826, 0.0
          %v3030 = vsel %vm2730, %v1827, 0.0
          %v3031 = vsel %vm2731, %v1828, 0.0
          %v3032 = vsel %vm2732, %v1829, 0.0
          %v3033 = vsel %vm2733, %v1830, 0.0
          %v3034 = vsel %vm2734, %v1831, 0.0
          %v3035 = vsel %vm2735, %v1832, 0.0
          %v3036 = vsel %vm2736, %v1833, 0.0
          %v3037 = vsel %vm2737, %v1834, 0.0
          %v3038 = vsel %vm2738, %v1835, 0.0
          %v3039 = vsel %vm2739, %v1836, 0.0
          %v3040 = vsel %vm2740, %v1837, 0.0
          %v3041 = vsel %vm2741, %v1838, 0.0
          %v3042 = vsel %vm2742, %v1839, 0.0
          %v3043 = vsel %vm2743, %v1840, 0.0
          %v3044 = vsel %vm2744, %v1841, 0.0
          %v3045 = vsel %vm2745, %v1842, 0.0
          %v3046 = vsel %vm2746, %v1843, 0.0
          %v3047 = vsel %vm2747, %v1844, 0.0
          %v3048 = vsel %vm2748, %v1845, 0.0
          %v3049 = vsel %vm2749, %v1846, 0.0
          %v3050 = vsel %vm2750, %v1847, 0.0
          %v3051 = vsel %vm2751, %v1848, 0.0
          %v3052 = vsel %vm2752, %v1849, 0.0
          %v3053 = vsel %vm2753, %v1850, 0.0
          %v3054 = vsel %vm2754, %v1851, 0.0
          %v3055 = vsel %vm2755, %v1852, 0.0
          %v3056 = vsel %vm2756, %v1853, 0.0
          %v3057 = vsel %vm2757, %v1854, 0.0
          %v3058 = vsel %vm2758, %v1855, 0.0
          %v3059 = vsel %vm2759, %v1856, 0.0
          %v3060 = vsel %vm2760, %v1857, 0.0
          %v3061 = vsel %vm2761, %v1858, 0.0
          %v3062 = vsel %vm2762, %v1859, 0.0
          %v3063 = vsel %vm2763, %v1860, 0.0
          %v3064 = vsel %vm2764, %v1861, 0.0
          %v3065 = vsel %vm2765, %v1862, 0.0
          %v3066 = vsel %vm2766, %v1863, 0.0
          %v3067 = vsel %vm2767, %v1864, 0.0
          %v3068 = vsel %vm2768, %v1865, 0.0
          %v3069 = vsel %vm2769, %v1866, 0.0
          %v3070 = vsel %vm2770, %v1867, 0.0
          %v3071 = vsel %vm2771, %v1868, 0.0
          %v3072 = vsel %vm2772, %v1869, 0.0
          %v3073 = vsel %vm2773, %v1870, 0.0
          %v3074 = vsel %vm2774, %v1871, 0.0
          %v3075 = vsel %vm2775, %v1872, 0.0
          %v3076 = vsel %vm2776, %v1873, 0.0
          %v3077 = vsel %vm2777, %v1874, 0.0
          %v3078 = vsel %vm2778, %v1875, 0.0
          %v3079 = vsel %vm2779, %v1876, 0.0
          %v3080 = vsel %vm2780, %v1877, 0.0
          %v3081 = vsel %vm2781, %v1878, 0.0
          %v3082 = vsel %vm2782, %v1879, 0.0
          %v3083 = vsel %vm2783, %v1880, 0.0
          %v3084 = vsel %vm2784, %v1881, 0.0
          %v3085 = vsel %vm2785, %v1882, 0.0
          %v3086 = vsel %vm2786, %v1883, 0.0
          %v3087 = vsel %vm2787, %v1884, 0.0
          %v3088 = vsel %vm2788, %v1885, 0.0
          %v3089 = vsel %vm2789, %v1886, 0.0
          %v3090 = vsel %vm2790, %v1887, 0.0
          %v3091 = vsel %vm2791, %v1888, 0.0
          %v3092 = vsel %vm2792, %v1889, 0.0
          %v3093 = vsel %vm2793, %v1890, 0.0
          %v3094 = vsel %vm2794, %v1891, 0.0
          %v3095 = vsel %vm2795, %v1892, 0.0
          %v3096 = vsel %vm2796, %v1893, 0.0
          %v3097 = vsel %vm2797, %v1894, 0.0
          %v3098 = vsel %vm2798, %v1895, 0.0
          %v3099 = vsel %vm2799, %v1896, 0.0
          %v3100 = vsel %vm2800, %v1897, 0.0
          %v3101 = vsel %vm2801, %v1898, 0.0
          %v3102 = vsel %vm2802, %v1899, 0.0
          %v3103 = vsel %vm2803, %v1900, 0.0
          %v3104 = vsel %vm2804, %v1901, 0.0
          %v3105 = vsel %vm2805, %v1902, 0.0
          %v3106 = vsel %vm2806, %v1903, 0.0
          %v3107 = vsel %vm2807, %v1904, 0.0
          %v3108 = vsel %vm2808, %v1905, 0.0
          %v3109 = vsel %vm2809, %v1906, 0.0
          %v3110 = vsel %vm2810, %v1907, 0.0
          %v3111 = vsel %vm2811, %v1908, 0.0
          %v3112 = vsel %vm2812, %v1909, 0.0
          %v3113 = vsel %vm2813, %v1910, 0.0
          %v3114 = vsel %vm2814, %v1911, 0.0
          %v3115 = vsel %vm2815, %v1912, 0.0
          %v3116 = vsel %vm2816, %v1913, 0.0
          %v3117 = vsel %vm2817, %v1914, 0.0
          %v3118 = vsel %vm2818, %v1915, 0.0
          %v3119 = vsel %vm2819, %v1916, 0.0
          %v3120 = vsel %vm2820, %v1917, 0.0
          %v3121 = vsel %vm2821, %v1918, 0.0
          %v3122 = vsel %vm2822, %v1919, 0.0
          %v3123 = vsel %vm2823, %v1920, 0.0
          %v3124 = vsel %vm2824, %v1921, 0.0
          %v3125 = vsel %vm2825, %v1922, 0.0
          %v3126 = vsel %vm2826, %v1923, 0.0
          %v3127 = vsel %vm2827, %v1924, 0.0
          %v3128 = vsel %vm2828, %v1925, 0.0
          %v3129 = vsel %vm2829, %v1926, 0.0
          %v3130 = vsel %vm2830, %v1927, 0.0
          %v3131 = vsel %vm2831, %v1928, 0.0
          %v3132 = vsel %vm2832, %v1929, 0.0
          %v3133 = vsel %vm2833, %v1930, 0.0
          %v3134 = vsel %vm2834, %v1931, 0.0
          %v3135 = vsel %vm2835, %v1932, 0.0
          %v3136 = vsel %vm2836, %v1933, 0.0
          %v3137 = vsel %vm2837, %v1934, 0.0
          %v3138 = vsel %vm2838, %v1935, 0.0
          %v3139 = vsel %vm2839, %v1936, 0.0
          %v3140 = vsel %vm2840, %v1937, 0.0
          %v3141 = vsel %vm2841, %v1938, 0.0
          %v3142 = vsel %vm2842, %v1939, 0.0
          %v3143 = vsel %vm2843, %v1940, 0.0
          %v3144 = vsel %vm2844, %v1941, 0.0
          %v3145 = vsel %vm2845, %v1942, 0.0
          %v3146 = vsel %vm2846, %v1943, 0.0
          %v3147 = vsel %vm2847, %v1944, 0.0
          %v3148 = vsel %vm2848, %v1945, 0.0
          %v3149 = vsel %vm2849, %v1946, 0.0
          %v3150 = vsel %vm2850, %v1947, 0.0
          %v3151 = vsel %vm2851, %v1948, 0.0
          %v3152 = vsel %vm2852, %v1949, 0.0
          %v3153 = vsel %vm2853, %v1950, 0.0
          %v3154 = vsel %vm2854, %v1951, 0.0
          %v3155 = vsel %vm2855, %v1952, 0.0
          %v3156 = vsel %vm2856, %v1953, 0.0
          %v3157 = vsel %vm2857, %v1954, 0.0
          %v3158 = vsel %vm2858, %v1955, 0.0
          %v3159 = vsel %vm2859, %v1956, 0.0
          %v3160 = vsel %vm2860, %v1957, 0.0
          %v3161 = vsel %vm2861, %v1958, 0.0
          %v3162 = vsel %vm2862, %v1959, 0.0
          %v3163 = vsel %vm2863, %v1960, 0.0
          %v3164 = vsel %vm2864, %v1961, 0.0
          %v3165 = vsel %vm2865, %v1962, 0.0
          %v3166 = vsel %vm2866, %v1963, 0.0
          %v3167 = vsel %vm2867, %v1964, 0.0
          %v3168 = vsel %vm2868, %v1965, 0.0
          %v3169 = vsel %vm2869, %v1966, 0.0
          %v3170 = vsel %vm2870, %v1967, 0.0
          %v3171 = vsel %vm2871, %v1968, 0.0
          %v3172 = vsel %vm2872, %v1969, 0.0
          %v3173 = vsel %vm2873, %v1970, 0.0
          %v3174 = vsel %vm2874, %v1971, 0.0
          %v3175 = vsel %vm2875, %v1972, 0.0
          %v3176 = vsel %vm2876, %v1973, 0.0
          %v3177 = vsel %vm2877, %v1974, 0.0
          %v3178 = vsel %vm2878, %v1975, 0.0
          %v3179 = vmul.f32 %v2879, %v2879
          %v3180 = vmul.f32 %v2880, %v2880
          %v3181 = vmul.f32 %v2881, %v2881
          %v3182 = vmul.f32 %v2882, %v2882
          %v3183 = vmul.f32 %v2883, %v2883
          %v3184 = vmul.f32 %v2884, %v2884
          %v3185 = vmul.f32 %v2885, %v2885
          %v3186 = vmul.f32 %v2886, %v2886
          %v3187 = vmul.f32 %v2887, %v2887
          %v3188 = vmul.f32 %v2888, %v2888
          %v3189 = vmul.f32 %v2889, %v2889
          %v3190 = vmul.f32 %v2890, %v2890
          %v3191 = vmul.f32 %v2891, %v2891
          %v3192 = vmul.f32 %v2892, %v2892
          %v3193 = vmul.f32 %v2893, %v2893
          %v3194 = vmul.f32 %v2894, %v2894
          %v3195 = vmul.f32 %v2895, %v2895
          %v3196 = vmul.f32 %v2896, %v2896
          %v3197 = vmul.f32 %v2897, %v2897
          %v3198 = vmul.f32 %v2898, %v2898
          %v3199 = vmul.f32 %v2899, %v2899
          %v3200 = vmul.f32 %v2900, %v2900
          %v3201 = vmul.f32 %v2901, %v2901
          %v3202 = vmul.f32 %v2902, %v2902
          %v3203 = vmul.f32 %v2903, %v2903
          %v3204 = vmul.f32 %v2904, %v2904
          %v3205 = vmul.f32 %v2905, %v2905
          %v3206 = vmul.f32 %v2906, %v2906
          %v3207 = vmul.f32 %v2907, %v2907
          %v3208 = vmul.f32 %v2908, %v2908
          %v3209 = vmul.f32 %v2909, %v2909
          %v3210 = vmul.f32 %v2910, %v2910
          %v3211 = vmul.f32 %v2911, %v2911
          %v3212 = vmul.f32 %v2912, %v2912
          %v3213 = vmul.f32 %v2913, %v2913
          %v3214 = vmul.f32 %v2914, %v2914
          %v3215 = vmul.f32 %v2915, %v2915
          %v3216 = vmul.f32 %v2916, %v2916
          %v3217 = vmul.f32 %v2917, %v2917
          %v3218 = vmul.f32 %v2918, %v2918
          %v3219 = vmul.f32 %v2919, %v2919
          %v3220 = vmul.f32 %v2920, %v2920
          %v3221 = vmul.f32 %v2921, %v2921
          %v3222 = vmul.f32 %v2922, %v2922
          %v3223 = vmul.f32 %v2923, %v2923
          %v3224 = vmul.f32 %v2924, %v2924
          %v3225 = vmul.f32 %v2925, %v2925
          %v3226 = vmul.f32 %v2926, %v2926
          %v3227 = vmul.f32 %v2927, %v2927
          %v3228 = vmul.f32 %v2928, %v2928
          %v3229 = vmul.f32 %v2929, %v2929
          %v3230 = vmul.f32 %v2930, %v2930
          %v3231 = vmul.f32 %v2931, %v2931
          %v3232 = vmul.f32 %v2932, %v2932
          %v3233 = vmul.f32 %v2933, %v2933
          %v3234 = vmul.f32 %v2934, %v2934
          %v3235 = vmul.f32 %v2935, %v2935
          %v3236 = vmul.f32 %v2936, %v2936
          %v3237 = vmul.f32 %v2937, %v2937
          %v3238 = vmul.f32 %v2938, %v2938
          %v3239 = vmul.f32 %v2939, %v2939
          %v3240 = vmul.f32 %v2940, %v2940
          %v3241 = vmul.f32 %v2941, %v2941
          %v3242 = vmul.f32 %v2942, %v2942
          %v3243 = vmul.f32 %v2943, %v2943
          %v3244 = vmul.f32 %v2944, %v2944
          %v3245 = vmul.f32 %v2945, %v2945
          %v3246 = vmul.f32 %v2946, %v2946
          %v3247 = vmul.f32 %v2947, %v2947
          %v3248 = vmul.f32 %v2948, %v2948
          %v3249 = vmul.f32 %v2949, %v2949
          %v3250 = vmul.f32 %v2950, %v2950
          %v3251 = vmul.f32 %v2951, %v2951
          %v3252 = vmul.f32 %v2952, %v2952
          %v3253 = vmul.f32 %v2953, %v2953
          %v3254 = vmul.f32 %v2954, %v2954
          %v3255 = vmul.f32 %v2955, %v2955
          %v3256 = vmul.f32 %v2956, %v2956
          %v3257 = vmul.f32 %v2957, %v2957
          %v3258 = vmul.f32 %v2958, %v2958
          %v3259 = vmul.f32 %v2959, %v2959
          %v3260 = vmul.f32 %v2960, %v2960
          %v3261 = vmul.f32 %v2961, %v2961
          %v3262 = vmul.f32 %v2962, %v2962
          %v3263 = vmul.f32 %v2963, %v2963
          %v3264 = vmul.f32 %v2964, %v2964
          %v3265 = vmul.f32 %v2965, %v2965
          %v3266 = vmul.f32 %v2966, %v2966
          %v3267 = vmul.f32 %v2967, %v2967
          %v3268 = vmul.f32 %v2968, %v2968
          %v3269 = vmul.f32 %v2969, %v2969
          %v3270 = vmul.f32 %v2970, %v2970
          %v3271 = vmul.f32 %v2971, %v2971
          %v3272 = vmul.f32 %v2972, %v2972
          %v3273 = vmul.f32 %v2973, %v2973
          %v3274 = vmul.f32 %v2974, %v2974
          %v3275 = vmul.f32 %v2975, %v2975
          %v3276 = vmul.f32 %v2976, %v2976
          %v3277 = vmul.f32 %v2977, %v2977
          %v3278 = vmul.f32 %v2978, %v2978
          %v3279 = vmul.f32 %v2979, %v2979
          %v3280 = vmul.f32 %v2980, %v2980
          %v3281 = vmul.f32 %v2981, %v2981
          %v3282 = vmul.f32 %v2982, %v2982
          %v3283 = vmul.f32 %v2983, %v2983
          %v3284 = vmul.f32 %v2984, %v2984
          %v3285 = vmul.f32 %v2985, %v2985
          %v3286 = vmul.f32 %v2986, %v2986
          %v3287 = vmul.f32 %v2987, %v2987
          %v3288 = vmul.f32 %v2988, %v2988
          %v3289 = vmul.f32 %v2989, %v2989
          %v3290 = vmul.f32 %v2990, %v2990
          %v3291 = vmul.f32 %v2991, %v2991
          %v3292 = vmul.f32 %v2992, %v2992
          %v3293 = vmul.f32 %v2993, %v2993
          %v3294 = vmul.f32 %v2994, %v2994
          %v3295 = vmul.f32 %v2995, %v2995
          %v3296 = vmul.f32 %v2996, %v2996
          %v3297 = vmul.f32 %v2997, %v2997
          %v3298 = vmul.f32 %v2998, %v2998
          %v3299 = vmul.f32 %v2999, %v2999
          %v3300 = vmul.f32 %v3000, %v3000
          %v3301 = vmul.f32 %v3001, %v3001
          %v3302 = vmul.f32 %v3002, %v3002
          %v3303 = vmul.f32 %v3003, %v3003
          %v3304 = vmul.f32 %v3004, %v3004
          %v3305 = vmul.f32 %v3005, %v3005
          %v3306 = vmul.f32 %v3006, %v3006
          %v3307 = vmul.f32 %v3007, %v3007
          %v3308 = vmul.f32 %v3008, %v3008
          %v3309 = vmul.f32 %v3009, %v3009
          %v3310 = vmul.f32 %v3010, %v3010
          %v3311 = vmul.f32 %v3011, %v3011
          %v3312 = vmul.f32 %v3012, %v3012
          %v3313 = vmul.f32 %v3013, %v3013
          %v3314 = vmul.f32 %v3014, %v3014
          %v3315 = vmul.f32 %v3015, %v3015
          %v3316 = vmul.f32 %v3016, %v3016
          %v3317 = vmul.f32 %v3017, %v3017
          %v3318 = vmul.f32 %v3018, %v3018
          %v3319 = vmul.f32 %v3019, %v3019
          %v3320 = vmul.f32 %v3020, %v3020
          %v3321 = vmul.f32 %v3021, %v3021
          %v3322 = vmul.f32 %v3022, %v3022
          %v3323 = vmul.f32 %v3023, %v3023
          %v3324 = vmul.f32 %v3024, %v3024
          %v3325 = vmul.f32 %v3025, %v3025
          %v3326 = vmul.f32 %v3026, %v3026
          %v3327 = vmul.f32 %v3027, %v3027
          %v3328 = vmul.f32 %v3028, %v3028
          %v3329 = vmul.f32 %v3029, %v3029
          %v3330 = vmul.f32 %v3030, %v3030
          %v3331 = vmul.f32 %v3031, %v3031
          %v3332 = vmul.f32 %v3032, %v3032
          %v3333 = vmul.f32 %v3033, %v3033
          %v3334 = vmul.f32 %v3034, %v3034
          %v3335 = vmul.f32 %v3035, %v3035
          %v3336 = vmul.f32 %v3036, %v3036
          %v3337 = vmul.f32 %v3037, %v3037
          %v3338 = vmul.f32 %v3038, %v3038
          %v3339 = vmul.f32 %v3039, %v3039
          %v3340 = vmul.f32 %v3040, %v3040
          %v3341 = vmul.f32 %v3041, %v3041
          %v3342 = vmul.f32 %v3042, %v3042
          %v3343 = vmul.f32 %v3043, %v3043
          %v3344 = vmul.f32 %v3044, %v3044
          %v3345 = vmul.f32 %v3045, %v3045
          %v3346 = vmul.f32 %v3046, %v3046
          %v3347 = vmul.f32 %v3047, %v3047
          %v3348 = vmul.f32 %v3048, %v3048
          %v3349 = vmul.f32 %v3049, %v3049
          %v3350 = vmul.f32 %v3050, %v3050
          %v3351 = vmul.f32 %v3051, %v3051
          %v3352 = vmul.f32 %v3052, %v3052
          %v3353 = vmul.f32 %v3053, %v3053
          %v3354 = vmul.f32 %v3054, %v3054
          %v3355 = vmul.f32 %v3055, %v3055
          %v3356 = vmul.f32 %v3056, %v3056
          %v3357 = vmul.f32 %v3057, %v3057
          %v3358 = vmul.f32 %v3058, %v3058
          %v3359 = vmul.f32 %v3059, %v3059
          %v3360 = vmul.f32 %v3060, %v3060
          %v3361 = vmul.f32 %v3061, %v3061
          %v3362 = vmul.f32 %v3062, %v3062
          %v3363 = vmul.f32 %v3063, %v3063
          %v3364 = vmul.f32 %v3064, %v3064
          %v3365 = vmul.f32 %v3065, %v3065
          %v3366 = vmul.f32 %v3066, %v3066
          %v3367 = vmul.f32 %v3067, %v3067
          %v3368 = vmul.f32 %v3068, %v3068
          %v3369 = vmul.f32 %v3069, %v3069
          %v3370 = vmul.f32 %v3070, %v3070
          %v3371 = vmul.f32 %v3071, %v3071
          %v3372 = vmul.f32 %v3072, %v3072
          %v3373 = vmul.f32 %v3073, %v3073
          %v3374 = vmul.f32 %v3074, %v3074
          %v3375 = vmul.f32 %v3075, %v3075
          %v3376 = vmul.f32 %v3076, %v3076
          %v3377 = vmul.f32 %v3077, %v3077
          %v3378 = vmul.f32 %v3078, %v3078
          %v3379 = vmul.f32 %v3079, %v3079
          %v3380 = vmul.f32 %v3080, %v3080
          %v3381 = vmul.f32 %v3081, %v3081
          %v3382 = vmul.f32 %v3082, %v3082
          %v3383 = vmul.f32 %v3083, %v3083
          %v3384 = vmul.f32 %v3084, %v3084
          %v3385 = vmul.f32 %v3085, %v3085
          %v3386 = vmul.f32 %v3086, %v3086
          %v3387 = vmul.f32 %v3087, %v3087
          %v3388 = vmul.f32 %v3088, %v3088
          %v3389 = vmul.f32 %v3089, %v3089
          %v3390 = vmul.f32 %v3090, %v3090
          %v3391 = vmul.f32 %v3091, %v3091
          %v3392 = vmul.f32 %v3092, %v3092
          %v3393 = vmul.f32 %v3093, %v3093
          %v3394 = vmul.f32 %v3094, %v3094
          %v3395 = vmul.f32 %v3095, %v3095
          %v3396 = vmul.f32 %v3096, %v3096
          %v3397 = vmul.f32 %v3097, %v3097
          %v3398 = vmul.f32 %v3098, %v3098
          %v3399 = vmul.f32 %v3099, %v3099
          %v3400 = vmul.f32 %v3100, %v3100
          %v3401 = vmul.f32 %v3101, %v3101
          %v3402 = vmul.f32 %v3102, %v3102
          %v3403 = vmul.f32 %v3103, %v3103
          %v3404 = vmul.f32 %v3104, %v3104
          %v3405 = vmul.f32 %v3105, %v3105
          %v3406 = vmul.f32 %v3106, %v3106
          %v3407 = vmul.f32 %v3107, %v3107
          %v3408 = vmul.f32 %v3108, %v3108
          %v3409 = vmul.f32 %v3109, %v3109
          %v3410 = vmul.f32 %v3110, %v3110
          %v3411 = vmul.f32 %v3111, %v3111
          %v3412 = vmul.f32 %v3112, %v3112
          %v3413 = vmul.f32 %v3113, %v3113
          %v3414 = vmul.f32 %v3114, %v3114
          %v3415 = vmul.f32 %v3115, %v3115
          %v3416 = vmul.f32 %v3116, %v3116
          %v3417 = vmul.f32 %v3117, %v3117
          %v3418 = vmul.f32 %v3118, %v3118
          %v3419 = vmul.f32 %v3119, %v3119
          %v3420 = vmul.f32 %v3120, %v3120
          %v3421 = vmul.f32 %v3121, %v3121
          %v3422 = vmul.f32 %v3122, %v3122
          %v3423 = vmul.f32 %v3123, %v3123
          %v3424 = vmul.f32 %v3124, %v3124
          %v3425 = vmul.f32 %v3125, %v3125
          %v3426 = vmul.f32 %v3126, %v3126
          %v3427 = vmul.f32 %v3127, %v3127
          %v3428 = vmul.f32 %v3128, %v3128
          %v3429 = vmul.f32 %v3129, %v3129
          %v3430 = vmul.f32 %v3130, %v3130
          %v3431 = vmul.f32 %v3131, %v3131
          %v3432 = vmul.f32 %v3132, %v3132
          %v3433 = vmul.f32 %v3133, %v3133
          %v3434 = vmul.f32 %v3134, %v3134
          %v3435 = vmul.f32 %v3135, %v3135
          %v3436 = vmul.f32 %v3136, %v3136
          %v3437 = vmul.f32 %v3137, %v3137
          %v3438 = vmul.f32 %v3138, %v3138
          %v3439 = vmul.f32 %v3139, %v3139
          %v3440 = vmul.f32 %v3140, %v3140
          %v3441 = vmul.f32 %v3141, %v3141
          %v3442 = vmul.f32 %v3142, %v3142
          %v3443 = vmul.f32 %v3143, %v3143
          %v3444 = vmul.f32 %v3144, %v3144
          %v3445 = vmul.f32 %v3145, %v3145
          %v3446 = vmul.f32 %v3146, %v3146
          %v3447 = vmul.f32 %v3147, %v3147
          %v3448 = vmul.f32 %v3148, %v3148
          %v3449 = vmul.f32 %v3149, %v3149
          %v3450 = vmul.f32 %v3150, %v3150
          %v3451 = vmul.f32 %v3151, %v3151
          %v3452 = vmul.f32 %v3152, %v3152
          %v3453 = vmul.f32 %v3153, %v3153
          %v3454 = vmul.f32 %v3154, %v3154
          %v3455 = vmul.f32 %v3155, %v3155
          %v3456 = vmul.f32 %v3156, %v3156
          %v3457 = vmul.f32 %v3157, %v3157
          %v3458 = vmul.f32 %v3158, %v3158
          %v3459 = vmul.f32 %v3159, %v3159
          %v3460 = vmul.f32 %v3160, %v3160
          %v3461 = vmul.f32 %v3161, %v3161
          %v3462 = vmul.f32 %v3162, %v3162
          %v3463 = vmul.f32 %v3163, %v3163
          %v3464 = vmul.f32 %v3164, %v3164
          %v3465 = vmul.f32 %v3165, %v3165
          %v3466 = vmul.f32 %v3166, %v3166
          %v3467 = vmul.f32 %v3167, %v3167
          %v3468 = vmul.f32 %v3168, %v3168
          %v3469 = vmul.f32 %v3169, %v3169
          %v3470 = vmul.f32 %v3170, %v3170
          %v3471 = vmul.f32 %v3171, %v3171
          %v3472 = vmul.f32 %v3172, %v3172
          %v3473 = vmul.f32 %v3173, %v3173
          %v3474 = vmul.f32 %v3174, %v3174
          %v3475 = vmul.f32 %v3175, %v3175
          %v3476 = vmul.f32 %v3176, %v3176
          %v3477 = vmul.f32 %v3177, %v3177
          %v3478 = vmul.f32 %v3178, %v3178
          %v3479 = vld [vmem:[#allocation2] sm:$0xff]
          %v3480 = vadd.f32 %v3179, %v3180
          %v3481 = vadd.f32 %v3480, %v3181
          %v3482 = vadd.f32 %v3481, %v3182
          %v3483 = vadd.f32 %v3482, %v3183
          %v3484 = vadd.f32 %v3483, %v3184
          %v3485 = vadd.f32 %v3484, %v3185
          %v3486 = vadd.f32 %v3485, %v3186
          %v3487 = vadd.f32 %v3486, %v3187
          %v3488 = vadd.f32 %v3487, %v3188
          %v3489 = vadd.f32 %v3488, %v3189
          %v3490 = vadd.f32 %v3489, %v3190
          %v3491 = vadd.f32 %v3490, %v3191
          %v3492 = vadd.f32 %v3491, %v3192
          %v3493 = vadd.f32 %v3492, %v3193
          %v3494 = vadd.f32 %v3493, %v3194
          %v3495 = vadd.f32 %v3494, %v3195
          %v3496 = vadd.f32 %v3495, %v3196
          %v3497 = vadd.f32 %v3496, %v3197
          %v3498 = vadd.f32 %v3497, %v3198
          %v3499 = vadd.f32 %v3498, %v3199
          %v3500 = vadd.f32 %v3499, %v3200
          %v3501 = vadd.f32 %v3500, %v3201
          %v3502 = vadd.f32 %v3501, %v3202
          %v3503 = vadd.f32 %v3502, %v3203
          %v3504 = vadd.f32 %v3503, %v3204
          %v3505 = vadd.f32 %v3504, %v3205
          %v3506 = vadd.f32 %v3505, %v3206
          %v3507 = vadd.f32 %v3506, %v3207
          %v3508 = vadd.f32 %v3507, %v3208
          %v3509 = vadd.f32 %v3508, %v3209
          %v3510 = vadd.f32 %v3509, %v3210
          %v3511 = vadd.f32 %v3510, %v3211
          %v3512 = vadd.f32 %v3511, %v3212
          %v3513 = vadd.f32 %v3512, %v3213
          %v3514 = vadd.f32 %v3513, %v3214
          %v3515 = vadd.f32 %v3514, %v3215
          %v3516 = vadd.f32 %v3515, %v3216
          %v3517 = vadd.f32 %v3516, %v3217
          %v3518 = vadd.f32 %v3517, %v3218
          %v3519 = vadd.f32 %v3518, %v3219
          %v3520 = vadd.f32 %v3519, %v3220
          %v3521 = vadd.f32 %v3520, %v3221
          %v3522 = vadd.f32 %v3521, %v3222
          %v3523 = vadd.f32 %v3522, %v3223
          %v3524 = vadd.f32 %v3523, %v3224
          %v3525 = vadd.f32 %v3524, %v3225
          %v3526 = vadd.f32 %v3525, %v3226
          %v3527 = vadd.f32 %v3526, %v3227
          %v3528 = vadd.f32 %v3527, %v3228
          %v3529 = vadd.f32 %v3528, %v3229
          %v3530 = vadd.f32 %v3529, %v3230
          %v3531 = vadd.f32 %v3530, %v3231
          %v3532 = vadd.f32 %v3531, %v3232
          %v3533 = vadd.f32 %v3532, %v3233
          %v3534 = vadd.f32 %v3533, %v3234
          %v3535 = vadd.f32 %v3534, %v3235
          %v3536 = vadd.f32 %v3535, %v3236
          %v3537 = vadd.f32 %v3536, %v3237
          %v3538 = vadd.f32 %v3537, %v3238
          %v3539 = vadd.f32 %v3538, %v3239
          %v3540 = vadd.f32 %v3539, %v3240
          %v3541 = vadd.f32 %v3540, %v3241
          %v3542 = vadd.f32 %v3541, %v3242
          %v3543 = vadd.f32 %v3542, %v3243
          %v3544 = vadd.f32 %v3543, %v3244
          %v3545 = vadd.f32 %v3544, %v3245
          %v3546 = vadd.f32 %v3545, %v3246
          %v3547 = vadd.f32 %v3546, %v3247
          %v3548 = vadd.f32 %v3547, %v3248
          %v3549 = vadd.f32 %v3548, %v3249
          %v3550 = vadd.f32 %v3549, %v3250
          %v3551 = vadd.f32 %v3550, %v3251
          %v3552 = vadd.f32 %v3551, %v3252
          %v3553 = vadd.f32 %v3552, %v3253
          %v3554 = vadd.f32 %v3553, %v3254
          %v3555 = vadd.f32 %v3554, %v3255
          %v3556 = vadd.f32 %v3555, %v3256
          %v3557 = vadd.f32 %v3556, %v3257
          %v3558 = vadd.f32 %v3557, %v3258
          %v3559 = vadd.f32 %v3558, %v3259
          %v3560 = vadd.f32 %v3559, %v3260
          %v3561 = vadd.f32 %v3560, %v3261
          %v3562 = vadd.f32 %v3561, %v3262
          %v3563 = vadd.f32 %v3562, %v3263
          %v3564 = vadd.f32 %v3563, %v3264
          %v3565 = vadd.f32 %v3564, %v3265
          %v3566 = vadd.f32 %v3565, %v3266
          %v3567 = vadd.f32 %v3566, %v3267
          %v3568 = vadd.f32 %v3567, %v3268
          %v3569 = vadd.f32 %v3568, %v3269
          %v3570 = vadd.f32 %v3569, %v3270
          %v3571 = vadd.f32 %v3570, %v3271
          %v3572 = vadd.f32 %v3571, %v3272
          %v3573 = vadd.f32 %v3572, %v3273
          %v3574 = vadd.f32 %v3573, %v3274
          %v3575 = vadd.f32 %v3574, %v3275
          %v3576 = vadd.f32 %v3575, %v3276
          %v3577 = vadd.f32 %v3576, %v3277
          %v3578 = vadd.f32 %v3577, %v3278
          %v3579 = vadd.f32 %v3578, %v3279
          %v3580 = vadd.f32 %v3579, %v3280
          %v3581 = vadd.f32 %v3580, %v3281
          %v3582 = vadd.f32 %v3581, %v3282
          %v3583 = vadd.f32 %v3582, %v3283
          %v3584 = vadd.f32 %v3583, %v3284
          %v3585 = vadd.f32 %v3584, %v3285
          %v3586 = vadd.f32 %v3585, %v3286
          %v3587 = vadd.f32 %v3586, %v3287
          %v3588 = vadd.f32 %v3587, %v3288
          %v3589 = vadd.f32 %v3588, %v3289
          %v3590 = vadd.f32 %v3589, %v3290
          %v3591 = vadd.f32 %v3590, %v3291
          %v3592 = vadd.f32 %v3591, %v3292
          %v3593 = vadd.f32 %v3592, %v3293
          %v3594 = vadd.f32 %v3593, %v3294
          %v3595 = vadd.f32 %v3594, %v3295
          %v3596 = vadd.f32 %v3595, %v3296
          %v3597 = vadd.f32 %v3596, %v3297
          %v3598 = vadd.f32 %v3597, %v3298
          %v3599 = vadd.f32 %v3598, %v3299
          %v3600 = vadd.f32 %v3599, %v3300
          %v3601 = vadd.f32 %v3600, %v3301
          %v3602 = vadd.f32 %v3601, %v3302
          %v3603 = vadd.f32 %v3602, %v3303
          %v3604 = vadd.f32 %v3603, %v3304
          %v3605 = vadd.f32 %v3604, %v3305
          %v3606 = vadd.f32 %v3605, %v3306
          %v3607 = vadd.f32 %v3606, %v3307
          %v3608 = vadd.f32 %v3607, %v3308
          %v3609 = vadd.f32 %v3608, %v3309
          %v3610 = vadd.f32 %v3609, %v3310
          %v3611 = vadd.f32 %v3610, %v3311
          %v3612 = vadd.f32 %v3611, %v3312
          %v3613 = vadd.f32 %v3612, %v3313
          %v3614 = vadd.f32 %v3613, %v3314
          %v3615 = vadd.f32 %v3614, %v3315
          %v3616 = vadd.f32 %v3615, %v3316
          %v3617 = vadd.f32 %v3616, %v3317
          %v3618 = vadd.f32 %v3617, %v3318
          %v3619 = vadd.f32 %v3618, %v3319
          %v3620 = vadd.f32 %v3619, %v3320
          %v3621 = vadd.f32 %v3620, %v3321
          %v3622 = vadd.f32 %v3621, %v3322
          %v3623 = vadd.f32 %v3622, %v3323
          %v3624 = vadd.f32 %v3623, %v3324
          %v3625 = vadd.f32 %v3624, %v3325
          %v3626 = vadd.f32 %v3625, %v3326
          %v3627 = vadd.f32 %v3626, %v3327
          %v3628 = vadd.f32 %v3627, %v3328
          %v3629 = vadd.f32 %v3628, %v3329
          %v3630 = vadd.f32 %v3629, %v3330
          %v3631 = vadd.f32 %v3630, %v3331
          %v3632 = vadd.f32 %v3631, %v3332
          %v3633 = vadd.f32 %v3632, %v3333
          %v3634 = vadd.f32 %v3633, %v3334
          %v3635 = vadd.f32 %v3634, %v3335
          %v3636 = vadd.f32 %v3635, %v3336
          %v3637 = vadd.f32 %v3636, %v3337
          %v3638 = vadd.f32 %v3637, %v3338
          %v3639 = vadd.f32 %v3638, %v3339
          %v3640 = vadd.f32 %v3639, %v3340
          %v3641 = vadd.f32 %v3640, %v3341
          %v3642 = vadd.f32 %v3641, %v3342
          %v3643 = vadd.f32 %v3642, %v3343
          %v3644 = vadd.f32 %v3643, %v3344
          %v3645 = vadd.f32 %v3644, %v3345
          %v3646 = vadd.f32 %v3645, %v3346
          %v3647 = vadd.f32 %v3646, %v3347
          %v3648 = vadd.f32 %v3647, %v3348
          %v3649 = vadd.f32 %v3648, %v3349
          %v3650 = vadd.f32 %v3649, %v3350
          %v3651 = vadd.f32 %v3650, %v3351
          %v3652 = vadd.f32 %v3651, %v3352
          %v3653 = vadd.f32 %v3652, %v3353
          %v3654 = vadd.f32 %v3653, %v3354
          %v3655 = vadd.f32 %v3654, %v3355
          %v3656 = vadd.f32 %v3655, %v3356
          %v3657 = vadd.f32 %v3656, %v3357
          %v3658 = vadd.f32 %v3657, %v3358
          %v3659 = vadd.f32 %v3658, %v3359
          %v3660 = vadd.f32 %v3659, %v3360
          %v3661 = vadd.f32 %v3660, %v3361
          %v3662 = vadd.f32 %v3661, %v3362
          %v3663 = vadd.f32 %v3662, %v3363
          %v3664 = vadd.f32 %v3663, %v3364
          %v3665 = vadd.f32 %v3664, %v3365
          %v3666 = vadd.f32 %v3665, %v3366
          %v3667 = vadd.f32 %v3666, %v3367
          %v3668 = vadd.f32 %v3667, %v3368
          %v3669 = vadd.f32 %v3668, %v3369
          %v3670 = vadd.f32 %v3669, %v3370
          %v3671 = vadd.f32 %v3670, %v3371
          %v3672 = vadd.f32 %v3671, %v3372
          %v3673 = vadd.f32 %v3672, %v3373
          %v3674 = vadd.f32 %v3673, %v3374
          %v3675 = vadd.f32 %v3674, %v3375
          %v3676 = vadd.f32 %v3675, %v3376
          %v3677 = vadd.f32 %v3676, %v3377
          %v3678 = vadd.f32 %v3677, %v3378
          %v3679 = vadd.f32 %v3678, %v3379
          %v3680 = vadd.f32 %v3679, %v3380
          %v3681 = vadd.f32 %v3680, %v3381
          %v3682 = vadd.f32 %v3681, %v3382
          %v3683 = vadd.f32 %v3682, %v3383
          %v3684 = vadd.f32 %v3683, %v3384
          %v3685 = vadd.f32 %v3684, %v3385
          %v3686 = vadd.f32 %v3685, %v3386
          %v3687 = vadd.f32 %v3686, %v3387
          %v3688 = vadd.f32 %v3687, %v3388
          %v3689 = vadd.f32 %v3688, %v3389
          %v3690 = vadd.f32 %v3689, %v3390
          %v3691 = vadd.f32 %v3690, %v3391
          %v3692 = vadd.f32 %v3691, %v3392
          %v3693 = vadd.f32 %v3692, %v3393
          %v3694 = vadd.f32 %v3693, %v3394
          %v3695 = vadd.f32 %v3694, %v3395
          %v3696 = vadd.f32 %v3695, %v3396
          %v3697 = vadd.f32 %v3696, %v3397
          %v3698 = vadd.f32 %v3697, %v3398
          %v3699 = vadd.f32 %v3698, %v3399
          %v3700 = vadd.f32 %v3699, %v3400
          %v3701 = vadd.f32 %v3700, %v3401
          %v3702 = vadd.f32 %v3701, %v3402
          %v3703 = vadd.f32 %v3702, %v3403
          %v3704 = vadd.f32 %v3703, %v3404
          %v3705 = vadd.f32 %v3704, %v3405
          %v3706 = vadd.f32 %v3705, %v3406
          %v3707 = vadd.f32 %v3706, %v3407
          %v3708 = vadd.f32 %v3707, %v3408
          %v3709 = vadd.f32 %v3708, %v3409
          %v3710 = vadd.f32 %v3709, %v3410
          %v3711 = vadd.f32 %v3710, %v3411
          %v3712 = vadd.f32 %v3711, %v3412
          %v3713 = vadd.f32 %v3712, %v3413
          %v3714 = vadd.f32 %v3713, %v3414
          %v3715 = vadd.f32 %v3714, %v3415
          %v3716 = vadd.f32 %v3715, %v3416
          %v3717 = vadd.f32 %v3716, %v3417
          %v3718 = vadd.f32 %v3717, %v3418
          %v3719 = vadd.f32 %v3718, %v3419
          %v3720 = vadd.f32 %v3719, %v3420
          %v3721 = vadd.f32 %v3720, %v3421
          %v3722 = vadd.f32 %v3721, %v3422
          %v3723 = vadd.f32 %v3722, %v3423
          %v3724 = vadd.f32 %v3723, %v3424
          %v3725 = vadd.f32 %v3724, %v3425
          %v3726 = vadd.f32 %v3725, %v3426
          %v3727 = vadd.f32 %v3726, %v3427
          %v3728 = vadd.f32 %v3727, %v3428
          %v3729 = vadd.f32 %v3728, %v3429
          %v3730 = vadd.f32 %v3729, %v3430
          %v3731 = vadd.f32 %v3730, %v3431
          %v3732 = vadd.f32 %v3731, %v3432
          %v3733 = vadd.f32 %v3732, %v3433
          %v3734 = vadd.f32 %v3733, %v3434
          %v3735 = vadd.f32 %v3734, %v3435
          %v3736 = vadd.f32 %v3735, %v3436
          %v3737 = vadd.f32 %v3736, %v3437
          %v3738 = vadd.f32 %v3737, %v3438
          %v3739 = vadd.f32 %v3738, %v3439
          %v3740 = vadd.f32 %v3739, %v3440
          %v3741 = vadd.f32 %v3740, %v3441
          %v3742 = vadd.f32 %v3741, %v3442
          %v3743 = vadd.f32 %v3742, %v3443
          %v3744 = vadd.f32 %v3743, %v3444
          %v3745 = vadd.f32 %v3744, %v3445
          %v3746 = vadd.f32 %v3745, %v3446
          %v3747 = vadd.f32 %v3746, %v3447
          %v3748 = vadd.f32 %v3747, %v3448
          %v3749 = vadd.f32 %v3748, %v3449
          %v3750 = vadd.f32 %v3749, %v3450
          %v3751 = vadd.f32 %v3750, %v3451
          %v3752 = vadd.f32 %v3751, %v3452
          %v3753 = vadd.f32 %v3752, %v3453
          %v3754 = vadd.f32 %v3753, %v3454
          %v3755 = vadd.f32 %v3754, %v3455
          %v3756 = vadd.f32 %v3755, %v3456
          %v3757 = vadd.f32 %v3756, %v3457
          %v3758 = vadd.f32 %v3757, %v3458
          %v3759 = vadd.f32 %v3758, %v3459
          %v3760 = vadd.f32 %v3759, %v3460
          %v3761 = vadd.f32 %v3760, %v3461
          %v3762 = vadd.f32 %v3761, %v3462
          %v3763 = vadd.f32 %v3762, %v3463
          %v3764 = vadd.f32 %v3763, %v3464
          %v3765 = vadd.f32 %v3764, %v3465
          %v3766 = vadd.f32 %v3765, %v3466
          %v3767 = vadd.f32 %v3766, %v3467
          %v3768 = vadd.f32 %v3767, %v3468
          %v3769 = vadd.f32 %v3768, %v3469
          %v3770 = vadd.f32 %v3769, %v3470
          %v3771 = vadd.f32 %v3770, %v3471
          %v3772 = vadd.f32 %v3771, %v3472
          %v3773 = vadd.f32 %v3772, %v3473
          %v3774 = vadd.f32 %v3773, %v3474
          %v3775 = vadd.f32 %v3774, %v3475
          %v3776 = vadd.f32 %v3775, %v3476
          %v3777 = vadd.f32 %v3776, %v3477
          %v3778 = vadd.f32 %v3777, %v3478
          %v3779 = vadd.f32 %v3479, %v3778
          %3780 = vst [vmem:[#allocation2] sm:$0xff] %v3779
        $region40: #{tpu_custom_call.1} parent=23 // pred_fallthru
          _
        // Predicated region
        $region41: #{tpu_custom_call.1} parent=23 // pred_check
          %p3781 = pneg %p161
        $region42: #{tpu_custom_call.1} parent=23 // pred_check_branch
          %3783 = sbr.rel (%p3781) target = $region44
        $region43: #{tpu_custom_call.1} parent=23 // pred_region
          %v3784 = vld [vmem:[#allocation2] sm:$0xff]
          %3785 = vst [vmem:[%s155] sm:$0xff] %v3784
        $region44: #{tpu_custom_call.1} parent=23 // pred_fallthru
          _
        %s3786 = sand.u32 %s70, 1
        %s3787 = scalar_lea.sflag [#allocation5], %s3786
        %s3788 = sand.u32 %s70, 1
        %s3789 = smul.addr %s3788, 8
        %s3790 = scalar_lea.vmem [#allocation6], %s3789
        // Predicated region
        $region45: #{tpu_custom_call.1} parent=23 // pred_check
          %p3791 = pneg %p80
        $region46: #{tpu_custom_call.1} parent=23 // pred_check_branch
          %3793 = sbr.rel (%p3791) target = $region48
        $region47: #{tpu_custom_call.1} parent=23 // pred_region
          %s3795 = ssub.s32 128, 128
          %3796 = vsyncadd %s3787, %s3795
          %s3797 = smul.addr %s22, 128
          %s3798 = scalar_lea.hbm %s1, %s3797
          %s3800 = sshll.u32 %s3790, 4
          %s3801 = int_to_ptr.vmem [resolvable:$true] %s3800
          %3803 = dma.vmem_to_hbm [thread:$0]  %s3801, 128, %s3798, %s3787
        $region48: #{tpu_custom_call.1} parent=23 // pred_fallthru
          _
      $region24: #{tpu_custom_call.1} parent=5 // pred_fallthru
        _
      %p3804 = scmp.le.s32.totalorder 2, %s13
      // Predicated region
      $region49: #{tpu_custom_call.1} parent=5 // pred_check
        %p3805 = pneg %p3804
      $region50: #{tpu_custom_call.1} parent=5 // pred_check_branch
        %3807 = sbr.rel (%p3805) target = $region52
      $region51: #{tpu_custom_call.1} parent=5 // pred_region
        %s3808 = ssub.s32 %s13, 2
        // Predicated region
        $region53: #{tpu_custom_call.1} parent=51 // pred_check
          %p3809 = pneg %p86
        $region54: #{tpu_custom_call.1} parent=51 // pred_check_branch
          %3811 = sbr.rel (%p3809) target = $region56
        $region55: #{tpu_custom_call.1} parent=51 // pred_region
          %s3812 = sand.u32 %s71, 1
          %s3813 = scalar_lea.sflag [#allocation5], %s3812
          %s3814 = sand.u32 %s71, 1
          %s3815 = smul.addr %s3814, 8
          %s3816 = scalar_lea.vmem [#allocation6], %s3815
          %3817 = dma.done %s3813, 128
        $region56: #{tpu_custom_call.1} parent=51 // pred_fallthru
          _
      $region52: #{tpu_custom_call.1} parent=5 // pred_fallthru
        _
    $region6: #{tpu_custom_call.1} parent=1 // loop_footer
      %s17 = sadd.s32 1, %s13
    $region7: #{tpu_custom_call.1} parent=1 // loop_footer_branch
      %12 = sbr.rel target = $region3
    $region8: #{tpu_custom_call.1} parent=1 // loop_exit
      _
    %3818 = vsyncpa [#allocation4], 1
    %s3819 = scalar_lea.sflag [#allocation4], 1
    %3820 = vsyncpa %s3819, 1
    %3821 = vsyncpa [#allocation5], 1
    %s3822 = scalar_lea.sflag [#allocation5], 1
    %3823 = vsyncpa %s3822, 1

</llo_original>
